<compile_context>
chip_gen: v7x
topology: tpu7x:2x2x1
jax: 0.10.0
libtpu: 0.0.40
codegen_flags: <defaults>
</compile_context>

<pallas_src>
import functools

import jax
import jax.numpy as jnp
from jax import lax
from jax.experimental import pallas as pl
from jax.experimental.pallas import tpu as pltpu

PAD_IDX = 0  # stands in for SRC_STOI['<PAD>']


def _round_up(v, m):
    return ((v + m - 1) // m) * m


def _vmem_cap_bytes():
    """Per-generation scoped-VMEM cap: physical capacity minus headroom for Mosaic
    internal scratch / semaphores.  v7x: 64 MiB physical -> ~48 MiB; v5e/v6e: 128 -> ~112."""
    try:
        cap = int(pltpu.get_tpu_info().vmem_capacity_bytes)
    except Exception:
        cap = 64 * 2**20  # safe fallback for every generation
    return max(32 * 2**20, cap - 16 * 2**20)


def _encoder_gru_kernel(x_ref, wih_ref, whh_ref, bgi_ref, bhn_ref, hT_ref,
                        seq_ref, gi_ref, h_ref, *, ep, nsub):
    # x_ref  : (S, Bc, Ep)   bf16  time-major embedded input (this batch chunk)
    # wih_ref: (1, Dp, 3Hp)  bf16  input->gates weights of the current layer
    # whh_ref: (1, Hp, 3Hp)  bf16  hidden->gates weights of the current layer
    # bgi_ref: (L, 1, 3Hp)   f32   folded biases added to the hoisted projection
    # bhn_ref: (L, 1, Hp)    f32   b_hn (hidden bias of the n gate)
    # hT_ref : (1, Bc, Hp)   f32   final hidden state of the current layer
    # seq_ref: (S, Bc, Hp)   bf16  VMEM-resident layer-output sequence (next layer's input)
    # gi_ref : (S, Bc, 3Hp)  bf16  hoisted input projection of the current layer
    # h_ref  : (Bc, Hp)      f32   hidden-state carry
    l = pl.program_id(1)
    S, Bc, Hp = seq_ref.shape
    bsub = Bc // nsub

    bgi = bgi_ref[l]                                               # (1, 3Hp) f32
    b_hn = bhn_ref[l]                                              # (1, Hp)  f32
    whh = whh_ref[0]                                               # (Hp, 3Hp) bf16

    # Hoisted input projection: one big MXU matmul per layer instead of S tiny ones.
    # Layer 0 reads the embedded input directly (no x->seq copy); layers > 0 read the
    # previous layer's output from the VMEM-resident sequence buffer (no HBM round trip).
    @pl.when(l == 0)
    def _():
        x_flat = x_ref[...].reshape(S * Bc, ep)
        gi = jnp.dot(x_flat, wih_ref[0, 0:ep, :],
                     preferred_element_type=jnp.float32)
        gi_ref[...] = (gi + bgi).astype(gi_ref.dtype).reshape(S, Bc, 3 * Hp)

    @pl.when(l > 0)
    def _():
        s_flat = seq_ref[...].reshape(S * Bc, Hp)
        gi = jnp.dot(s_flat, wih_ref[0, 0:Hp, :],
                     preferred_element_type=jnp.float32)
        gi_ref[...] = (gi + bgi).astype(gi_ref.dtype).reshape(S, Bc, 3 * Hp)

    h_ref[...] = jnp.zeros_like(h_ref)

    # TODO(synk): hold W_hh in the MXU weight registers across the whole time loop
    # (pltpu.matmul_push_rhs / matmul_acc_lhs / matmul_pop) to avoid S-1 weight re-pushes.
    def step(t, carry):
        gi_t = gi_ref[t]                                           # (Bc, 3Hp) bf16
        # Independent batch sub-chunks: one sub-chunk's transcendentals overlap the
        # other's h @ W_hh MXU drain (they touch disjoint rows of h_ref / seq_ref[t]).
        for si in range(nsub):
            lo = si * bsub
            h = h_ref[lo:lo + bsub, :]                             # (bsub, Hp) f32
            gh = jnp.dot(h.astype(whh.dtype), whh,
                         preferred_element_type=jnp.float32)       # (bsub, 3Hp) f32
            g = gi_t[lo:lo + bsub, :]
            r = jax.nn.sigmoid(g[:, 0:Hp] + gh[:, 0:Hp])
            z = jax.nn.sigmoid(g[:, Hp:2 * Hp] + gh[:, Hp:2 * Hp])
            n = jnp.tanh(g[:, 2 * Hp:3 * Hp] + r * (gh[:, 2 * Hp:3 * Hp] + b_hn))
            h_new = n + z * (h - n)                                # == (1-z)*n + z*h
            h_ref[lo:lo + bsub, :] = h_new
            # Layer output written in place (this time slot was already consumed by the
            # hoisted projection above), so the next layer reads it straight from VMEM.
            seq_ref[t, lo:lo + bsub, :] = h_new.astype(seq_ref.dtype)
        return carry

    lax.fori_loop(0, S, step, 0, unroll=(S if S <= 16 else 8))
    hT_ref[0] = h_ref[...]


def _pack_gru_params(gru_layers, emb_dim, hid_dim, Dp, Hp):
    """Pad / transpose per-layer GRU params into lane-aligned, gate-blocked slabs."""
    n_layers = len(gru_layers)
    H = hid_dim
    wih_all = jnp.zeros((n_layers, Dp, 3 * Hp), jnp.float32)
    whh_all = jnp.zeros((n_layers, Hp, 3 * Hp), jnp.float32)
    bgi_all = jnp.zeros((n_layers, 1, 3 * Hp), jnp.float32)
    bhn_all = jnp.zeros((n_layers, 1, Hp), jnp.float32)
    for l, p in enumerate(gru_layers):
        in_dim = emb_dim if l == 0 else hid_dim
        wih_t = p["w_ih"].astype(jnp.float32).T   # (in_dim, 3H)
        whh_t = p["w_hh"].astype(jnp.float32).T   # (H, 3H)
        b_ih = p["b_ih"].astype(jnp.float32)
        b_hh = p["b_hh"].astype(jnp.float32)
        for g in range(3):                         # gate order r, z, n
            wih_all = wih_all.at[l, :in_dim, g * Hp:g * Hp + H].set(
                wih_t[:, g * H:(g + 1) * H])
            whh_all = whh_all.at[l, :H, g * Hp:g * Hp + H].set(
                whh_t[:, g * H:(g + 1) * H])
        # Folded biases: r/z gates take b_ih + b_hh inside the hoisted projection;
        # the n gate takes b_in there and b_hn separately (it is multiplied by r).
        bgi_all = bgi_all.at[l, 0, 0 * Hp:0 * Hp + H].set(b_ih[0:H] + b_hh[0:H])
        bgi_all = bgi_all.at[l, 0, 1 * Hp:1 * Hp + H].set(b_ih[H:2 * H] + b_hh[H:2 * H])
        bgi_all = bgi_all.at[l, 0, 2 * Hp:2 * Hp + H].set(b_ih[2 * H:3 * H])
        bhn_all = bhn_all.at[l, 0, :H].set(b_hh[2 * H:3 * H])
    return (wih_all.astype(jnp.bfloat16), whh_all.astype(jnp.bfloat16),
            bgi_all, bhn_all)


def init_encoder_params(key, input_dim, emb_dim, hid_dim, n_layers):
    """Deterministic parameter init mirroring nn.Embedding / nn.GRU shapes."""
    keys = jax.random.split(key, 1 + 4 * n_layers)
    emb = jax.random.normal(keys[0], (input_dim, emb_dim), jnp.float32)
    emb = emb.at[PAD_IDX].set(0.0)  # padding_idx row is zero

    k = 1.0 / jnp.sqrt(jnp.float32(hid_dim))
    layers = []
    for l in range(n_layers):
        in_dim = emb_dim if l == 0 else hid_dim
        kw = keys[1 + 4 * l: 1 + 4 * (l + 1)]
        layers.append(dict(
            w_ih=jax.random.uniform(kw[0], (3 * hid_dim, in_dim), jnp.float32, -k, k),
            w_hh=jax.random.uniform(kw[1], (3 * hid_dim, hid_dim), jnp.float32, -k, k),
            b_ih=jax.random.uniform(kw[2], (3 * hid_dim,), jnp.float32, -k, k),
            b_hh=jax.random.uniform(kw[3], (3 * hid_dim,), jnp.float32, -k, k),
        ))
    return dict(embedding=emb, gru=layers)


def encoder_forward(src, params):
    """src: (B, S) int32 token ids  ->  hidden: (n_layers, B, H) like PyTorch GRU."""
    emb_table = params["embedding"]
    gru = params["gru"]
    n_layers = len(gru)
    B, S = src.shape
    E = emb_table.shape[1]
    H = gru[0]["w_hh"].shape[1]

    Hp = _round_up(H, 128)                 # each gate block is a 128-lane multiple
    Ep = _round_up(E, 128)                 # embedded-input lane width (layer 0 only)
    Dp = max(Ep, Hp)                       # weight-slab rows (layer 0: Ep, layers>0: Hp)

    # Batch chunking: bf16 sublane tile = 16 rows; >= 2 chunks whenever possible so the
    # "parallel" batch axis shards across v7x's 2 TensorCores; cap Bc at 128 (MXU M tile).
    Bp = _round_up(B, 16)
    if Bp > 128:
        Bc = 128
        Bp = _round_up(Bp, Bc)
    elif Bp >= 32:
        Bc = _round_up(Bp // 2, 16)
        Bp = 2 * Bc
    else:
        Bc = Bp
    nbc = Bp // Bc
    nsub = 2 if Bc >= 32 else 1            # sub-chunk interleave inside the time step

    # Embedding lookup directly in time-major order (no (B,S,E)->(S,B,E) copy).
    # Dropout is identity (inference mode).
    # TODO(synk): fuse the embedding gather into the kernel via scalar-prefetched token ids
    # + per-row DMA to avoid materializing this padded (S, Bp, Ep) slab in HBM.
    # TODO(synk): for very small H, pack all 3 gates into one 128-lane block instead of
    # padding each gate to 128 (cuts MXU N work and EUP volume 3x).
    emb_tm = jnp.take(emb_table, src.T, axis=0)            # (S, B, E)
    x_p = jnp.zeros((S, Bp, Ep), jnp.bfloat16)
    x_p = x_p.at[:, :B, :E].set(emb_tm.astype(jnp.bfloat16))

    wih_all, whh_all, bgi_all, bhn_all = _pack_gru_params(gru, E, H, Dp, Hp)

    # VMEM budget: resident scratch + double-buffered streamed blocks, 2x safety margin,
    # capped per TPU generation (leaves headroom for Mosaic internal scratch).
    vmem_need = (
        2 * S * Bc * Ep * 2                   # x block, double-buffered (bf16)
        + S * Bc * Hp * 2                     # resident layer-output sequence (bf16)
        + S * Bc * 3 * Hp * 2                 # hoisted input projection (bf16)
        + Bc * Hp * 4                         # hidden-state carry (f32)
        + 2 * (Dp + Hp) * 3 * Hp * 2          # W_ih / W_hh double buffers (bf16)
        + 2 * n_layers * 4 * Hp * 4           # bias blocks (f32)
        + 2 * Bc * Hp * 4                     # output double buffer (f32)
    )
    vmem_limit = int(min(_vmem_cap_bytes(), max(8 * 2**20, 2 * vmem_need)))

    h_all = pl.pallas_call(
        functools.partial(_encoder_gru_kernel, ep=Ep, nsub=nsub),
        out_shape=jax.ShapeDtypeStruct((n_layers, Bp, Hp), jnp.float32),
        grid_spec=pltpu.PrefetchScalarGridSpec(
            num_scalar_prefetch=0,
            grid=(nbc, n_layers),             # batch chunks outer, layers inner
            in_specs=[
                pl.BlockSpec((S, Bc, Ep), lambda b, l: (0, b, 0)),            # x (per chunk)
                pl.BlockSpec((1, Dp, 3 * Hp), lambda b, l: (l, 0, 0)),        # W_ih[l]
                pl.BlockSpec((1, Hp, 3 * Hp), lambda b, l: (l, 0, 0)),        # W_hh[l]
                pl.BlockSpec((n_layers, 1, 3 * Hp), lambda b, l: (0, 0, 0)),  # folded biases
                pl.BlockSpec((n_layers, 1, Hp), lambda b, l: (0, 0, 0)),      # b_hn
            ],
            out_specs=pl.BlockSpec((1, Bc, Hp), lambda b, l: (l, b, 0)),
            scratch_shapes=[
                pltpu.VMEM((S, Bc, Hp), jnp.bfloat16),      # resident layer-output sequence
                pltpu.VMEM((S, Bc, 3 * Hp), jnp.bfloat16),  # hoisted input projection
                pltpu.VMEM((Bc, Hp), jnp.float32),          # hidden-state carry
            ],
        ),
        compiler_params=pltpu.CompilerParams(
            dimension_semantics=("parallel", "arbitrary"),
            vmem_limit_bytes=vmem_limit,
        ),
    )(x_p, wih_all, whh_all, bgi_all, bhn_all)

    return h_all[:, :B, :H]


def _reference_encoder(src, params):
    """Pure-JAX f32 reference (PyTorch GRU semantics) for correctness checking."""
    emb = jnp.take(params["embedding"], src, axis=0)            # (B, S, E)
    x = jnp.transpose(emb, (1, 0, 2)).astype(jnp.float32)       # (S, B, E)
    H = params["gru"][0]["w_hh"].shape[1]
    finals = []
    for p in params["gru"]:
        w_ih, w_hh, b_ih, b_hh = p["w_ih"], p["w_hh"], p["b_ih"], p["b_hh"]

        def cell(h, x_t):
            gi = x_t @ w_ih.T + b_ih
            gh = h @ w_hh.T + b_hh
            r = jax.nn.sigmoid(gi[:, :H] + gh[:, :H])
            z = jax.nn.sigmoid(gi[:, H:2 * H] + gh[:, H:2 * H])
            n = jnp.tanh(gi[:, 2 * H:] + r * gh[:, 2 * H:])
            h_new = (1.0 - z) * n + z * h
            return h_new, h_new

        h0 = jnp.zeros((x.shape[1], H), jnp.float32)
        hT, ys = lax.scan(cell, h0, x)
        finals.append(hT)
        x = ys
    return jnp.stack(finals, axis=0)


if __name__ == "__main__":
    input_dim = 20   # source vocab size
    emb_dim = 32
    hid_dim = 32
    n_layers = 2
    batch = 2
    seq = 8

    key = jax.random.PRNGKey(0)
    pkey, dkey = jax.random.split(key)
    params = init_encoder_params(pkey, input_dim, emb_dim, hid_dim, n_layers)

    src = jax.random.randint(dkey, (batch, seq), 1, input_dim, dtype=jnp.int32)
    src = src.at[:, -2:].set(PAD_IDX)  # trailing padding, like a padded batch

    hidden = encoder_forward(src, params)
    hidden = jax.block_until_ready(hidden)

    assert hidden.shape == (n_layers, batch, hid_dim)
    assert jnp.all(jnp.isfinite(hidden))

    ref = _reference_encoder(src, params)
    max_err = float(jnp.max(jnp.abs(hidden - ref)))
    assert max_err < 1e-1, f"kernel mismatch vs reference: max abs err {max_err}"

    print("KERNEL_OK")
</pallas_src>

<mosaic_0001>
module attributes {stable_mosaic.version = 11 : i64} {
  func.func @_encoder_gru_kernel(%arg0: i32, %arg1: i32, %arg2: memref<8x16x128xbf16, #tpu.memory_space<vmem>>, %arg3: memref<1x128x384xbf16, #tpu.memory_space<vmem>>, %arg4: memref<1x128x384xbf16, #tpu.memory_space<vmem>>, %arg5: memref<2x1x384xf32, #tpu.memory_space<vmem>>, %arg6: memref<2x1x128xf32, #tpu.memory_space<vmem>>, %arg7: memref<1x16x128xf32, #tpu.memory_space<vmem>>, %arg8: memref<8x16x128xbf16, #tpu.memory_space<vmem>>, %arg9: memref<8x16x384xbf16, #tpu.memory_space<vmem>>, %arg10: memref<16x128xf32, #tpu.memory_space<vmem>>) attributes {dimension_semantics = [#tpu.dimension_semantics<parallel>, #tpu.dimension_semantics<arbitrary>], iteration_bounds = array<i64: 1, 2>, scalar_prefetch = 0 : i64, scratch_operands = 3 : i64, tpu.core_type = #tpu.core_type<tc>, window_params = [{transform_indices = @transform_0, window_bounds = array<i64: 8, 16, 128>}, {transform_indices = @transform_1, window_bounds = array<i64: 1, 128, 384>}, {transform_indices = @transform_2, window_bounds = array<i64: 1, 128, 384>}, {pipeline_mode = #tpu.pipeline_mode<synchronous>, transform_indices = @transform_3, window_bounds = array<i64: 2, 1, 384>}, {pipeline_mode = #tpu.pipeline_mode<synchronous>, transform_indices = @transform_4, window_bounds = array<i64: 2, 1, 128>}, {transform_indices = @transform_5, window_bounds = array<i64: 1, 16, 128>}]} {
    %0 = arith.index_cast %arg1 : i32 to index
    %c0 = arith.constant 0 : index
    %c0_0 = arith.constant 0 : index
    %1 = vector.load %arg5[%0, %c0, %c0_0] : memref<2x1x384xf32, #tpu.memory_space<vmem>>, vector<1x1x384xf32>
    %2 = vector.shape_cast %1 : vector<1x1x384xf32> to vector<1x384xf32>
    %3 = arith.index_cast %arg1 : i32 to index
    %c0_1 = arith.constant 0 : index
    %c0_2 = arith.constant 0 : index
    %4 = vector.load %arg6[%3, %c0_1, %c0_2] : memref<2x1x128xf32, #tpu.memory_space<vmem>>, vector<1x1x128xf32>
    %5 = vector.shape_cast %4 : vector<1x1x128xf32> to vector<1x128xf32>
    %c0_3 = arith.constant 0 : index
    %c0_4 = arith.constant 0 : index
    %c0_5 = arith.constant 0 : index
    %6 = vector.load %arg4[%c0_3, %c0_4, %c0_5] : memref<1x128x384xbf16, #tpu.memory_space<vmem>>, vector<1x128x384xbf16>
    %7 = vector.shape_cast %6 : vector<1x128x384xbf16> to vector<128x384xbf16>
    %c0_i32 = arith.constant 0 : i32
    %8 = arith.cmpi eq, %arg1, %c0_i32 : i32
    %9 = arith.extui %8 : i1 to i32
    %c0_i32_6 = arith.constant 0 : i32
    %10 = arith.cmpi ne, %9, %c0_i32_6 : i32
    scf.if %10 {
      %c0_105 = arith.constant 0 : index
      %c0_106 = arith.constant 0 : index
      %c0_107 = arith.constant 0 : index
      %348 = vector.load %arg2[%c0_105, %c0_106, %c0_107] : memref<8x16x128xbf16, #tpu.memory_space<vmem>>, vector<8x16x128xbf16>
      %349 = vector.shape_cast %348 : vector<8x16x128xbf16> to vector<128x128xbf16>
      %c0_108 = arith.constant 0 : index
      %c0_109 = arith.constant 0 : index
      %c0_110 = arith.constant 0 : index
      %350 = vector.load %arg3[%c0_108, %c0_109, %c0_110] : memref<1x128x384xbf16, #tpu.memory_space<vmem>>, vector<1x128x384xbf16>
      %351 = vector.shape_cast %350 : vector<1x128x384xbf16> to vector<128x384xbf16>
      %cst_111 = arith.constant dense<0.000000e+00> : vector<128x384xf32>
      %352 = tpu.matmul %349, %351, %cst_111 {dimension_numbers = #tpu.dot_dimension_numbers<[1], [0], [0], [1], [0, 0, 1, 1], [], []>} : vector<128x128xbf16>, vector<128x384xbf16>, vector<128x384xf32> -> vector<128x384xf32>
      %353 = vector.broadcast %2 : vector<1x384xf32> to vector<128x384xf32>
      %354 = arith.addf %352, %353 : vector<128x384xf32>
      %355 = arith.truncf %354 : vector<128x384xf32> to vector<128x384xbf16>
      %356 = vector.shape_cast %355 : vector<128x384xbf16> to vector<8x16x384xbf16>
      %c0_112 = arith.constant 0 : index
      %c0_113 = arith.constant 0 : index
      %c0_114 = arith.constant 0 : index
      %357 = vector.load %arg9[%c0_112, %c0_113, %c0_114] : memref<8x16x384xbf16, #tpu.memory_space<vmem>>, vector<8x16x384xbf16>
      tpu.vector_store %arg9[%c0_112, %c0_113, %c0_114], %356 {strides = array<i32>} : memref<8x16x384xbf16, #tpu.memory_space<vmem>>, vector<8x16x384xbf16>,
    } else {
    }
    %c0_i32_7 = arith.constant 0 : i32
    %11 = arith.cmpi sgt, %arg1, %c0_i32_7 : i32
    %12 = arith.extui %11 : i1 to i32
    %c0_i32_8 = arith.constant 0 : i32
    %13 = arith.cmpi ne, %12, %c0_i32_8 : i32
    scf.if %13 {
      %c0_105 = arith.constant 0 : index
      %c0_106 = arith.constant 0 : index
      %c0_107 = arith.constant 0 : index
      %348 = vector.load %arg8[%c0_105, %c0_106, %c0_107] : memref<8x16x128xbf16, #tpu.memory_space<vmem>>, vector<8x16x128xbf16>
      %349 = vector.shape_cast %348 : vector<8x16x128xbf16> to vector<128x128xbf16>
      %c0_108 = arith.constant 0 : index
      %c0_109 = arith.constant 0 : index
      %c0_110 = arith.constant 0 : index
      %350 = vector.load %arg3[%c0_108, %c0_109, %c0_110] : memref<1x128x384xbf16, #tpu.memory_space<vmem>>, vector<1x128x384xbf16>
      %351 = vector.shape_cast %350 : vector<1x128x384xbf16> to vector<128x384xbf16>
      %cst_111 = arith.constant dense<0.000000e+00> : vector<128x384xf32>
      %352 = tpu.matmul %349, %351, %cst_111 {dimension_numbers = #tpu.dot_dimension_numbers<[1], [0], [0], [1], [0, 0, 1, 1], [], []>} : vector<128x128xbf16>, vector<128x384xbf16>, vector<128x384xf32> -> vector<128x384xf32>
      %353 = vector.broadcast %2 : vector<1x384xf32> to vector<128x384xf32>
      %354 = arith.addf %352, %353 : vector<128x384xf32>
      %355 = arith.truncf %354 : vector<128x384xf32> to vector<128x384xbf16>
      %356 = vector.shape_cast %355 : vector<128x384xbf16> to vector<8x16x384xbf16>
      %c0_112 = arith.constant 0 : index
      %c0_113 = arith.constant 0 : index
      %c0_114 = arith.constant 0 : index
      %357 = vector.load %arg9[%c0_112, %c0_113, %c0_114] : memref<8x16x384xbf16, #tpu.memory_space<vmem>>, vector<8x16x384xbf16>
      tpu.vector_store %arg9[%c0_112, %c0_113, %c0_114], %356 {strides = array<i32>} : memref<8x16x384xbf16, #tpu.memory_space<vmem>>, vector<8x16x384xbf16>,
    } else {
    }
    %cst = arith.constant 0.000000e+00 : f32
    %14 = vector.broadcast %cst : f32 to vector<16x128xf32>
    %c0_9 = arith.constant 0 : index
    %c0_10 = arith.constant 0 : index
    %15 = vector.load %arg10[%c0_9, %c0_10] : memref<16x128xf32, #tpu.memory_space<vmem>>, vector<16x128xf32>
    tpu.vector_store %arg10[%c0_9, %c0_10], %14 {strides = array<i32>} : memref<16x128xf32, #tpu.memory_space<vmem>>, vector<16x128xf32>,
    %c0_i32_11 = arith.constant 0 : i32
    %16 = arith.index_cast %c0_i32_11 : i32 to index
    %c0_12 = arith.constant 0 : index
    %c0_13 = arith.constant 0 : index
    %17 = vector.load %arg9[%16, %c0_12, %c0_13] : memref<8x16x384xbf16, #tpu.memory_space<vmem>>, vector<1x16x384xbf16>
    %18 = vector.shape_cast %17 : vector<1x16x384xbf16> to vector<16x384xbf16>
    %c0_14 = arith.constant 0 : index
    %c0_15 = arith.constant 0 : index
    %19 = vector.load %arg10[%c0_14, %c0_15] : memref<16x128xf32, #tpu.memory_space<vmem>>, vector<16x128xf32>
    %20 = arith.truncf %19 : vector<16x128xf32> to vector<16x128xbf16>
    %cst_16 = arith.constant dense<0.000000e+00> : vector<16x384xf32>
    %21 = tpu.matmul %20, %7, %cst_16 {dimension_numbers = #tpu.dot_dimension_numbers<[1], [0], [0], [1], [0, 0, 1, 1], [], []>} : vector<16x128xbf16>, vector<128x384xbf16>, vector<16x384xf32> -> vector<16x384xf32>
    %22 = vector.extract_strided_slice %18 {offsets = [0, 0], sizes = [16, 128], strides = [1, 1]} : vector<16x384xbf16> to vector<16x128xbf16>
    %23 = vector.extract_strided_slice %21 {offsets = [0, 0], sizes = [16, 128], strides = [1, 1]} : vector<16x384xf32> to vector<16x128xf32>
    %24 = arith.extf %22 : vector<16x128xbf16> to vector<16x128xf32>
    %25 = arith.addf %24, %23 : vector<16x128xf32>
    %26 = arith.negf %25 : vector<16x128xf32>
    %27 = math.exp %26 : vector<16x128xf32>
    %cst_17 = arith.constant 1.000000e+00 : f32
    %28 = vector.broadcast %cst_17 : f32 to vector<16x128xf32>
    %29 = arith.addf %28, %27 : vector<16x128xf32>
    %30 = arith.divf %28, %29 : vector<16x128xf32>
    %31 = vector.extract_strided_slice %18 {offsets = [0, 128], sizes = [16, 128], strides = [1, 1]} : vector<16x384xbf16> to vector<16x128xbf16>
    %32 = vector.extract_strided_slice %21 {offsets = [0, 128], sizes = [16, 128], strides = [1, 1]} : vector<16x384xf32> to vector<16x128xf32>
    %33 = arith.extf %31 : vector<16x128xbf16> to vector<16x128xf32>
    %34 = arith.addf %33, %32 : vector<16x128xf32>
    %35 = arith.negf %34 : vector<16x128xf32>
    %36 = math.exp %35 : vector<16x128xf32>
    %cst_18 = arith.constant 1.000000e+00 : f32
    %37 = vector.broadcast %cst_18 : f32 to vector<16x128xf32>
    %38 = arith.addf %37, %36 : vector<16x128xf32>
    %39 = arith.divf %37, %38 : vector<16x128xf32>
    %40 = vector.extract_strided_slice %18 {offsets = [0, 256], sizes = [16, 128], strides = [1, 1]} : vector<16x384xbf16> to vector<16x128xbf16>
    %41 = vector.extract_strided_slice %21 {offsets = [0, 256], sizes = [16, 128], strides = [1, 1]} : vector<16x384xf32> to vector<16x128xf32>
    %42 = vector.broadcast %5 : vector<1x128xf32> to vector<16x128xf32>
    %43 = arith.addf %41, %42 : vector<16x128xf32>
    %44 = arith.mulf %30, %43 : vector<16x128xf32>
    %45 = arith.extf %40 : vector<16x128xbf16> to vector<16x128xf32>
    %46 = arith.addf %45, %44 : vector<16x128xf32>
    %47 = math.tanh %46 : vector<16x128xf32>
    %48 = arith.subf %19, %47 : vector<16x128xf32>
    %49 = arith.mulf %39, %48 : vector<16x128xf32>
    %50 = arith.addf %47, %49 : vector<16x128xf32>
    %c0_19 = arith.constant 0 : index
    %c0_20 = arith.constant 0 : index
    %51 = vector.load %arg10[%c0_19, %c0_20] : memref<16x128xf32, #tpu.memory_space<vmem>>, vector<16x128xf32>
    tpu.vector_store %arg10[%c0_19, %c0_20], %50 {strides = array<i32>} : memref<16x128xf32, #tpu.memory_space<vmem>>, vector<16x128xf32>,
    %52 = arith.truncf %50 : vector<16x128xf32> to vector<16x128xbf16>
    %53 = arith.index_cast %c0_i32_11 : i32 to index
    %c0_21 = arith.constant 0 : index
    %c0_22 = arith.constant 0 : index
    %54 = vector.load %arg8[%53, %c0_21, %c0_22] : memref<8x16x128xbf16, #tpu.memory_space<vmem>>, vector<1x16x128xbf16>
    %55 = vector.shape_cast %54 : vector<1x16x128xbf16> to vector<16x128xbf16>
    %56 = vector.shape_cast %52 : vector<16x128xbf16> to vector<1x16x128xbf16>
    tpu.vector_store %arg8[%53, %c0_21, %c0_22], %56 {strides = array<i32>} : memref<8x16x128xbf16, #tpu.memory_space<vmem>>, vector<1x16x128xbf16>,
    %c1_i32 = arith.constant 1 : i32
    %57 = arith.index_cast %c1_i32 : i32 to index
    %c0_23 = arith.constant 0 : index
    %c0_24 = arith.constant 0 : index
    %58 = vector.load %arg9[%57, %c0_23, %c0_24] : memref<8x16x384xbf16, #tpu.memory_space<vmem>>, vector<1x16x384xbf16>
    %59 = vector.shape_cast %58 : vector<1x16x384xbf16> to vector<16x384xbf16>
    %c0_25 = arith.constant 0 : index
    %c0_26 = arith.constant 0 : index
    %60 = vector.load %arg10[%c0_25, %c0_26] : memref<16x128xf32, #tpu.memory_space<vmem>>, vector<16x128xf32>
    %61 = arith.truncf %60 : vector<16x128xf32> to vector<16x128xbf16>
    %cst_27 = arith.constant dense<0.000000e+00> : vector<16x384xf32>
    %62 = tpu.matmul %61, %7, %cst_27 {dimension_numbers = #tpu.dot_dimension_numbers<[1], [0], [0], [1], [0, 0, 1, 1], [], []>} : vector<16x128xbf16>, vector<128x384xbf16>, vector<16x384xf32> -> vector<16x384xf32>
    %63 = vector.extract_strided_slice %59 {offsets = [0, 0], sizes = [16, 128], strides = [1, 1]} : vector<16x384xbf16> to vector<16x128xbf16>
    %64 = vector.extract_strided_slice %62 {offsets = [0, 0], sizes = [16, 128], strides = [1, 1]} : vector<16x384xf32> to vector<16x128xf32>
    %65 = arith.extf %63 : vector<16x128xbf16> to vector<16x128xf32>
    %66 = arith.addf %65, %64 : vector<16x128xf32>
    %67 = arith.negf %66 : vector<16x128xf32>
    %68 = math.exp %67 : vector<16x128xf32>
    %cst_28 = arith.constant 1.000000e+00 : f32
    %69 = vector.broadcast %cst_28 : f32 to vector<16x128xf32>
    %70 = arith.addf %69, %68 : vector<16x128xf32>
    %71 = arith.divf %69, %70 : vector<16x128xf32>
    %72 = vector.extract_strided_slice %59 {offsets = [0, 128], sizes = [16, 128], strides = [1, 1]} : vector<16x384xbf16> to vector<16x128xbf16>
    %73 = vector.extract_strided_slice %62 {offsets = [0, 128], sizes = [16, 128], strides = [1, 1]} : vector<16x384xf32> to vector<16x128xf32>
    %74 = arith.extf %72 : vector<16x128xbf16> to vector<16x128xf32>
    %75 = arith.addf %74, %73 : vector<16x128xf32>
    %76 = arith.negf %75 : vector<16x128xf32>
    %77 = math.exp %76 : vector<16x128xf32>
    %cst_29 = arith.constant 1.000000e+00 : f32
    %78 = vector.broadcast %cst_29 : f32 to vector<16x128xf32>
    %79 = arith.addf %78, %77 : vector<16x128xf32>
    %80 = arith.divf %78, %79 : vector<16x128xf32>
    %81 = vector.extract_strided_slice %59 {offsets = [0, 256], sizes = [16, 128], strides = [1, 1]} : vector<16x384xbf16> to vector<16x128xbf16>
    %82 = vector.extract_strided_slice %62 {offsets = [0, 256], sizes = [16, 128], strides = [1, 1]} : vector<16x384xf32> to vector<16x128xf32>
    %83 = vector.broadcast %5 : vector<1x128xf32> to vector<16x128xf32>
    %84 = arith.addf %82, %83 : vector<16x128xf32>
    %85 = arith.mulf %71, %84 : vector<16x128xf32>
    %86 = arith.extf %81 : vector<16x128xbf16> to vector<16x128xf32>
    %87 = arith.addf %86, %85 : vector<16x128xf32>
    %88 = math.tanh %87 : vector<16x128xf32>
    %89 = arith.subf %60, %88 : vector<16x128xf32>
    %90 = arith.mulf %80, %89 : vector<16x128xf32>
    %91 = arith.addf %88, %90 : vector<16x128xf32>
    %c0_30 = arith.constant 0 : index
    %c0_31 = arith.constant 0 : index
    %92 = vector.load %arg10[%c0_30, %c0_31] : memref<16x128xf32, #tpu.memory_space<vmem>>, vector<16x128xf32>
    tpu.vector_store %arg10[%c0_30, %c0_31], %91 {strides = array<i32>} : memref<16x128xf32, #tpu.memory_space<vmem>>, vector<16x128xf32>,
    %93 = arith.truncf %91 : vector<16x128xf32> to vector<16x128xbf16>
    %94 = arith.index_cast %c1_i32 : i32 to index
    %c0_32 = arith.constant 0 : index
    %c0_33 = arith.constant 0 : index
    %95 = vector.load %arg8[%94, %c0_32, %c0_33] : memref<8x16x128xbf16, #tpu.memory_space<vmem>>, vector<1x16x128xbf16>
    %96 = vector.shape_cast %95 : vector<1x16x128xbf16> to vector<16x128xbf16>
    %97 = vector.shape_cast %93 : vector<16x128xbf16> to vector<1x16x128xbf16>
    tpu.vector_store %arg8[%94, %c0_32, %c0_33], %97 {strides = array<i32>} : memref<8x16x128xbf16, #tpu.memory_space<vmem>>, vector<1x16x128xbf16>,
    %c2_i32 = arith.constant 2 : i32
    %98 = arith.index_cast %c2_i32 : i32 to index
    %c0_34 = arith.constant 0 : index
    %c0_35 = arith.constant 0 : index
    %99 = vector.load %arg9[%98, %c0_34, %c0_35] : memref<8x16x384xbf16, #tpu.memory_space<vmem>>, vector<1x16x384xbf16>
    %100 = vector.shape_cast %99 : vector<1x16x384xbf16> to vector<16x384xbf16>
    %c0_36 = arith.constant 0 : index
    %c0_37 = arith.constant 0 : index
    %101 = vector.load %arg10[%c0_36, %c0_37] : memref<16x128xf32, #tpu.memory_space<vmem>>, vector<16x128xf32>
    %102 = arith.truncf %101 : vector<16x128xf32> to vector<16x128xbf16>
    %cst_38 = arith.constant dense<0.000000e+00> : vector<16x384xf32>
    %103 = tpu.matmul %102, %7, %cst_38 {dimension_numbers = #tpu.dot_dimension_numbers<[1], [0], [0], [1], [0, 0, 1, 1], [], []>} : vector<16x128xbf16>, vector<128x384xbf16>, vector<16x384xf32> -> vector<16x384xf32>
    %104 = vector.extract_strided_slice %100 {offsets = [0, 0], sizes = [16, 128], strides = [1, 1]} : vector<16x384xbf16> to vector<16x128xbf16>
    %105 = vector.extract_strided_slice %103 {offsets = [0, 0], sizes = [16, 128], strides = [1, 1]} : vector<16x384xf32> to vector<16x128xf32>
    %106 = arith.extf %104 : vector<16x128xbf16> to vector<16x128xf32>
    %107 = arith.addf %106, %105 : vector<16x128xf32>
    %108 = arith.negf %107 : vector<16x128xf32>
    %109 = math.exp %108 : vector<16x128xf32>
    %cst_39 = arith.constant 1.000000e+00 : f32
    %110 = vector.broadcast %cst_39 : f32 to vector<16x128xf32>
    %111 = arith.addf %110, %109 : vector<16x128xf32>
    %112 = arith.divf %110, %111 : vector<16x128xf32>
    %113 = vector.extract_strided_slice %100 {offsets = [0, 128], sizes = [16, 128], strides = [1, 1]} : vector<16x384xbf16> to vector<16x128xbf16>
    %114 = vector.extract_strided_slice %103 {offsets = [0, 128], sizes = [16, 128], strides = [1, 1]} : vector<16x384xf32> to vector<16x128xf32>
    %115 = arith.extf %113 : vector<16x128xbf16> to vector<16x128xf32>
    %116 = arith.addf %115, %114 : vector<16x128xf32>
    %117 = arith.negf %116 : vector<16x128xf32>
    %118 = math.exp %117 : vector<16x128xf32>
    %cst_40 = arith.constant 1.000000e+00 : f32
    %119 = vector.broadcast %cst_40 : f32 to vector<16x128xf32>
    %120 = arith.addf %119, %118 : vector<16x128xf32>
    %121 = arith.divf %119, %120 : vector<16x128xf32>
    %122 = vector.extract_strided_slice %100 {offsets = [0, 256], sizes = [16, 128], strides = [1, 1]} : vector<16x384xbf16> to vector<16x128xbf16>
    %123 = vector.extract_strided_slice %103 {offsets = [0, 256], sizes = [16, 128], strides = [1, 1]} : vector<16x384xf32> to vector<16x128xf32>
    %124 = vector.broadcast %5 : vector<1x128xf32> to vector<16x128xf32>
    %125 = arith.addf %123, %124 : vector<16x128xf32>
    %126 = arith.mulf %112, %125 : vector<16x128xf32>
    %127 = arith.extf %122 : vector<16x128xbf16> to vector<16x128xf32>
    %128 = arith.addf %127, %126 : vector<16x128xf32>
    %129 = math.tanh %128 : vector<16x128xf32>
    %130 = arith.subf %101, %129 : vector<16x128xf32>
    %131 = arith.mulf %121, %130 : vector<16x128xf32>
    %132 = arith.addf %129, %131 : vector<16x128xf32>
    %c0_41 = arith.constant 0 : index
    %c0_42 = arith.constant 0 : index
    %133 = vector.load %arg10[%c0_41, %c0_42] : memref<16x128xf32, #tpu.memory_space<vmem>>, vector<16x128xf32>
    tpu.vector_store %arg10[%c0_41, %c0_42], %132 {strides = array<i32>} : memref<16x128xf32, #tpu.memory_space<vmem>>, vector<16x128xf32>,
    %134 = arith.truncf %132 : vector<16x128xf32> to vector<16x128xbf16>
    %135 = arith.index_cast %c2_i32 : i32 to index
    %c0_43 = arith.constant 0 : index
    %c0_44 = arith.constant 0 : index
    %136 = vector.load %arg8[%135, %c0_43, %c0_44] : memref<8x16x128xbf16, #tpu.memory_space<vmem>>, vector<1x16x128xbf16>
    %137 = vector.shape_cast %136 : vector<1x16x128xbf16> to vector<16x128xbf16>
    %138 = vector.shape_cast %134 : vector<16x128xbf16> to vector<1x16x128xbf16>
    tpu.vector_store %arg8[%135, %c0_43, %c0_44], %138 {strides = array<i32>} : memref<8x16x128xbf16, #tpu.memory_space<vmem>>, vector<1x16x128xbf16>,
    %c3_i32 = arith.constant 3 : i32
    %139 = arith.index_cast %c3_i32 : i32 to index
    %c0_45 = arith.constant 0 : index
    %c0_46 = arith.constant 0 : index
    %140 = vector.load %arg9[%139, %c0_45, %c0_46] : memref<8x16x384xbf16, #tpu.memory_space<vmem>>, vector<1x16x384xbf16>
    %141 = vector.shape_cast %140 : vector<1x16x384xbf16> to vector<16x384xbf16>
    %c0_47 = arith.constant 0 : index
    %c0_48 = arith.constant 0 : index
    %142 = vector.load %arg10[%c0_47, %c0_48] : memref<16x128xf32, #tpu.memory_space<vmem>>, vector<16x128xf32>
    %143 = arith.truncf %142 : vector<16x128xf32> to vector<16x128xbf16>
    %cst_49 = arith.constant dense<0.000000e+00> : vector<16x384xf32>
    %144 = tpu.matmul %143, %7, %cst_49 {dimension_numbers = #tpu.dot_dimension_numbers<[1], [0], [0], [1], [0, 0, 1, 1], [], []>} : vector<16x128xbf16>, vector<128x384xbf16>, vector<16x384xf32> -> vector<16x384xf32>
    %145 = vector.extract_strided_slice %141 {offsets = [0, 0], sizes = [16, 128], strides = [1, 1]} : vector<16x384xbf16> to vector<16x128xbf16>
    %146 = vector.extract_strided_slice %144 {offsets = [0, 0], sizes = [16, 128], strides = [1, 1]} : vector<16x384xf32> to vector<16x128xf32>
    %147 = arith.extf %145 : vector<16x128xbf16> to vector<16x128xf32>
    %148 = arith.addf %147, %146 : vector<16x128xf32>
    %149 = arith.negf %148 : vector<16x128xf32>
    %150 = math.exp %149 : vector<16x128xf32>
    %cst_50 = arith.constant 1.000000e+00 : f32
    %151 = vector.broadcast %cst_50 : f32 to vector<16x128xf32>
    %152 = arith.addf %151, %150 : vector<16x128xf32>
    %153 = arith.divf %151, %152 : vector<16x128xf32>
    %154 = vector.extract_strided_slice %141 {offsets = [0, 128], sizes = [16, 128], strides = [1, 1]} : vector<16x384xbf16> to vector<16x128xbf16>
    %155 = vector.extract_strided_slice %144 {offsets = [0, 128], sizes = [16, 128], strides = [1, 1]} : vector<16x384xf32> to vector<16x128xf32>
    %156 = arith.extf %154 : vector<16x128xbf16> to vector<16x128xf32>
    %157 = arith.addf %156, %155 : vector<16x128xf32>
    %158 = arith.negf %157 : vector<16x128xf32>
    %159 = math.exp %158 : vector<16x128xf32>
    %cst_51 = arith.constant 1.000000e+00 : f32
    %160 = vector.broadcast %cst_51 : f32 to vector<16x128xf32>
    %161 = arith.addf %160, %159 : vector<16x128xf32>
    %162 = arith.divf %160, %161 : vector<16x128xf32>
    %163 = vector.extract_strided_slice %141 {offsets = [0, 256], sizes = [16, 128], strides = [1, 1]} : vector<16x384xbf16> to vector<16x128xbf16>
    %164 = vector.extract_strided_slice %144 {offsets = [0, 256], sizes = [16, 128], strides = [1, 1]} : vector<16x384xf32> to vector<16x128xf32>
    %165 = vector.broadcast %5 : vector<1x128xf32> to vector<16x128xf32>
    %166 = arith.addf %164, %165 : vector<16x128xf32>
    %167 = arith.mulf %153, %166 : vector<16x128xf32>
    %168 = arith.extf %163 : vector<16x128xbf16> to vector<16x128xf32>
    %169 = arith.addf %168, %167 : vector<16x128xf32>
    %170 = math.tanh %169 : vector<16x128xf32>
    %171 = arith.subf %142, %170 : vector<16x128xf32>
    %172 = arith.mulf %162, %171 : vector<16x128xf32>
    %173 = arith.addf %170, %172 : vector<16x128xf32>
    %c0_52 = arith.constant 0 : index
    %c0_53 = arith.constant 0 : index
    %174 = vector.load %arg10[%c0_52, %c0_53] : memref<16x128xf32, #tpu.memory_space<vmem>>, vector<16x128xf32>
    tpu.vector_store %arg10[%c0_52, %c0_53], %173 {strides = array<i32>} : memref<16x128xf32, #tpu.memory_space<vmem>>, vector<16x128xf32>,
    %175 = arith.truncf %173 : vector<16x128xf32> to vector<16x128xbf16>
    %176 = arith.index_cast %c3_i32 : i32 to index
    %c0_54 = arith.constant 0 : index
    %c0_55 = arith.constant 0 : index
    %177 = vector.load %arg8[%176, %c0_54, %c0_55] : memref<8x16x128xbf16, #tpu.memory_space<vmem>>, vector<1x16x128xbf16>
    %178 = vector.shape_cast %177 : vector<1x16x128xbf16> to vector<16x128xbf16>
    %179 = vector.shape_cast %175 : vector<16x128xbf16> to vector<1x16x128xbf16>
    tpu.vector_store %arg8[%176, %c0_54, %c0_55], %179 {strides = array<i32>} : memref<8x16x128xbf16, #tpu.memory_space<vmem>>, vector<1x16x128xbf16>,
    %c4_i32 = arith.constant 4 : i32
    %180 = arith.index_cast %c4_i32 : i32 to index
    %c0_56 = arith.constant 0 : index
    %c0_57 = arith.constant 0 : index
    %181 = vector.load %arg9[%180, %c0_56, %c0_57] : memref<8x16x384xbf16, #tpu.memory_space<vmem>>, vector<1x16x384xbf16>
    %182 = vector.shape_cast %181 : vector<1x16x384xbf16> to vector<16x384xbf16>
    %c0_58 = arith.constant 0 : index
    %c0_59 = arith.constant 0 : index
    %183 = vector.load %arg10[%c0_58, %c0_59] : memref<16x128xf32, #tpu.memory_space<vmem>>, vector<16x128xf32>
    %184 = arith.truncf %183 : vector<16x128xf32> to vector<16x128xbf16>
    %cst_60 = arith.constant dense<0.000000e+00> : vector<16x384xf32>
    %185 = tpu.matmul %184, %7, %cst_60 {dimension_numbers = #tpu.dot_dimension_numbers<[1], [0], [0], [1], [0, 0, 1, 1], [], []>} : vector<16x128xbf16>, vector<128x384xbf16>, vector<16x384xf32> -> vector<16x384xf32>
    %186 = vector.extract_strided_slice %182 {offsets = [0, 0], sizes = [16, 128], strides = [1, 1]} : vector<16x384xbf16> to vector<16x128xbf16>
    %187 = vector.extract_strided_slice %185 {offsets = [0, 0], sizes = [16, 128], strides = [1, 1]} : vector<16x384xf32> to vector<16x128xf32>
    %188 = arith.extf %186 : vector<16x128xbf16> to vector<16x128xf32>
    %189 = arith.addf %188, %187 : vector<16x128xf32>
    %190 = arith.negf %189 : vector<16x128xf32>
    %191 = math.exp %190 : vector<16x128xf32>
    %cst_61 = arith.constant 1.000000e+00 : f32
    %192 = vector.broadcast %cst_61 : f32 to vector<16x128xf32>
    %193 = arith.addf %192, %191 : vector<16x128xf32>
    %194 = arith.divf %192, %193 : vector<16x128xf32>
    %195 = vector.extract_strided_slice %182 {offsets = [0, 128], sizes = [16, 128], strides = [1, 1]} : vector<16x384xbf16> to vector<16x128xbf16>
    %196 = vector.extract_strided_slice %185 {offsets = [0, 128], sizes = [16, 128], strides = [1, 1]} : vector<16x384xf32> to vector<16x128xf32>
    %197 = arith.extf %195 : vector<16x128xbf16> to vector<16x128xf32>
    %198 = arith.addf %197, %196 : vector<16x128xf32>
    %199 = arith.negf %198 : vector<16x128xf32>
    %200 = math.exp %199 : vector<16x128xf32>
    %cst_62 = arith.constant 1.000000e+00 : f32
    %201 = vector.broadcast %cst_62 : f32 to vector<16x128xf32>
    %202 = arith.addf %201, %200 : vector<16x128xf32>
    %203 = arith.divf %201, %202 : vector<16x128xf32>
    %204 = vector.extract_strided_slice %182 {offsets = [0, 256], sizes = [16, 128], strides = [1, 1]} : vector<16x384xbf16> to vector<16x128xbf16>
    %205 = vector.extract_strided_slice %185 {offsets = [0, 256], sizes = [16, 128], strides = [1, 1]} : vector<16x384xf32> to vector<16x128xf32>
    %206 = vector.broadcast %5 : vector<1x128xf32> to vector<16x128xf32>
    %207 = arith.addf %205, %206 : vector<16x128xf32>
    %208 = arith.mulf %194, %207 : vector<16x128xf32>
    %209 = arith.extf %204 : vector<16x128xbf16> to vector<16x128xf32>
    %210 = arith.addf %209, %208 : vector<16x128xf32>
    %211 = math.tanh %210 : vector<16x128xf32>
    %212 = arith.subf %183, %211 : vector<16x128xf32>
    %213 = arith.mulf %203, %212 : vector<16x128xf32>
    %214 = arith.addf %211, %213 : vector<16x128xf32>
    %c0_63 = arith.constant 0 : index
    %c0_64 = arith.constant 0 : index
    %215 = vector.load %arg10[%c0_63, %c0_64] : memref<16x128xf32, #tpu.memory_space<vmem>>, vector<16x128xf32>
    tpu.vector_store %arg10[%c0_63, %c0_64], %214 {strides = array<i32>} : memref<16x128xf32, #tpu.memory_space<vmem>>, vector<16x128xf32>,
    %216 = arith.truncf %214 : vector<16x128xf32> to vector<16x128xbf16>
    %217 = arith.index_cast %c4_i32 : i32 to index
    %c0_65 = arith.constant 0 : index
    %c0_66 = arith.constant 0 : index
    %218 = vector.load %arg8[%217, %c0_65, %c0_66] : memref<8x16x128xbf16, #tpu.memory_space<vmem>>, vector<1x16x128xbf16>
    %219 = vector.shape_cast %218 : vector<1x16x128xbf16> to vector<16x128xbf16>
    %220 = vector.shape_cast %216 : vector<16x128xbf16> to vector<1x16x128xbf16>
    tpu.vector_store %arg8[%217, %c0_65, %c0_66], %220 {strides = array<i32>} : memref<8x16x128xbf16, #tpu.memory_space<vmem>>, vector<1x16x128xbf16>,
    %c5_i32 = arith.constant 5 : i32
    %221 = arith.index_cast %c5_i32 : i32 to index
    %c0_67 = arith.constant 0 : index
    %c0_68 = arith.constant 0 : index
    %222 = vector.load %arg9[%221, %c0_67, %c0_68] : memref<8x16x384xbf16, #tpu.memory_space<vmem>>, vector<1x16x384xbf16>
    %223 = vector.shape_cast %222 : vector<1x16x384xbf16> to vector<16x384xbf16>
    %c0_69 = arith.constant 0 : index
    %c0_70 = arith.constant 0 : index
    %224 = vector.load %arg10[%c0_69, %c0_70] : memref<16x128xf32, #tpu.memory_space<vmem>>, vector<16x128xf32>
    %225 = arith.truncf %224 : vector<16x128xf32> to vector<16x128xbf16>
    %cst_71 = arith.constant dense<0.000000e+00> : vector<16x384xf32>
    %226 = tpu.matmul %225, %7, %cst_71 {dimension_numbers = #tpu.dot_dimension_numbers<[1], [0], [0], [1], [0, 0, 1, 1], [], []>} : vector<16x128xbf16>, vector<128x384xbf16>, vector<16x384xf32> -> vector<16x384xf32>
    %227 = vector.extract_strided_slice %223 {offsets = [0, 0], sizes = [16, 128], strides = [1, 1]} : vector<16x384xbf16> to vector<16x128xbf16>
    %228 = vector.extract_strided_slice %226 {offsets = [0, 0], sizes = [16, 128], strides = [1, 1]} : vector<16x384xf32> to vector<16x128xf32>
    %229 = arith.extf %227 : vector<16x128xbf16> to vector<16x128xf32>
    %230 = arith.addf %229, %228 : vector<16x128xf32>
    %231 = arith.negf %230 : vector<16x128xf32>
    %232 = math.exp %231 : vector<16x128xf32>
    %cst_72 = arith.constant 1.000000e+00 : f32
    %233 = vector.broadcast %cst_72 : f32 to vector<16x128xf32>
    %234 = arith.addf %233, %232 : vector<16x128xf32>
    %235 = arith.divf %233, %234 : vector<16x128xf32>
    %236 = vector.extract_strided_slice %223 {offsets = [0, 128], sizes = [16, 128], strides = [1, 1]} : vector<16x384xbf16> to vector<16x128xbf16>
    %237 = vector.extract_strided_slice %226 {offsets = [0, 128], sizes = [16, 128], strides = [1, 1]} : vector<16x384xf32> to vector<16x128xf32>
    %238 = arith.extf %236 : vector<16x128xbf16> to vector<16x128xf32>
    %239 = arith.addf %238, %237 : vector<16x128xf32>
    %240 = arith.negf %239 : vector<16x128xf32>
    %241 = math.exp %240 : vector<16x128xf32>
    %cst_73 = arith.constant 1.000000e+00 : f32
    %242 = vector.broadcast %cst_73 : f32 to vector<16x128xf32>
    %243 = arith.addf %242, %241 : vector<16x128xf32>
    %244 = arith.divf %242, %243 : vector<16x128xf32>
    %245 = vector.extract_strided_slice %223 {offsets = [0, 256], sizes = [16, 128], strides = [1, 1]} : vector<16x384xbf16> to vector<16x128xbf16>
    %246 = vector.extract_strided_slice %226 {offsets = [0, 256], sizes = [16, 128], strides = [1, 1]} : vector<16x384xf32> to vector<16x128xf32>
    %247 = vector.broadcast %5 : vector<1x128xf32> to vector<16x128xf32>
    %248 = arith.addf %246, %247 : vector<16x128xf32>
    %249 = arith.mulf %235, %248 : vector<16x128xf32>
    %250 = arith.extf %245 : vector<16x128xbf16> to vector<16x128xf32>
    %251 = arith.addf %250, %249 : vector<16x128xf32>
    %252 = math.tanh %251 : vector<16x128xf32>
    %253 = arith.subf %224, %252 : vector<16x128xf32>
    %254 = arith.mulf %244, %253 : vector<16x128xf32>
    %255 = arith.addf %252, %254 : vector<16x128xf32>
    %c0_74 = arith.constant 0 : index
    %c0_75 = arith.constant 0 : index
    %256 = vector.load %arg10[%c0_74, %c0_75] : memref<16x128xf32, #tpu.memory_space<vmem>>, vector<16x128xf32>
    tpu.vector_store %arg10[%c0_74, %c0_75], %255 {strides = array<i32>} : memref<16x128xf32, #tpu.memory_space<vmem>>, vector<16x128xf32>,
    %257 = arith.truncf %255 : vector<16x128xf32> to vector<16x128xbf16>
    %258 = arith.index_cast %c5_i32 : i32 to index
    %c0_76 = arith.constant 0 : index
    %c0_77 = arith.constant 0 : index
    %259 = vector.load %arg8[%258, %c0_76, %c0_77] : memref<8x16x128xbf16, #tpu.memory_space<vmem>>, vector<1x16x128xbf16>
    %260 = vector.shape_cast %259 : vector<1x16x128xbf16> to vector<16x128xbf16>
    %261 = vector.shape_cast %257 : vector<16x128xbf16> to vector<1x16x128xbf16>
    tpu.vector_store %arg8[%258, %c0_76, %c0_77], %261 {strides = array<i32>} : memref<8x16x128xbf16, #tpu.memory_space<vmem>>, vector<1x16x128xbf16>,
    %c6_i32 = arith.constant 6 : i32
    %262 = arith.index_cast %c6_i32 : i32 to index
    %c0_78 = arith.constant 0 : index
    %c0_79 = arith.constant 0 : index
    %263 = vector.load %arg9[%262, %c0_78, %c0_79] : memref<8x16x384xbf16, #tpu.memory_space<vmem>>, vector<1x16x384xbf16>
    %264 = vector.shape_cast %263 : vector<1x16x384xbf16> to vector<16x384xbf16>
    %c0_80 = arith.constant 0 : index
    %c0_81 = arith.constant 0 : index
    %265 = vector.load %arg10[%c0_80, %c0_81] : memref<16x128xf32, #tpu.memory_space<vmem>>, vector<16x128xf32>
    %266 = arith.truncf %265 : vector<16x128xf32> to vector<16x128xbf16>
    %cst_82 = arith.constant dense<0.000000e+00> : vector<16x384xf32>
    %267 = tpu.matmul %266, %7, %cst_82 {dimension_numbers = #tpu.dot_dimension_numbers<[1], [0], [0], [1], [0, 0, 1, 1], [], []>} : vector<16x128xbf16>, vector<128x384xbf16>, vector<16x384xf32> -> vector<16x384xf32>
    %268 = vector.extract_strided_slice %264 {offsets = [0, 0], sizes = [16, 128], strides = [1, 1]} : vector<16x384xbf16> to vector<16x128xbf16>
    %269 = vector.extract_strided_slice %267 {offsets = [0, 0], sizes = [16, 128], strides = [1, 1]} : vector<16x384xf32> to vector<16x128xf32>
    %270 = arith.extf %268 : vector<16x128xbf16> to vector<16x128xf32>
    %271 = arith.addf %270, %269 : vector<16x128xf32>
    %272 = arith.negf %271 : vector<16x128xf32>
    %273 = math.exp %272 : vector<16x128xf32>
    %cst_83 = arith.constant 1.000000e+00 : f32
    %274 = vector.broadcast %cst_83 : f32 to vector<16x128xf32>
    %275 = arith.addf %274, %273 : vector<16x128xf32>
    %276 = arith.divf %274, %275 : vector<16x128xf32>
    %277 = vector.extract_strided_slice %264 {offsets = [0, 128], sizes = [16, 128], strides = [1, 1]} : vector<16x384xbf16> to vector<16x128xbf16>
    %278 = vector.extract_strided_slice %267 {offsets = [0, 128], sizes = [16, 128], strides = [1, 1]} : vector<16x384xf32> to vector<16x128xf32>
    %279 = arith.extf %277 : vector<16x128xbf16> to vector<16x128xf32>
    %280 = arith.addf %279, %278 : vector<16x128xf32>
    %281 = arith.negf %280 : vector<16x128xf32>
    %282 = math.exp %281 : vector<16x128xf32>
    %cst_84 = arith.constant 1.000000e+00 : f32
    %283 = vector.broadcast %cst_84 : f32 to vector<16x128xf32>
    %284 = arith.addf %283, %282 : vector<16x128xf32>
    %285 = arith.divf %283, %284 : vector<16x128xf32>
    %286 = vector.extract_strided_slice %264 {offsets = [0, 256], sizes = [16, 128], strides = [1, 1]} : vector<16x384xbf16> to vector<16x128xbf16>
    %287 = vector.extract_strided_slice %267 {offsets = [0, 256], sizes = [16, 128], strides = [1, 1]} : vector<16x384xf32> to vector<16x128xf32>
    %288 = vector.broadcast %5 : vector<1x128xf32> to vector<16x128xf32>
    %289 = arith.addf %287, %288 : vector<16x128xf32>
    %290 = arith.mulf %276, %289 : vector<16x128xf32>
    %291 = arith.extf %286 : vector<16x128xbf16> to vector<16x128xf32>
    %292 = arith.addf %291, %290 : vector<16x128xf32>
    %293 = math.tanh %292 : vector<16x128xf32>
    %294 = arith.subf %265, %293 : vector<16x128xf32>
    %295 = arith.mulf %285, %294 : vector<16x128xf32>
    %296 = arith.addf %293, %295 : vector<16x128xf32>
    %c0_85 = arith.constant 0 : index
    %c0_86 = arith.constant 0 : index
    %297 = vector.load %arg10[%c0_85, %c0_86] : memref<16x128xf32, #tpu.memory_space<vmem>>, vector<16x128xf32>
    tpu.vector_store %arg10[%c0_85, %c0_86], %296 {strides = array<i32>} : memref<16x128xf32, #tpu.memory_space<vmem>>, vector<16x128xf32>,
    %298 = arith.truncf %296 : vector<16x128xf32> to vector<16x128xbf16>
    %299 = arith.index_cast %c6_i32 : i32 to index
    %c0_87 = arith.constant 0 : index
    %c0_88 = arith.constant 0 : index
    %300 = vector.load %arg8[%299, %c0_87, %c0_88] : memref<8x16x128xbf16, #tpu.memory_space<vmem>>, vector<1x16x128xbf16>
    %301 = vector.shape_cast %300 : vector<1x16x128xbf16> to vector<16x128xbf16>
    %302 = vector.shape_cast %298 : vector<16x128xbf16> to vector<1x16x128xbf16>
    tpu.vector_store %arg8[%299, %c0_87, %c0_88], %302 {strides = array<i32>} : memref<8x16x128xbf16, #tpu.memory_space<vmem>>, vector<1x16x128xbf16>,
    %c7_i32 = arith.constant 7 : i32
    %303 = arith.index_cast %c7_i32 : i32 to index
    %c0_89 = arith.constant 0 : index
    %c0_90 = arith.constant 0 : index
    %304 = vector.load %arg9[%303, %c0_89, %c0_90] : memref<8x16x384xbf16, #tpu.memory_space<vmem>>, vector<1x16x384xbf16>
    %305 = vector.shape_cast %304 : vector<1x16x384xbf16> to vector<16x384xbf16>
    %c0_91 = arith.constant 0 : index
    %c0_92 = arith.constant 0 : index
    %306 = vector.load %arg10[%c0_91, %c0_92] : memref<16x128xf32, #tpu.memory_space<vmem>>, vector<16x128xf32>
    %307 = arith.truncf %306 : vector<16x128xf32> to vector<16x128xbf16>
    %cst_93 = arith.constant dense<0.000000e+00> : vector<16x384xf32>
    %308 = tpu.matmul %307, %7, %cst_93 {dimension_numbers = #tpu.dot_dimension_numbers<[1], [0], [0], [1], [0, 0, 1, 1], [], []>} : vector<16x128xbf16>, vector<128x384xbf16>, vector<16x384xf32> -> vector<16x384xf32>
    %309 = vector.extract_strided_slice %305 {offsets = [0, 0], sizes = [16, 128], strides = [1, 1]} : vector<16x384xbf16> to vector<16x128xbf16>
    %310 = vector.extract_strided_slice %308 {offsets = [0, 0], sizes = [16, 128], strides = [1, 1]} : vector<16x384xf32> to vector<16x128xf32>
    %311 = arith.extf %309 : vector<16x128xbf16> to vector<16x128xf32>
    %312 = arith.addf %311, %310 : vector<16x128xf32>
    %313 = arith.negf %312 : vector<16x128xf32>
    %314 = math.exp %313 : vector<16x128xf32>
    %cst_94 = arith.constant 1.000000e+00 : f32
    %315 = vector.broadcast %cst_94 : f32 to vector<16x128xf32>
    %316 = arith.addf %315, %314 : vector<16x128xf32>
    %317 = arith.divf %315, %316 : vector<16x128xf32>
    %318 = vector.extract_strided_slice %305 {offsets = [0, 128], sizes = [16, 128], strides = [1, 1]} : vector<16x384xbf16> to vector<16x128xbf16>
    %319 = vector.extract_strided_slice %308 {offsets = [0, 128], sizes = [16, 128], strides = [1, 1]} : vector<16x384xf32> to vector<16x128xf32>
    %320 = arith.extf %318 : vector<16x128xbf16> to vector<16x128xf32>
    %321 = arith.addf %320, %319 : vector<16x128xf32>
    %322 = arith.negf %321 : vector<16x128xf32>
    %323 = math.exp %322 : vector<16x128xf32>
    %cst_95 = arith.constant 1.000000e+00 : f32
    %324 = vector.broadcast %cst_95 : f32 to vector<16x128xf32>
    %325 = arith.addf %324, %323 : vector<16x128xf32>
    %326 = arith.divf %324, %325 : vector<16x128xf32>
    %327 = vector.extract_strided_slice %305 {offsets = [0, 256], sizes = [16, 128], strides = [1, 1]} : vector<16x384xbf16> to vector<16x128xbf16>
    %328 = vector.extract_strided_slice %308 {offsets = [0, 256], sizes = [16, 128], strides = [1, 1]} : vector<16x384xf32> to vector<16x128xf32>
    %329 = vector.broadcast %5 : vector<1x128xf32> to vector<16x128xf32>
    %330 = arith.addf %328, %329 : vector<16x128xf32>
    %331 = arith.mulf %317, %330 : vector<16x128xf32>
    %332 = arith.extf %327 : vector<16x128xbf16> to vector<16x128xf32>
    %333 = arith.addf %332, %331 : vector<16x128xf32>
    %334 = math.tanh %333 : vector<16x128xf32>
    %335 = arith.subf %306, %334 : vector<16x128xf32>
    %336 = arith.mulf %326, %335 : vector<16x128xf32>
    %337 = arith.addf %334, %336 : vector<16x128xf32>
    %c0_96 = arith.constant 0 : index
    %c0_97 = arith.constant 0 : index
    %338 = vector.load %arg10[%c0_96, %c0_97] : memref<16x128xf32, #tpu.memory_space<vmem>>, vector<16x128xf32>
    tpu.vector_store %arg10[%c0_96, %c0_97], %337 {strides = array<i32>} : memref<16x128xf32, #tpu.memory_space<vmem>>, vector<16x128xf32>,
    %339 = arith.truncf %337 : vector<16x128xf32> to vector<16x128xbf16>
    %340 = arith.index_cast %c7_i32 : i32 to index
    %c0_98 = arith.constant 0 : index
    %c0_99 = arith.constant 0 : index
    %341 = vector.load %arg8[%340, %c0_98, %c0_99] : memref<8x16x128xbf16, #tpu.memory_space<vmem>>, vector<1x16x128xbf16>
    %342 = vector.shape_cast %341 : vector<1x16x128xbf16> to vector<16x128xbf16>
    %343 = vector.shape_cast %339 : vector<16x128xbf16> to vector<1x16x128xbf16>
    tpu.vector_store %arg8[%340, %c0_98, %c0_99], %343 {strides = array<i32>} : memref<8x16x128xbf16, #tpu.memory_space<vmem>>, vector<1x16x128xbf16>,
    %c8_i32 = arith.constant 8 : i32
    %c0_100 = arith.constant 0 : index
    %c0_101 = arith.constant 0 : index
    %344 = vector.load %arg10[%c0_100, %c0_101] : memref<16x128xf32, #tpu.memory_space<vmem>>, vector<16x128xf32>
    %c0_102 = arith.constant 0 : index
    %c0_103 = arith.constant 0 : index
    %c0_104 = arith.constant 0 : index
    %345 = vector.load %arg7[%c0_102, %c0_103, %c0_104] : memref<1x16x128xf32, #tpu.memory_space<vmem>>, vector<1x16x128xf32>
    %346 = vector.shape_cast %345 : vector<1x16x128xf32> to vector<16x128xf32>
    %347 = vector.shape_cast %344 : vector<16x128xf32> to vector<1x16x128xf32>
    tpu.vector_store %arg7[%c0_102, %c0_103, %c0_104], %347 {strides = array<i32>} : memref<1x16x128xf32, #tpu.memory_space<vmem>>, vector<1x16x128xf32>,
    return
  }
  func.func @transform_0(%arg0: i32, %arg1: i32) -> (i32, i32, i32) {
    %c0_i32 = arith.constant 0 : i32
    %c0_i32_0 = arith.constant 0 : i32
    %c0_i32_1 = arith.constant 0 : i32
    return %c0_i32, %arg0, %c0_i32_0 : i32, i32, i32
  }
  func.func @transform_1(%arg0: i32, %arg1: i32) -> (i32, i32, i32) {
    %c0_i32 = arith.constant 0 : i32
    %c0_i32_0 = arith.constant 0 : i32
    %c0_i32_1 = arith.constant 0 : i32
    return %arg1, %c0_i32, %c0_i32_0 : i32, i32, i32
  }
  func.func @transform_2(%arg0: i32, %arg1: i32) -> (i32, i32, i32) {
    %c0_i32 = arith.constant 0 : i32
    %c0_i32_0 = arith.constant 0 : i32
    %c0_i32_1 = arith.constant 0 : i32
    return %arg1, %c0_i32, %c0_i32_0 : i32, i32, i32
  }
  func.func @transform_3(%arg0: i32, %arg1: i32) -> (i32, i32, i32) {
    %c0_i32 = arith.constant 0 : i32
    %c0_i32_0 = arith.constant 0 : i32
    %c0_i32_1 = arith.constant 0 : i32
    %c0_i32_2 = arith.constant 0 : i32
    return %c0_i32, %c0_i32_0, %c0_i32_1 : i32, i32, i32
  }
  func.func @transform_4(%arg0: i32, %arg1: i32) -> (i32, i32, i32) {
    %c0_i32 = arith.constant 0 : i32
    %c0_i32_0 = arith.constant 0 : i32
    %c0_i32_1 = arith.constant 0 : i32
    %c0_i32_2 = arith.constant 0 : i32
    return %c0_i32, %c0_i32_0, %c0_i32_1 : i32, i32, i32
  }
  func.func @transform_5(%arg0: i32, %arg1: i32) -> (i32, i32, i32) {
    %c0_i32 = arith.constant 0 : i32
    %c0_i32_0 = arith.constant 0 : i32
    return %arg1, %arg0, %c0_i32 : i32, i32, i32
  }
}

</mosaic_0001>

<llo_original>
// kernel: tpu_custom_call.1
$region0: #{tpu_custom_call.1}
  #allocation0 [shape = 'u32[]', space=smem, size = 0x4, offset = 0x4, fixed_abs, tag = 'smem constant byte address 0x4 - core index']
  #allocation1 [shape = 'u32[144,128]{1,0:T(1,128)}', space=vmem, size = 0x12000, scoped, tag = 'internal scratch']
  #allocation2 [shape = 'bf16[8,16,128]{2,1,0:T(16,128)(2,1)}', space=vmem, size = 0x8000, scoped, tag = 'scratch operand']
  #allocation3 [shape = 'bf16[8,16,384]{2,1,0:T(16,128)(2,1)}', space=vmem, size = 0x18000, scoped, tag = 'scratch operand']
  #allocation4 [shape = 'f32[16,128]{1,0:T(8,128)}', space=vmem, size = 0x2000, scoped, tag = 'scratch operand']
  %s0 = inlined_call_operand.hbm [shape: bf16[8,16,128], index: 0, kind: input, shape index: {}]
  %s1 = inlined_call_operand.hbm [shape: bf16[2,128,384], index: 1, kind: input, shape index: {}]
  %s2 = inlined_call_operand.hbm [shape: bf16[2,128,384], index: 2, kind: input, shape index: {}]
  %s3 = inlined_call_operand.vmem [shape: f32[2,1,384], index: 3, kind: input, shape index: {}]
  %s4 = inlined_call_operand.vmem [shape: f32[2,1,128], index: 4, kind: input, shape index: {}]
  %s5 = inlined_call_operand.hbm [shape: f32[2,16,128], index: 5, kind: output, shape index: {}]
  %s6 = sld [smem:[#allocation0]]
  $region73: #{tpu_custom_call.1} parent=0
    _
  %s8 = ssub.s32 1, %s6
  %s9 = scalar_select 0, %s8, %s6
  $region1: #{tpu_custom_call.1} parent=0
    #allocation5 [shape = 'u8[32768]{0}', space=vmem, size = 0x8000, scoped, tag = 'input window, operand 0, single buffered']
    #allocation6 [shape = 's32[2]{0}', space=sflag, size = 0x8, scoped, tag = 'scoped memory for tpu_custom_call.1']
    #allocation7 [shape = 's32[2]{0}', space=sflag, size = 0x8, scoped, tag = 'scoped memory for tpu_custom_call.1']
    #allocation8 [shape = 'u8[196608]{0}', space=vmem, size = 0x30000, scoped, tag = 'input window, operand 1']
    #allocation9 [shape = 's32[2]{0}', space=sflag, size = 0x8, scoped, tag = 'scoped memory for tpu_custom_call.1']
    #allocation10 [shape = 'u8[196608]{0}', space=vmem, size = 0x30000, scoped, tag = 'input window, operand 2']
    #allocation11 [shape = 'u8[16384]{0}', space=vmem, size = 0x4000, scoped, tag = 'output window, operand 0']
    %10 = vsyncpa [#allocation6], 0
    %11 = vsyncpa [#allocation9], 0
    %s12 = scalar_lea.sflag [#allocation9], 1
    %13 = vsyncpa %s12, 0
    %14 = vsyncpa [#allocation7], 0
    %s15 = scalar_lea.sflag [#allocation7], 1
    %16 = vsyncpa %s15, 0
    loop: start=0, step=1, limit=4
    $region2: #{tpu_custom_call.1} parent=1 // loop_pre_header
      _
    $region3: #{tpu_custom_call.1} parent=1 // loop_header
      %s18 = sphi 0, %s22
      %p19 = scmp.ge.s32.totalorder %s18, 4
      %s25 = sphi 0, %s37
      %s26 = sphi 0, %s33
      %s27 = sphi 0, %s25
      %s28 = sphi 0, %s26
      %s29 = sphi 0, %s27
      %s30 = sphi 0, %s28
      %s40 = sphi 0, %s42
      %s43 = sphi 0, %s40
      %s44 = sphi 0, %s43
      %s60 = sphi 0, %s44
      %s66 = sphi 0, %s68
      %s69 = sphi 0, %s66
      %s70 = sphi 0, %s69
      %s86 = sphi 0, %s70
      %s92 = sphi 0, %s94
      %s95 = sphi 0, %s92
      %s96 = sphi 0, %s95
      %s112 = sphi 0, %s96
      %s116 = sphi 0, %s116
      %s118 = sphi 0, %s116
      %s119 = sphi 0, %s118
      %s133 = sphi 0, %s119
      %s137 = sphi 0, %s137
      %s139 = sphi 0, %s137
      %s140 = sphi 0, %s139
      %s154 = sphi 0, %s140
      %s162 = sphi 0, %s164
      %s165 = sphi 0, %s162
      %s166 = sphi 0, %s165
      %s182 = sphi 0, %s166
    $region4: #{tpu_custom_call.1} parent=1 // loop_header_branch
      %21 = sbr.rel (%p19) target = $region8
    $region5: #{tpu_custom_call.1} parent=1 // loop_body
      %s23 = ssub.s32 %s18, 1
      %s24 = ssub.s32 %s18, 2
      %s31 = sadd.s32 1, %s26
      %p32 = scmp.ge.s32.totalorder %s31, 2
      %s33 = scalar_select %p32, 0, %s31
      %s34 = sadd.s32 1, %s25
      %s35 = scalar_select %p32, %s34, %s25
      %p36 = scmp.ge.s32.totalorder %s35, 1
      %s37 = scalar_select %p36, 0, %s35
      %s38 = ssub.s32 %s25, %s37
      %p39 = scmp.eq.s32.totalorder %s38, 0
      %s41 = sadd.s32 %s40, 1
      %s42 = scalar_select %p39, %s40, %s41
      %p45 = pneg %p39
      %p46 = scmp.eq.s32.totalorder %s18, 1
      %p47 = por %p45, %p46
      %p48 = scmp.ne.s32.totalorder %s40, %s43
      %p49 = scmp.eq.s32.totalorder %s18, 0
      %p50 = por %p48, %p49
      %p51 = scmp.ne.s32.totalorder %s40, %s43
      %p52 = scmp.eq.s32.totalorder %s23, 1
      %p53 = por %p51, %p52
      %p54 = scmp.ne.s32.totalorder %s43, %s44
      %p55 = scmp.eq.s32.totalorder %s23, 0
      %p56 = por %p54, %p55
      %p57 = scmp.ne.s32.totalorder %s43, %s44
      %p58 = scmp.eq.s32.totalorder %s24, 1
      %p59 = por %p57, %p58
      %p61 = scmp.ne.s32.totalorder %s44, %s60
      %p62 = scmp.eq.s32.totalorder %s24, 0
      %p63 = por %p61, %p62
      %s64 = ssub.s32 %s26, %s33
      %p65 = scmp.eq.s32.totalorder %s64, 0
      %s67 = sadd.s32 %s66, 1
      %s68 = scalar_select %p65, %s66, %s67
      %p71 = pneg %p65
      %p72 = scmp.eq.s32.totalorder %s18, 1
      %p73 = por %p71, %p72
      %p74 = scmp.ne.s32.totalorder %s66, %s69
      %p75 = scmp.eq.s32.totalorder %s18, 0
      %p76 = por %p74, %p75
      %p77 = scmp.ne.s32.totalorder %s66, %s69
      %p78 = scmp.eq.s32.totalorder %s23, 1
      %p79 = por %p77, %p78
      %p80 = scmp.ne.s32.totalorder %s69, %s70
      %p81 = scmp.eq.s32.totalorder %s23, 0
      %p82 = por %p80, %p81
      %p83 = scmp.ne.s32.totalorder %s69, %s70
      %p84 = scmp.eq.s32.totalorder %s24, 1
      %p85 = por %p83, %p84
      %p87 = scmp.ne.s32.totalorder %s70, %s86
      %p88 = scmp.eq.s32.totalorder %s24, 0
      %p89 = por %p87, %p88
      %s90 = ssub.s32 %s26, %s33
      %p91 = scmp.eq.s32.totalorder %s90, 0
      %s93 = sadd.s32 %s92, 1
      %s94 = scalar_select %p91, %s92, %s93
      %p97 = pneg %p91
      %p98 = scmp.eq.s32.totalorder %s18, 1
      %p99 = por %p97, %p98
      %p100 = scmp.ne.s32.totalorder %s92, %s95
      %p101 = scmp.eq.s32.totalorder %s18, 0
      %p102 = por %p100, %p101
      %p103 = scmp.ne.s32.totalorder %s92, %s95
      %p104 = scmp.eq.s32.totalorder %s23, 1
      %p105 = por %p103, %p104
      %p106 = scmp.ne.s32.totalorder %s95, %s96
      %p107 = scmp.eq.s32.totalorder %s23, 0
      %p108 = por %p106, %p107
      %p109 = scmp.ne.s32.totalorder %s95, %s96
      %p110 = scmp.eq.s32.totalorder %s24, 1
      %p111 = por %p109, %p110
      %p113 = scmp.ne.s32.totalorder %s96, %s112
      %p114 = scmp.eq.s32.totalorder %s24, 0
      %p115 = por %p113, %p114
      %s117 = sadd.s32 %s116, 1
      %p120 = scmp.eq.s32.totalorder %s18, 1
      %p121 = scmp.ne.s32.totalorder %s116, %s118
      %p122 = scmp.eq.s32.totalorder %s18, 0
      %p123 = por %p121, %p122
      %p124 = scmp.ne.s32.totalorder %s116, %s118
      %p125 = scmp.eq.s32.totalorder %s23, 1
      %p126 = por %p124, %p125
      %p127 = scmp.ne.s32.totalorder %s118, %s119
      %p128 = scmp.eq.s32.totalorder %s23, 0
      %p129 = por %p127, %p128
      %p130 = scmp.ne.s32.totalorder %s118, %s119
      %p131 = scmp.eq.s32.totalorder %s24, 1
      %p132 = por %p130, %p131
      %p134 = scmp.ne.s32.totalorder %s119, %s133
      %p135 = scmp.eq.s32.totalorder %s24, 0
      %p136 = por %p134, %p135
      %s138 = sadd.s32 %s137, 1
      %p141 = scmp.eq.s32.totalorder %s18, 1
      %p142 = scmp.ne.s32.totalorder %s137, %s139
      %p143 = scmp.eq.s32.totalorder %s18, 0
      %p144 = por %p142, %p143
      %p145 = scmp.ne.s32.totalorder %s137, %s139
      %p146 = scmp.eq.s32.totalorder %s23, 1
      %p147 = por %p145, %p146
      %p148 = scmp.ne.s32.totalorder %s139, %s140
      %p149 = scmp.eq.s32.totalorder %s23, 0
      %p150 = por %p148, %p149
      %p151 = scmp.ne.s32.totalorder %s139, %s140
      %p152 = scmp.eq.s32.totalorder %s24, 1
      %p153 = por %p151, %p152
      %p155 = scmp.ne.s32.totalorder %s140, %s154
      %p156 = scmp.eq.s32.totalorder %s24, 0
      %p157 = por %p155, %p156
      %s158 = ssub.s32 %s26, %s33
      %s159 = ssub.s32 %s25, %s37
      %s160 = sor.u32 %s158, %s159
      %p161 = scmp.eq.s32.totalorder %s160, 0
      %s163 = sadd.s32 %s162, 1
      %s164 = scalar_select %p161, %s162, %s163
      %p167 = pneg %p161
      %p168 = scmp.eq.s32.totalorder %s18, 1
      %p169 = por %p167, %p168
      %p170 = scmp.ne.s32.totalorder %s162, %s165
      %p171 = scmp.eq.s32.totalorder %s18, 0
      %p172 = por %p170, %p171
      %p173 = scmp.ne.s32.totalorder %s162, %s165
      %p174 = scmp.eq.s32.totalorder %s23, 1
      %p175 = por %p173, %p174
      %p176 = scmp.ne.s32.totalorder %s165, %s166
      %p177 = scmp.eq.s32.totalorder %s23, 0
      %p178 = por %p176, %p177
      %p179 = scmp.ne.s32.totalorder %s165, %s166
      %p180 = scmp.eq.s32.totalorder %s24, 1
      %p181 = por %p179, %p180
      %p183 = scmp.ne.s32.totalorder %s166, %s182
      %p184 = scmp.eq.s32.totalorder %s24, 0
      %p185 = por %p183, %p184
      %p186 = scmp.le.s32.totalorder 1, %s18
      %p187 = scmp.lt.s32.totalorder %s18, 3
      %p188 = pnand %p186, %p187
      %p189 = pneg %p188
      // Predicated region
      $region9: #{tpu_custom_call.1} parent=5 // pred_check
        _
      $region10: #{tpu_custom_call.1} parent=5 // pred_check_branch
        %191 = sbr.rel (%p188) target = $region12
      $region11: #{tpu_custom_call.1} parent=5 // pred_region
        %s192 = ssub.s32 %s18, 1
        // Predicated region
        $region13: #{tpu_custom_call.1} parent=11 // pred_check
          %p193 = pneg %p56
        $region14: #{tpu_custom_call.1} parent=11 // pred_check_branch
          %195 = sbr.rel (%p193) target = $region16
        $region15: #{tpu_custom_call.1} parent=11 // pred_region
          %s196 = smul.u32 2, %s27
          %s198 = ssub.s32 1024, 1024
          %199 = vsyncadd [#allocation6], %s198
          %s200 = smul.addr %s196, 64
          %s201 = scalar_lea.hbm %s0, %s200
          %s202 = sshll.u32 [#allocation5], 4
          %s203 = int_to_ptr.vmem [resolvable:$true] %s202
          %208 = dma.hbm_to_vmem [thread:$0]  %s201, 1024, %s203, [#allocation6], 64, 64, 4
        $region16: #{tpu_custom_call.1} parent=11 // pred_fallthru
          _
        // Predicated region
        $region17: #{tpu_custom_call.1} parent=11 // pred_check
          %p209 = pneg %p129
        $region18: #{tpu_custom_call.1} parent=11 // pred_check_branch
          %211 = sbr.rel (%p209) target = $region20
        $region19: #{tpu_custom_call.1} parent=11 // pred_region
          _
        $region20: #{tpu_custom_call.1} parent=11 // pred_fallthru
          _
        // Predicated region
        $region21: #{tpu_custom_call.1} parent=11 // pred_check
          %p212 = pneg %p150
        $region22: #{tpu_custom_call.1} parent=11 // pred_check_branch
          %214 = sbr.rel (%p212) target = $region24
        $region23: #{tpu_custom_call.1} parent=11 // pred_region
          _
        $region24: #{tpu_custom_call.1} parent=11 // pred_fallthru
          _
      $region12: #{tpu_custom_call.1} parent=5 // pred_fallthru
        _
      %p215 = scmp.lt.s32.totalorder %s18, 2
      // Predicated region
      $region25: #{tpu_custom_call.1} parent=5 // pred_check
        %p216 = pneg %p215
      $region26: #{tpu_custom_call.1} parent=5 // pred_check_branch
        %218 = sbr.rel (%p216) target = $region28
      $region27: #{tpu_custom_call.1} parent=5 // pred_region
        // Predicated region
        $region29: #{tpu_custom_call.1} parent=27 // pred_check
          %p219 = pneg %p76
        $region30: #{tpu_custom_call.1} parent=27 // pred_check_branch
          %221 = sbr.rel (%p219) target = $region32
        $region31: #{tpu_custom_call.1} parent=27 // pred_region
          %s222 = sand.u32 %s18, 1
          %s223 = scalar_lea.sflag [#allocation9], %s222
          %s224 = sand.u32 %s66, 1
          %s225 = smul.addr %s224, 192
          %s226 = scalar_lea.vmem [#allocation8], %s225
          %s228 = ssub.s32 3072, 3072
          %229 = vsyncadd %s223, %s228
          %s230 = smul.addr %s26, 48
          %s231 = smul.addr %s230, 64
          %s232 = scalar_lea.hbm %s1, %s231
          %s233 = sshll.u32 %s226, 4
          %s234 = int_to_ptr.vmem [resolvable:$true] %s233
          %239 = dma.hbm_to_vmem [thread:$0]  %s232, 3072, %s234, %s223, 192, 192, 12
        $region32: #{tpu_custom_call.1} parent=27 // pred_fallthru
          _
        // Predicated region
        $region33: #{tpu_custom_call.1} parent=27 // pred_check
          %p240 = pneg %p102
        $region34: #{tpu_custom_call.1} parent=27 // pred_check_branch
          %242 = sbr.rel (%p240) target = $region36
        $region35: #{tpu_custom_call.1} parent=27 // pred_region
          %s243 = sand.u32 %s18, 1
          %s244 = scalar_lea.sflag [#allocation9], %s243
          %s245 = sand.u32 %s92, 1
          %s246 = smul.addr %s245, 192
          %s247 = scalar_lea.vmem [#allocation10], %s246
          %s249 = ssub.s32 3072, 3072
          %250 = vsyncadd %s244, %s249
          %s251 = smul.addr %s26, 48
          %s252 = smul.addr %s251, 64
          %s253 = scalar_lea.hbm %s2, %s252
          %s254 = sshll.u32 %s247, 4
          %s255 = int_to_ptr.vmem [resolvable:$true] %s254
          %260 = dma.hbm_to_vmem [thread:$0]  %s253, 3072, %s255, %s244, 192, 192, 12
        $region36: #{tpu_custom_call.1} parent=27 // pred_fallthru
          _
      $region28: #{tpu_custom_call.1} parent=5 // pred_fallthru
        _
      %p261 = scmp.le.s32.totalorder 1, %s18
      %p262 = scmp.lt.s32.totalorder %s18, 3
      %p263 = pnand %p261, %p262
      %p264 = pneg %p263
      // Predicated region
      $region37: #{tpu_custom_call.1} parent=5 // pred_check
        _
      $region38: #{tpu_custom_call.1} parent=5 // pred_check_branch
        %266 = sbr.rel (%p263) target = $region40
      $region39: #{tpu_custom_call.1} parent=5 // pred_region
        %s267 = ssub.s32 %s18, 1
        // Predicated region
        $region41: #{tpu_custom_call.1} parent=39 // pred_check
          %p268 = pneg %p56
        $region42: #{tpu_custom_call.1} parent=39 // pred_check_branch
          %270 = sbr.rel (%p268) target = $region44
        $region43: #{tpu_custom_call.1} parent=39 // pred_region
          %271 = dma.done [#allocation6], 1024
        $region44: #{tpu_custom_call.1} parent=39 // pred_fallthru
          _
        %s272 = sand.u32 %s23, 1
        %s273 = scalar_lea.sflag [#allocation9], %s272
        %s274 = sand.u32 %s69, 1
        %s275 = smul.addr %s274, 192
        %s276 = scalar_lea.vmem [#allocation8], %s275
        // Predicated region
        $region45: #{tpu_custom_call.1} parent=39 // pred_check
          %p277 = pneg %p82
        $region46: #{tpu_custom_call.1} parent=39 // pred_check_branch
          %279 = sbr.rel (%p277) target = $region48
        $region47: #{tpu_custom_call.1} parent=39 // pred_region
          %280 = dma.done %s273, 3072
        $region48: #{tpu_custom_call.1} parent=39 // pred_fallthru
          _
        %s281 = sand.u32 %s23, 1
        %s282 = scalar_lea.sflag [#allocation9], %s281
        %s283 = sand.u32 %s95, 1
        %s284 = smul.addr %s283, 192
        %s285 = scalar_lea.vmem [#allocation10], %s284
        // Predicated region
        $region49: #{tpu_custom_call.1} parent=39 // pred_check
          %p286 = pneg %p108
        $region50: #{tpu_custom_call.1} parent=39 // pred_check_branch
          %288 = sbr.rel (%p286) target = $region52
        $region51: #{tpu_custom_call.1} parent=39 // pred_region
          %289 = dma.done %s282, 3072
        $region52: #{tpu_custom_call.1} parent=39 // pred_fallthru
          _
        %p290 = pneg %p56
        %p291 = pneg %p53
        %s292 = sand.u32 %s23, 1
        %s293 = scalar_lea.sflag [#allocation9], %s292
        %s294 = sand.u32 %s69, 1
        %s295 = smul.addr %s294, 192
        %s296 = scalar_lea.vmem [#allocation8], %s295
        %p297 = pneg %p82
        %p298 = pneg %p79
        %s299 = sand.u32 %s23, 1
        %s300 = scalar_lea.sflag [#allocation9], %s299
        %s301 = sand.u32 %s95, 1
        %s302 = smul.addr %s301, 192
        %s303 = scalar_lea.vmem [#allocation10], %s302
        %p304 = pneg %p108
        %p305 = pneg %p105
        %p306 = pneg %p129
        %p307 = pneg %p126
        %p308 = pneg %p150
        %p309 = pneg %p147
        %p310 = pneg %p178
        %p311 = pneg %p175
        %s312 = sand.u32 %s165, 1
        %s313 = scalar_lea.sflag [#allocation7], %s312
        %s314 = sand.u32 %s165, 1
        %s315 = smul.addr %s314, 16
        %s316 = scalar_lea.vmem [#allocation11], %s315
        %s317 = smul.u32 2, %s27
        %s318 = smul.u32 2, %s27
        %s320 = smul.u32 %s28, 3
        %s321 = scalar_lea.vmem %s3, %s320
        %v322 = vld [vmem:[%s321] sm:$0x7]
        %s323 = scalar_lea.vmem %s4, %s28
        %v324 = vld [vmem:[%s323] sm:$0x1]
        %v325 = vld [vmem:[%s285] sm:$0xff]
        %v326 = vld [vmem:[%s285 + $0x8] sm:$0xf]
        %v327 = vld [vmem:[%s285 + $0xc] sm:$0xff]
        %v328 = vld [vmem:[%s285 + $0x14] sm:$0xf]
        %v329 = vld [vmem:[%s285 + $0x18] sm:$0xff]
        %v330 = vld [vmem:[%s285 + $0x20] sm:$0xf]
        %v331 = vld [vmem:[%s285 + $0x24] sm:$0xff]
        %v332 = vld [vmem:[%s285 + $0x2c] sm:$0xf]
        %v333 = vld [vmem:[%s285 + $0x30] sm:$0xff]
        %v334 = vld [vmem:[%s285 + $0x38] sm:$0xf]
        %v335 = vld [vmem:[%s285 + $0x3c] sm:$0xff]
        %v336 = vld [vmem:[%s285 + $0x44] sm:$0xf]
        %v337 = vld [vmem:[%s285 + $0x48] sm:$0xff]
        %v338 = vld [vmem:[%s285 + $0x50] sm:$0xf]
        %v339 = vld [vmem:[%s285 + $0x54] sm:$0xff]
        %v340 = vld [vmem:[%s285 + $0x5c] sm:$0xf]
        %v341 = vld [vmem:[%s285 + $0x60] sm:$0xff]
        %v342 = vld [vmem:[%s285 + $0x68] sm:$0xf]
        %v343 = vld [vmem:[%s285 + $0x6c] sm:$0xff]
        %v344 = vld [vmem:[%s285 + $0x74] sm:$0xf]
        %v345 = vld [vmem:[%s285 + $0x78] sm:$0xff]
        %v346 = vld [vmem:[%s285 + $0x80] sm:$0xf]
        %v347 = vld [vmem:[%s285 + $0x84] sm:$0xff]
        %v348 = vld [vmem:[%s285 + $0x8c] sm:$0xf]
        %v349 = vld [vmem:[%s285 + $0x90] sm:$0xff]
        %v350 = vld [vmem:[%s285 + $0x98] sm:$0xf]
        %v351 = vld [vmem:[%s285 + $0x9c] sm:$0xff]
        %v352 = vld [vmem:[%s285 + $0xa4] sm:$0xf]
        %v353 = vld [vmem:[%s285 + $0xa8] sm:$0xff]
        %v354 = vld [vmem:[%s285 + $0xb0] sm:$0xf]
        %v355 = vld [vmem:[%s285 + $0xb4] sm:$0xff]
        %v356 = vld [vmem:[%s285 + $0xbc] sm:$0xf]
        %p357 = scmp.eq.s32.totalorder %s28, 0
        // Predicated region
        $region53: #{tpu_custom_call.1} parent=39 // pred_check
          %p358 = pneg %p357
        $region54: #{tpu_custom_call.1} parent=39 // pred_check_branch
          %360 = sbr.rel (%p358) target = $region56
        $region55: #{tpu_custom_call.1} parent=39 // pred_region
          %v361 = vld [vmem:[#allocation5] sm:$0xf]
          %v362 = vld [vmem:[#allocation5 + $0x4] sm:$0xf]
          %v363 = vld [vmem:[#allocation5 + $0x8] sm:$0xf]
          %v364 = vld [vmem:[#allocation5 + $0xc] sm:$0xf]
          %v365 = vld [vmem:[#allocation5 + $0x10] sm:$0xf]
          %v366 = vld [vmem:[#allocation5 + $0x14] sm:$0xf]
          %v367 = vld [vmem:[#allocation5 + $0x18] sm:$0xf]
          %v368 = vld [vmem:[#allocation5 + $0x1c] sm:$0xf]
          %v369 = vld [vmem:[#allocation5 + $0x20] sm:$0xf]
          %v370 = vld [vmem:[#allocation5 + $0x24] sm:$0xf]
          %v371 = vld [vmem:[#allocation5 + $0x28] sm:$0xf]
          %v372 = vld [vmem:[#allocation5 + $0x2c] sm:$0xf]
          %v373 = vld [vmem:[#allocation5 + $0x30] sm:$0xf]
          %v374 = vld [vmem:[#allocation5 + $0x34] sm:$0xf]
          %v375 = vld [vmem:[#allocation5 + $0x38] sm:$0xf]
          %v376 = vld [vmem:[#allocation5 + $0x3c] sm:$0xf]
          %v377 = vld [vmem:[%s276] sm:$0xff]
          %v378 = vld [vmem:[%s276 + $0x8] sm:$0xf]
          %v379 = vld [vmem:[%s276 + $0xc] sm:$0xff]
          %v380 = vld [vmem:[%s276 + $0x14] sm:$0xf]
          %v381 = vld [vmem:[%s276 + $0x18] sm:$0xff]
          %v382 = vld [vmem:[%s276 + $0x20] sm:$0xf]
          %v383 = vld [vmem:[%s276 + $0x24] sm:$0xff]
          %v384 = vld [vmem:[%s276 + $0x2c] sm:$0xf]
          %v385 = vld [vmem:[%s276 + $0x30] sm:$0xff]
          %v386 = vld [vmem:[%s276 + $0x38] sm:$0xf]
          %v387 = vld [vmem:[%s276 + $0x3c] sm:$0xff]
          %v388 = vld [vmem:[%s276 + $0x44] sm:$0xf]
          %v389 = vld [vmem:[%s276 + $0x48] sm:$0xff]
          %v390 = vld [vmem:[%s276 + $0x50] sm:$0xf]
          %v391 = vld [vmem:[%s276 + $0x54] sm:$0xff]
          %v392 = vld [vmem:[%s276 + $0x5c] sm:$0xf]
          %v393 = vld [vmem:[%s276 + $0x60] sm:$0xff]
          %v394 = vld [vmem:[%s276 + $0x68] sm:$0xf]
          %v395 = vld [vmem:[%s276 + $0x6c] sm:$0xff]
          %v396 = vld [vmem:[%s276 + $0x74] sm:$0xf]
          %v397 = vld [vmem:[%s276 + $0x78] sm:$0xff]
          %v398 = vld [vmem:[%s276 + $0x80] sm:$0xf]
          %v399 = vld [vmem:[%s276 + $0x84] sm:$0xff]
          %v400 = vld [vmem:[%s276 + $0x8c] sm:$0xf]
          %v401 = vld [vmem:[%s276 + $0x90] sm:$0xff]
          %v402 = vld [vmem:[%s276 + $0x98] sm:$0xf]
          %v403 = vld [vmem:[%s276 + $0x9c] sm:$0xff]
          %v404 = vld [vmem:[%s276 + $0xa4] sm:$0xf]
          %v405 = vld [vmem:[%s276 + $0xa8] sm:$0xff]
          %v406 = vld [vmem:[%s276 + $0xb0] sm:$0xf]
          %v407 = vld [vmem:[%s276 + $0xb4] sm:$0xff]
          %v408 = vld [vmem:[%s276 + $0xbc] sm:$0xf]
          %v410 = vlaneseq
          %v411 = vshrl.u32 %v410, 7
          %v412 = vsub.s32 0, %v411
          %v413 = vrot.slane %v322, %v412
          %v414 = vlaneseq
          %v415 = vshrl.u32 %v414, 7
          %v416 = vsub.s32 1, %v415
          %v417 = vrot.slane %v322, %v416
          %v418 = vlaneseq
          %v419 = vshrl.u32 %v418, 7
          %v420 = vsub.s32 2, %v419
          %v421 = vrot.slane %v322, %v420
          %v441 = vunpack.c.l.b16 %v361
          %v442 = vunpack.c.l.b16 %v362
          %v443 = vunpack.c.l.b16 %v363
          %v444 = vunpack.c.l.b16 %v364
          %v445 = vunpack.c.l.b16 %v365
          %v446 = vunpack.c.l.b16 %v366
          %v447 = vunpack.c.l.b16 %v367
          %v448 = vunpack.c.l.b16 %v368
          %v449 = vunpack.c.l.b16 %v369
          %v450 = vunpack.c.l.b16 %v370
          %v451 = vunpack.c.l.b16 %v371
          %v452 = vunpack.c.l.b16 %v372
          %v453 = vunpack.c.l.b16 %v373
          %v454 = vunpack.c.l.b16 %v374
          %v455 = vunpack.c.l.b16 %v375
          %v456 = vunpack.c.l.b16 %v376
          %v457 = vpack.c.b16 %v442, %v441
          %v458 = vpack.c.b16 %v444, %v443
          %v459 = vpack.c.b16 %v446, %v445
          %v460 = vpack.c.b16 %v448, %v447
          %v461 = vpack.c.b16 %v450, %v449
          %v462 = vpack.c.b16 %v452, %v451
          %v463 = vpack.c.b16 %v454, %v453
          %v464 = vpack.c.b16 %v456, %v455
          %v505 = vunpack.c.l.b16 %v377
          %v506 = vunpack.c.h.b16 %v377
          %v507 = vunpack.c.l.b16 %v378
          %v508 = vunpack.c.l.b16 %v379
          %v509 = vunpack.c.h.b16 %v379
          %v510 = vunpack.c.l.b16 %v380
          %v511 = vunpack.c.l.b16 %v381
          %v512 = vunpack.c.h.b16 %v381
          %v513 = vunpack.c.l.b16 %v382
          %v514 = vunpack.c.l.b16 %v383
          %v515 = vunpack.c.h.b16 %v383
          %v516 = vunpack.c.l.b16 %v384
          %v517 = vunpack.c.l.b16 %v385
          %v518 = vunpack.c.h.b16 %v385
          %v519 = vunpack.c.l.b16 %v386
          %v520 = vunpack.c.l.b16 %v387
          %v521 = vunpack.c.h.b16 %v387
          %v522 = vunpack.c.l.b16 %v388
          %v523 = vunpack.c.l.b16 %v389
          %v524 = vunpack.c.h.b16 %v389
          %v525 = vunpack.c.l.b16 %v390
          %v526 = vunpack.c.l.b16 %v391
          %v527 = vunpack.c.h.b16 %v391
          %v528 = vunpack.c.l.b16 %v392
          %v529 = vunpack.c.l.b16 %v393
          %v530 = vunpack.c.h.b16 %v393
          %v531 = vunpack.c.l.b16 %v394
          %v532 = vunpack.c.l.b16 %v395
          %v533 = vunpack.c.h.b16 %v395
          %v534 = vunpack.c.l.b16 %v396
          %v535 = vunpack.c.l.b16 %v397
          %v536 = vunpack.c.h.b16 %v397
          %v537 = vunpack.c.l.b16 %v398
          %v538 = vunpack.c.l.b16 %v399
          %v539 = vunpack.c.h.b16 %v399
          %v540 = vunpack.c.l.b16 %v400
          %v541 = vunpack.c.l.b16 %v401
          %v542 = vunpack.c.h.b16 %v401
          %v543 = vunpack.c.l.b16 %v402
          %v544 = vunpack.c.l.b16 %v403
          %v545 = vunpack.c.h.b16 %v403
          %v546 = vunpack.c.l.b16 %v404
          %v547 = vunpack.c.l.b16 %v405
          %v548 = vunpack.c.h.b16 %v405
          %v549 = vunpack.c.l.b16 %v406
          %v550 = vunpack.c.l.b16 %v407
          %v551 = vunpack.c.h.b16 %v407
          %v552 = vunpack.c.l.b16 %v408
          %v553 = vpack.c.b16 %v508, %v505
          %v554 = vpack.c.b16 %v509, %v506
          %v555 = vpack.c.b16 %v510, %v507
          %v556 = vpack.c.b16 %v514, %v511
          %v557 = vpack.c.b16 %v515, %v512
          %v558 = vpack.c.b16 %v516, %v513
          %v559 = vpack.c.b16 %v520, %v517
          %v560 = vpack.c.b16 %v521, %v518
          %v561 = vpack.c.b16 %v522, %v519
          %v562 = vpack.c.b16 %v526, %v523
          %v563 = vpack.c.b16 %v527, %v524
          %v564 = vpack.c.b16 %v528, %v525
          %v565 = vpack.c.b16 %v532, %v529
          %v566 = vpack.c.b16 %v533, %v530
          %v567 = vpack.c.b16 %v534, %v531
          %v568 = vpack.c.b16 %v538, %v535
          %v569 = vpack.c.b16 %v539, %v536
          %v570 = vpack.c.b16 %v540, %v537
          %v571 = vpack.c.b16 %v544, %v541
          %v572 = vpack.c.b16 %v545, %v542
          %v573 = vpack.c.b16 %v546, %v543
          %v574 = vpack.c.b16 %v550, %v547
          %v575 = vpack.c.b16 %v551, %v548
          %v576 = vpack.c.b16 %v552, %v549
          %601 = vmatprep.subr.bf16.mxu0 %v554
          %602 = vmatpush1.bf16.msra.mxu0 %v553
          %603 = vmatprep.subr.bf16.mxu0 %v557
          %604 = vmatpush1.bf16.msra.mxu0 %v556
          %605 = vmatprep.subr.bf16.mxu0 %v560
          %606 = vmatpush1.bf16.msra.mxu0 %v559
          %607 = vmatprep.subr.bf16.mxu0 %v563
          %608 = vmatpush1.bf16.msra.mxu0 %v562
          %609 = vmatprep.subr.bf16.mxu0 %v566
          %610 = vmatpush1.bf16.msra.mxu0 %v565
          %611 = vmatprep.subr.bf16.mxu0 %v569
          %612 = vmatpush1.bf16.msra.mxu0 %v568
          %613 = vmatprep.subr.bf16.mxu0 %v572
          %614 = vmatpush1.bf16.msra.mxu0 %v571
          %615 = vmatprep.subr.bf16.mxu0 %v575
          %616 = vmatpush1.bf16.msra.mxu0 %v574
          %617 = vmatprep.subr.bf16.mxu0 0
          %618 = vmatpush1.bf16.msra.mxu0 0
          %619 = vmatprep.subr.bf16.mxu0 0
          %620 = vmatpush1.bf16.msra.mxu0 0
          %621 = vmatprep.subr.bf16.mxu0 0
          %622 = vmatpush1.bf16.msra.mxu0 0
          %623 = vmatprep.subr.bf16.mxu0 0
          %624 = vmatpush1.bf16.msra.mxu0 0
          %625 = vmatprep.subr.bf16.mxu0 0
          %626 = vmatpush1.bf16.msra.mxu0 0
          %627 = vmatprep.subr.bf16.mxu0 0
          %628 = vmatpush1.bf16.msra.mxu0 0
          %629 = vmatprep.subr.bf16.mxu0 0
          %630 = vmatpush1.bf16.msra.mxu0 0
          %631 = vmatprep.subr.bf16.mxu0 0
          %632 = vmatpush1.bf16.msra.mxu0 0
          %633 = vmatprep.mubr.bf16.mxu0 0
          %634 = vmatmul.mubr.bf16.gmra.mrb[0].mxu0 %v457
          %v635 = vpop.f32.mrb[0].mxu0
          %v636 = vadd.f32 %v413, %v635
          %v637 = vpop.f32.mrb[0].mxu0
          %v638 = vadd.f32 %v417, %v637
          %v639 = vpop.f32.mrb[0].mxu0
          %v640 = vadd.f32 %v413, %v639
          %v641 = vpop.f32.mrb[0].mxu0
          %v642 = vadd.f32 %v417, %v641
          %643 = vmatprep.mubr.bf16.mxu0 0
          %644 = vmatmul.mubr.bf16.gmra.mrb[0].mxu0 %v458
          %v645 = vpop.f32.mrb[0].mxu0
          %v646 = vadd.f32 %v413, %v645
          %v647 = vpop.f32.mrb[0].mxu0
          %v648 = vadd.f32 %v417, %v647
          %v649 = vpop.f32.mrb[0].mxu0
          %v650 = vadd.f32 %v413, %v649
          %v651 = vpop.f32.mrb[0].mxu0
          %v652 = vadd.f32 %v417, %v651
          %653 = vmatprep.mubr.bf16.mxu0 0
          %654 = vmatmul.mubr.bf16.gmra.mrb[0].mxu0 %v459
          %v655 = vpop.f32.mrb[0].mxu0
          %v656 = vadd.f32 %v413, %v655
          %v657 = vpop.f32.mrb[0].mxu0
          %v658 = vadd.f32 %v417, %v657
          %v659 = vpop.f32.mrb[0].mxu0
          %v660 = vadd.f32 %v413, %v659
          %v661 = vpop.f32.mrb[0].mxu0
          %v662 = vadd.f32 %v417, %v661
          %663 = vmatprep.mubr.bf16.mxu0 0
          %664 = vmatmul.mubr.bf16.gmra.mrb[0].mxu0 %v460
          %v665 = vpop.f32.mrb[0].mxu0
          %v666 = vadd.f32 %v413, %v665
          %v667 = vpop.f32.mrb[0].mxu0
          %v668 = vadd.f32 %v417, %v667
          %v669 = vpop.f32.mrb[0].mxu0
          %v670 = vadd.f32 %v413, %v669
          %v671 = vpop.f32.mrb[0].mxu0
          %v672 = vadd.f32 %v417, %v671
          %673 = vmatprep.mubr.bf16.mxu0 0
          %674 = vmatmul.mubr.bf16.gmra.mrb[0].mxu0 %v461
          %v675 = vpop.f32.mrb[0].mxu0
          %v676 = vadd.f32 %v413, %v675
          %v677 = vpop.f32.mrb[0].mxu0
          %v678 = vadd.f32 %v417, %v677
          %v679 = vpop.f32.mrb[0].mxu0
          %v680 = vadd.f32 %v413, %v679
          %v681 = vpop.f32.mrb[0].mxu0
          %v682 = vadd.f32 %v417, %v681
          %683 = vmatprep.mubr.bf16.mxu0 0
          %684 = vmatmul.mubr.bf16.gmra.mrb[0].mxu0 %v462
          %v685 = vpop.f32.mrb[0].mxu0
          %v686 = vadd.f32 %v413, %v685
          %v687 = vpop.f32.mrb[0].mxu0
          %v688 = vadd.f32 %v417, %v687
          %v689 = vpop.f32.mrb[0].mxu0
          %v690 = vadd.f32 %v413, %v689
          %v691 = vpop.f32.mrb[0].mxu0
          %v692 = vadd.f32 %v417, %v691
          %693 = vmatprep.mubr.bf16.mxu0 0
          %694 = vmatmul.mubr.bf16.gmra.mrb[0].mxu0 %v463
          %v695 = vpop.f32.mrb[0].mxu0
          %v696 = vadd.f32 %v413, %v695
          %v697 = vpop.f32.mrb[0].mxu0
          %v698 = vadd.f32 %v417, %v697
          %v699 = vpop.f32.mrb[0].mxu0
          %v700 = vadd.f32 %v413, %v699
          %v701 = vpop.f32.mrb[0].mxu0
          %v702 = vadd.f32 %v417, %v701
          %703 = vmatprep.mubr.bf16.mxu0 0
          %704 = vmatmul.mubr.bf16.gmra.mrb[0].mxu0 %v464
          %v705 = vpop.f32.mrb[0].mxu0
          %v706 = vadd.f32 %v413, %v705
          %v707 = vpop.f32.mrb[0].mxu0
          %v708 = vadd.f32 %v417, %v707
          %v709 = vpop.f32.mrb[0].mxu0
          %v710 = vadd.f32 %v413, %v709
          %v711 = vpop.f32.mrb[0].mxu0
          %v712 = vadd.f32 %v417, %v711
          %713 = vdwg.mxu0
          %714 = vmatprep.subr.bf16.mxu0 0
          %715 = vmatpush1.bf16.msra.mxu0 %v555
          %716 = vmatprep.subr.bf16.mxu0 0
          %717 = vmatpush1.bf16.msra.mxu0 %v558
          %718 = vmatprep.subr.bf16.mxu0 0
          %719 = vmatpush1.bf16.msra.mxu0 %v561
          %720 = vmatprep.subr.bf16.mxu0 0
          %721 = vmatpush1.bf16.msra.mxu0 %v564
          %722 = vmatprep.subr.bf16.mxu0 0
          %723 = vmatpush1.bf16.msra.mxu0 %v567
          %724 = vmatprep.subr.bf16.mxu0 0
          %725 = vmatpush1.bf16.msra.mxu0 %v570
          %726 = vmatprep.subr.bf16.mxu0 0
          %727 = vmatpush1.bf16.msra.mxu0 %v573
          %728 = vmatprep.subr.bf16.mxu0 0
          %729 = vmatpush1.bf16.msra.mxu0 %v576
          %730 = vmatprep.subr.bf16.mxu0 0
          %731 = vmatpush1.bf16.msra.mxu0 0
          %732 = vmatprep.subr.bf16.mxu0 0
          %733 = vmatpush1.bf16.msra.mxu0 0
          %734 = vmatprep.subr.bf16.mxu0 0
          %735 = vmatpush1.bf16.msra.mxu0 0
          %736 = vmatprep.subr.bf16.mxu0 0
          %737 = vmatpush1.bf16.msra.mxu0 0
          %738 = vmatprep.subr.bf16.mxu0 0
          %739 = vmatpush1.bf16.msra.mxu0 0
          %740 = vmatprep.subr.bf16.mxu0 0
          %741 = vmatpush1.bf16.msra.mxu0 0
          %742 = vmatprep.subr.bf16.mxu0 0
          %743 = vmatpush1.bf16.msra.mxu0 0
          %744 = vmatprep.subr.bf16.mxu0 0
          %745 = vmatpush1.bf16.msra.mxu0 0
          %746 = vmatprep.mubr.bf16.mxu0 0
          %747 = vmatmul.mubr.bf16.gmra.mrb[0].mxu0 %v457
          %v748 = vpop.f32.mrb[0].mxu0
          %v749 = vadd.f32 %v421, %v748
          %v750 = vpop.f32.mrb[0].mxu0
          %v751 = vpop.f32.mrb[0].mxu0
          %v752 = vadd.f32 %v421, %v751
          %v753 = vpop.f32.mrb[0].mxu0
          %754 = vmatprep.mubr.bf16.mxu0 0
          %755 = vmatmul.mubr.bf16.gmra.mrb[0].mxu0 %v458
          %v756 = vpop.f32.mrb[0].mxu0
          %v757 = vadd.f32 %v421, %v756
          %v758 = vpop.f32.mrb[0].mxu0
          %v759 = vpop.f32.mrb[0].mxu0
          %v760 = vadd.f32 %v421, %v759
          %v761 = vpop.f32.mrb[0].mxu0
          %762 = vmatprep.mubr.bf16.mxu0 0
          %763 = vmatmul.mubr.bf16.gmra.mrb[0].mxu0 %v459
          %v764 = vpop.f32.mrb[0].mxu0
          %v765 = vadd.f32 %v421, %v764
          %v766 = vpop.f32.mrb[0].mxu0
          %v767 = vpop.f32.mrb[0].mxu0
          %v768 = vadd.f32 %v421, %v767
          %v769 = vpop.f32.mrb[0].mxu0
          %770 = vmatprep.mubr.bf16.mxu0 0
          %771 = vmatmul.mubr.bf16.gmra.mrb[0].mxu0 %v460
          %v772 = vpop.f32.mrb[0].mxu0
          %v773 = vadd.f32 %v421, %v772
          %v774 = vpop.f32.mrb[0].mxu0
          %v775 = vpop.f32.mrb[0].mxu0
          %v776 = vadd.f32 %v421, %v775
          %v777 = vpop.f32.mrb[0].mxu0
          %778 = vmatprep.mubr.bf16.mxu0 0
          %779 = vmatmul.mubr.bf16.gmra.mrb[0].mxu0 %v461
          %v780 = vpop.f32.mrb[0].mxu0
          %v781 = vadd.f32 %v421, %v780
          %v782 = vpop.f32.mrb[0].mxu0
          %v783 = vpop.f32.mrb[0].mxu0
          %v784 = vadd.f32 %v421, %v783
          %v785 = vpop.f32.mrb[0].mxu0
          %786 = vmatprep.mubr.bf16.mxu0 0
          %787 = vmatmul.mubr.bf16.gmra.mrb[0].mxu0 %v462
          %v788 = vpop.f32.mrb[0].mxu0
          %v789 = vadd.f32 %v421, %v788
          %v790 = vpop.f32.mrb[0].mxu0
          %v791 = vpop.f32.mrb[0].mxu0
          %v792 = vadd.f32 %v421, %v791
          %v793 = vpop.f32.mrb[0].mxu0
          %794 = vmatprep.mubr.bf16.mxu0 0
          %795 = vmatmul.mubr.bf16.gmra.mrb[0].mxu0 %v463
          %v796 = vpop.f32.mrb[0].mxu0
          %v797 = vadd.f32 %v421, %v796
          %v798 = vpop.f32.mrb[0].mxu0
          %v799 = vpop.f32.mrb[0].mxu0
          %v800 = vadd.f32 %v421, %v799
          %v801 = vpop.f32.mrb[0].mxu0
          %802 = vmatprep.mubr.bf16.mxu0 0
          %803 = vmatmul.mubr.bf16.gmra.mrb[0].mxu0 %v464
          %v804 = vpop.f32.mrb[0].mxu0
          %v805 = vadd.f32 %v421, %v804
          %v806 = vpop.f32.mrb[0].mxu0
          %v807 = vpop.f32.mrb[0].mxu0
          %v808 = vadd.f32 %v421, %v807
          %v809 = vpop.f32.mrb[0].mxu0
          %810 = vdwg.mxu0
          %v811 = vpack.c.bf16 %v640, %v636
          %v812 = vpack.c.bf16 %v642, %v638
          %v813 = vpack.c.bf16 %v752, %v749
          %v814 = vpack.c.bf16 %v650, %v646
          %v815 = vpack.c.bf16 %v652, %v648
          %v816 = vpack.c.bf16 %v760, %v757
          %v817 = vpack.c.bf16 %v660, %v656
          %v818 = vpack.c.bf16 %v662, %v658
          %v819 = vpack.c.bf16 %v768, %v765
          %v820 = vpack.c.bf16 %v670, %v666
          %v821 = vpack.c.bf16 %v672, %v668
          %v822 = vpack.c.bf16 %v776, %v773
          %v823 = vpack.c.bf16 %v680, %v676
          %v824 = vpack.c.bf16 %v682, %v678
          %v825 = vpack.c.bf16 %v784, %v781
          %v826 = vpack.c.bf16 %v690, %v686
          %v827 = vpack.c.bf16 %v692, %v688
          %v828 = vpack.c.bf16 %v792, %v789
          %v829 = vpack.c.bf16 %v700, %v696
          %v830 = vpack.c.bf16 %v702, %v698
          %v831 = vpack.c.bf16 %v800, %v797
          %v832 = vpack.c.bf16 %v710, %v706
          %v833 = vpack.c.bf16 %v712, %v708
          %v834 = vpack.c.bf16 %v808, %v805
          %835 = vst [vmem:[#allocation3] sm:$0xff] %v811
          %836 = vst [vmem:[#allocation3 + $0x8] sm:$0xff] %v812
          %837 = vst [vmem:[#allocation3 + $0x10] sm:$0xff] %v813
          %838 = vst [vmem:[#allocation3 + $0x18] sm:$0xff] %v814
          %839 = vst [vmem:[#allocation3 + $0x20] sm:$0xff] %v815
          %840 = vst [vmem:[#allocation3 + $0x28] sm:$0xff] %v816
          %841 = vst [vmem:[#allocation3 + $0x30] sm:$0xff] %v817
          %842 = vst [vmem:[#allocation3 + $0x38] sm:$0xff] %v818
          %843 = vst [vmem:[#allocation3 + $0x40] sm:$0xff] %v819
          %844 = vst [vmem:[#allocation3 + $0x48] sm:$0xff] %v820
          %845 = vst [vmem:[#allocation3 + $0x50] sm:$0xff] %v821
          %846 = vst [vmem:[#allocation3 + $0x58] sm:$0xff] %v822
          %847 = vst [vmem:[#allocation3 + $0x60] sm:$0xff] %v823
          %848 = vst [vmem:[#allocation3 + $0x68] sm:$0xff] %v824
          %849 = vst [vmem:[#allocation3 + $0x70] sm:$0xff] %v825
          %850 = vst [vmem:[#allocation3 + $0x78] sm:$0xff] %v826
          %851 = vst [vmem:[#allocation3 + $0x80] sm:$0xff] %v827
          %852 = vst [vmem:[#allocation3 + $0x88] sm:$0xff] %v828
          %853 = vst [vmem:[#allocation3 + $0x90] sm:$0xff] %v829
          %854 = vst [vmem:[#allocation3 + $0x98] sm:$0xff] %v830
          %855 = vst [vmem:[#allocation3 + $0xa0] sm:$0xff] %v831
          %856 = vst [vmem:[#allocation3 + $0xa8] sm:$0xff] %v832
          %857 = vst [vmem:[#allocation3 + $0xb0] sm:$0xff] %v833
          %858 = vst [vmem:[#allocation3 + $0xb8] sm:$0xff] %v834
        $region56: #{tpu_custom_call.1} parent=39 // pred_fallthru
          _
        %p859 = scmp.gt.s32.totalorder %s28, 0
        // Predicated region
        $region57: #{tpu_custom_call.1} parent=39 // pred_check
          %p860 = pneg %p859
        $region58: #{tpu_custom_call.1} parent=39 // pred_check_branch
          %862 = sbr.rel (%p860) target = $region60
        $region59: #{tpu_custom_call.1} parent=39 // pred_region
          %v863 = vld [vmem:[#allocation2] sm:$0xff]
          %v864 = vld [vmem:[#allocation2 + $0x8] sm:$0xff]
          %v865 = vld [vmem:[#allocation2 + $0x10] sm:$0xff]
          %v866 = vld [vmem:[#allocation2 + $0x18] sm:$0xff]
          %v867 = vld [vmem:[#allocation2 + $0x20] sm:$0xff]
          %v868 = vld [vmem:[#allocation2 + $0x28] sm:$0xff]
          %v869 = vld [vmem:[#allocation2 + $0x30] sm:$0xff]
          %v870 = vld [vmem:[#allocation2 + $0x38] sm:$0xff]
          %v871 = vld [vmem:[%s276] sm:$0xff]
          %v872 = vld [vmem:[%s276 + $0x8] sm:$0xf]
          %v873 = vld [vmem:[%s276 + $0xc] sm:$0xff]
          %v874 = vld [vmem:[%s276 + $0x14] sm:$0xf]
          %v875 = vld [vmem:[%s276 + $0x18] sm:$0xff]
          %v876 = vld [vmem:[%s276 + $0x20] sm:$0xf]
          %v877 = vld [vmem:[%s276 + $0x24] sm:$0xff]
          %v878 = vld [vmem:[%s276 + $0x2c] sm:$0xf]
          %v879 = vld [vmem:[%s276 + $0x30] sm:$0xff]
          %v880 = vld [vmem:[%s276 + $0x38] sm:$0xf]
          %v881 = vld [vmem:[%s276 + $0x3c] sm:$0xff]
          %v882 = vld [vmem:[%s276 + $0x44] sm:$0xf]
          %v883 = vld [vmem:[%s276 + $0x48] sm:$0xff]
          %v884 = vld [vmem:[%s276 + $0x50] sm:$0xf]
          %v885 = vld [vmem:[%s276 + $0x54] sm:$0xff]
          %v886 = vld [vmem:[%s276 + $0x5c] sm:$0xf]
          %v887 = vld [vmem:[%s276 + $0x60] sm:$0xff]
          %v888 = vld [vmem:[%s276 + $0x68] sm:$0xf]
          %v889 = vld [vmem:[%s276 + $0x6c] sm:$0xff]
          %v890 = vld [vmem:[%s276 + $0x74] sm:$0xf]
          %v891 = vld [vmem:[%s276 + $0x78] sm:$0xff]
          %v892 = vld [vmem:[%s276 + $0x80] sm:$0xf]
          %v893 = vld [vmem:[%s276 + $0x84] sm:$0xff]
          %v894 = vld [vmem:[%s276 + $0x8c] sm:$0xf]
          %v895 = vld [vmem:[%s276 + $0x90] sm:$0xff]
          %v896 = vld [vmem:[%s276 + $0x98] sm:$0xf]
          %v897 = vld [vmem:[%s276 + $0x9c] sm:$0xff]
          %v898 = vld [vmem:[%s276 + $0xa4] sm:$0xf]
          %v899 = vld [vmem:[%s276 + $0xa8] sm:$0xff]
          %v900 = vld [vmem:[%s276 + $0xb0] sm:$0xf]
          %v901 = vld [vmem:[%s276 + $0xb4] sm:$0xff]
          %v902 = vld [vmem:[%s276 + $0xbc] sm:$0xf]
          %v904 = vlaneseq
          %v905 = vshrl.u32 %v904, 7
          %v906 = vsub.s32 0, %v905
          %v907 = vrot.slane %v322, %v906
          %v908 = vlaneseq
          %v909 = vshrl.u32 %v908, 7
          %v910 = vsub.s32 1, %v909
          %v911 = vrot.slane %v322, %v910
          %v912 = vlaneseq
          %v913 = vshrl.u32 %v912, 7
          %v914 = vsub.s32 2, %v913
          %v915 = vrot.slane %v322, %v914
          %v951 = vunpack.c.l.b16 %v871
          %v952 = vunpack.c.h.b16 %v871
          %v953 = vunpack.c.l.b16 %v872
          %v954 = vunpack.c.l.b16 %v873
          %v955 = vunpack.c.h.b16 %v873
          %v956 = vunpack.c.l.b16 %v874
          %v957 = vunpack.c.l.b16 %v875
          %v958 = vunpack.c.h.b16 %v875
          %v959 = vunpack.c.l.b16 %v876
          %v960 = vunpack.c.l.b16 %v877
          %v961 = vunpack.c.h.b16 %v877
          %v962 = vunpack.c.l.b16 %v878
          %v963 = vunpack.c.l.b16 %v879
          %v964 = vunpack.c.h.b16 %v879
          %v965 = vunpack.c.l.b16 %v880
          %v966 = vunpack.c.l.b16 %v881
          %v967 = vunpack.c.h.b16 %v881
          %v968 = vunpack.c.l.b16 %v882
          %v969 = vunpack.c.l.b16 %v883
          %v970 = vunpack.c.h.b16 %v883
          %v971 = vunpack.c.l.b16 %v884
          %v972 = vunpack.c.l.b16 %v885
          %v973 = vunpack.c.h.b16 %v885
          %v974 = vunpack.c.l.b16 %v886
          %v975 = vunpack.c.l.b16 %v887
          %v976 = vunpack.c.h.b16 %v887
          %v977 = vunpack.c.l.b16 %v888
          %v978 = vunpack.c.l.b16 %v889
          %v979 = vunpack.c.h.b16 %v889
          %v980 = vunpack.c.l.b16 %v890
          %v981 = vunpack.c.l.b16 %v891
          %v982 = vunpack.c.h.b16 %v891
          %v983 = vunpack.c.l.b16 %v892
          %v984 = vunpack.c.l.b16 %v893
          %v985 = vunpack.c.h.b16 %v893
          %v986 = vunpack.c.l.b16 %v894
          %v987 = vunpack.c.l.b16 %v895
          %v988 = vunpack.c.h.b16 %v895
          %v989 = vunpack.c.l.b16 %v896
          %v990 = vunpack.c.l.b16 %v897
          %v991 = vunpack.c.h.b16 %v897
          %v992 = vunpack.c.l.b16 %v898
          %v993 = vunpack.c.l.b16 %v899
          %v994 = vunpack.c.h.b16 %v899
          %v995 = vunpack.c.l.b16 %v900
          %v996 = vunpack.c.l.b16 %v901
          %v997 = vunpack.c.h.b16 %v901
          %v998 = vunpack.c.l.b16 %v902
          %v999 = vpack.c.b16 %v954, %v951
          %v1000 = vpack.c.b16 %v955, %v952
          %v1001 = vpack.c.b16 %v956, %v953
          %v1002 = vpack.c.b16 %v960, %v957
          %v1003 = vpack.c.b16 %v961, %v958
          %v1004 = vpack.c.b16 %v962, %v959
          %v1005 = vpack.c.b16 %v966, %v963
          %v1006 = vpack.c.b16 %v967, %v964
          %v1007 = vpack.c.b16 %v968, %v965
          %v1008 = vpack.c.b16 %v972, %v969
          %v1009 = vpack.c.b16 %v973, %v970
          %v1010 = vpack.c.b16 %v974, %v971
          %v1011 = vpack.c.b16 %v978, %v975
          %v1012 = vpack.c.b16 %v979, %v976
          %v1013 = vpack.c.b16 %v980, %v977
          %v1014 = vpack.c.b16 %v984, %v981
          %v1015 = vpack.c.b16 %v985, %v982
          %v1016 = vpack.c.b16 %v986, %v983
          %v1017 = vpack.c.b16 %v990, %v987
          %v1018 = vpack.c.b16 %v991, %v988
          %v1019 = vpack.c.b16 %v992, %v989
          %v1020 = vpack.c.b16 %v996, %v993
          %v1021 = vpack.c.b16 %v997, %v994
          %v1022 = vpack.c.b16 %v998, %v995
          %1047 = vmatprep.subr.bf16.mxu0 %v1000
          %1048 = vmatpush1.bf16.msra.mxu0 %v999
          %1049 = vmatprep.subr.bf16.mxu0 %v1003
          %1050 = vmatpush1.bf16.msra.mxu0 %v1002
          %1051 = vmatprep.subr.bf16.mxu0 %v1006
          %1052 = vmatpush1.bf16.msra.mxu0 %v1005
          %1053 = vmatprep.subr.bf16.mxu0 %v1009
          %1054 = vmatpush1.bf16.msra.mxu0 %v1008
          %1055 = vmatprep.subr.bf16.mxu0 %v1012
          %1056 = vmatpush1.bf16.msra.mxu0 %v1011
          %1057 = vmatprep.subr.bf16.mxu0 %v1015
          %1058 = vmatpush1.bf16.msra.mxu0 %v1014
          %1059 = vmatprep.subr.bf16.mxu0 %v1018
          %1060 = vmatpush1.bf16.msra.mxu0 %v1017
          %1061 = vmatprep.subr.bf16.mxu0 %v1021
          %1062 = vmatpush1.bf16.msra.mxu0 %v1020
          %1063 = vmatprep.subr.bf16.mxu0 0
          %1064 = vmatpush1.bf16.msra.mxu0 0
          %1065 = vmatprep.subr.bf16.mxu0 0
          %1066 = vmatpush1.bf16.msra.mxu0 0
          %1067 = vmatprep.subr.bf16.mxu0 0
          %1068 = vmatpush1.bf16.msra.mxu0 0
          %1069 = vmatprep.subr.bf16.mxu0 0
          %1070 = vmatpush1.bf16.msra.mxu0 0
          %1071 = vmatprep.subr.bf16.mxu0 0
          %1072 = vmatpush1.bf16.msra.mxu0 0
          %1073 = vmatprep.subr.bf16.mxu0 0
          %1074 = vmatpush1.bf16.msra.mxu0 0
          %1075 = vmatprep.subr.bf16.mxu0 0
          %1076 = vmatpush1.bf16.msra.mxu0 0
          %1077 = vmatprep.subr.bf16.mxu0 0
          %1078 = vmatpush1.bf16.msra.mxu0 0
          %1079 = vmatprep.mubr.bf16.mxu0 0
          %1080 = vmatmul.mubr.bf16.gmra.mrb[0].mxu0 %v863
          %v1081 = vpop.f32.mrb[0].mxu0
          %v1082 = vadd.f32 %v907, %v1081
          %v1083 = vpop.f32.mrb[0].mxu0
          %v1084 = vadd.f32 %v911, %v1083
          %v1085 = vpop.f32.mrb[0].mxu0
          %v1086 = vadd.f32 %v907, %v1085
          %v1087 = vpop.f32.mrb[0].mxu0
          %v1088 = vadd.f32 %v911, %v1087
          %1089 = vmatprep.mubr.bf16.mxu0 0
          %1090 = vmatmul.mubr.bf16.gmra.mrb[0].mxu0 %v864
          %v1091 = vpop.f32.mrb[0].mxu0
          %v1092 = vadd.f32 %v907, %v1091
          %v1093 = vpop.f32.mrb[0].mxu0
          %v1094 = vadd.f32 %v911, %v1093
          %v1095 = vpop.f32.mrb[0].mxu0
          %v1096 = vadd.f32 %v907, %v1095
          %v1097 = vpop.f32.mrb[0].mxu0
          %v1098 = vadd.f32 %v911, %v1097
          %1099 = vmatprep.mubr.bf16.mxu0 0
          %1100 = vmatmul.mubr.bf16.gmra.mrb[0].mxu0 %v865
          %v1101 = vpop.f32.mrb[0].mxu0
          %v1102 = vadd.f32 %v907, %v1101
          %v1103 = vpop.f32.mrb[0].mxu0
          %v1104 = vadd.f32 %v911, %v1103
          %v1105 = vpop.f32.mrb[0].mxu0
          %v1106 = vadd.f32 %v907, %v1105
          %v1107 = vpop.f32.mrb[0].mxu0
          %v1108 = vadd.f32 %v911, %v1107
          %1109 = vmatprep.mubr.bf16.mxu0 0
          %1110 = vmatmul.mubr.bf16.gmra.mrb[0].mxu0 %v866
          %v1111 = vpop.f32.mrb[0].mxu0
          %v1112 = vadd.f32 %v907, %v1111
          %v1113 = vpop.f32.mrb[0].mxu0
          %v1114 = vadd.f32 %v911, %v1113
          %v1115 = vpop.f32.mrb[0].mxu0
          %v1116 = vadd.f32 %v907, %v1115
          %v1117 = vpop.f32.mrb[0].mxu0
          %v1118 = vadd.f32 %v911, %v1117
          %1119 = vmatprep.mubr.bf16.mxu0 0
          %1120 = vmatmul.mubr.bf16.gmra.mrb[0].mxu0 %v867
          %v1121 = vpop.f32.mrb[0].mxu0
          %v1122 = vadd.f32 %v907, %v1121
          %v1123 = vpop.f32.mrb[0].mxu0
          %v1124 = vadd.f32 %v911, %v1123
          %v1125 = vpop.f32.mrb[0].mxu0
          %v1126 = vadd.f32 %v907, %v1125
          %v1127 = vpop.f32.mrb[0].mxu0
          %v1128 = vadd.f32 %v911, %v1127
          %1129 = vmatprep.mubr.bf16.mxu0 0
          %1130 = vmatmul.mubr.bf16.gmra.mrb[0].mxu0 %v868
          %v1131 = vpop.f32.mrb[0].mxu0
          %v1132 = vadd.f32 %v907, %v1131
          %v1133 = vpop.f32.mrb[0].mxu0
          %v1134 = vadd.f32 %v911, %v1133
          %v1135 = vpop.f32.mrb[0].mxu0
          %v1136 = vadd.f32 %v907, %v1135
          %v1137 = vpop.f32.mrb[0].mxu0
          %v1138 = vadd.f32 %v911, %v1137
          %1139 = vmatprep.mubr.bf16.mxu0 0
          %1140 = vmatmul.mubr.bf16.gmra.mrb[0].mxu0 %v869
          %v1141 = vpop.f32.mrb[0].mxu0
          %v1142 = vadd.f32 %v907, %v1141
          %v1143 = vpop.f32.mrb[0].mxu0
          %v1144 = vadd.f32 %v911, %v1143
          %v1145 = vpop.f32.mrb[0].mxu0
          %v1146 = vadd.f32 %v907, %v1145
          %v1147 = vpop.f32.mrb[0].mxu0
          %v1148 = vadd.f32 %v911, %v1147
          %1149 = vmatprep.mubr.bf16.mxu0 0
          %1150 = vmatmul.mubr.bf16.gmra.mrb[0].mxu0 %v870
          %v1151 = vpop.f32.mrb[0].mxu0
          %v1152 = vadd.f32 %v907, %v1151
          %v1153 = vpop.f32.mrb[0].mxu0
          %v1154 = vadd.f32 %v911, %v1153
          %v1155 = vpop.f32.mrb[0].mxu0
          %v1156 = vadd.f32 %v907, %v1155
          %v1157 = vpop.f32.mrb[0].mxu0
          %v1158 = vadd.f32 %v911, %v1157
          %1159 = vdwg.mxu0
          %1160 = vmatprep.subr.bf16.mxu0 0
          %1161 = vmatpush1.bf16.msra.mxu0 %v1001
          %1162 = vmatprep.subr.bf16.mxu0 0
          %1163 = vmatpush1.bf16.msra.mxu0 %v1004
          %1164 = vmatprep.subr.bf16.mxu0 0
          %1165 = vmatpush1.bf16.msra.mxu0 %v1007
          %1166 = vmatprep.subr.bf16.mxu0 0
          %1167 = vmatpush1.bf16.msra.mxu0 %v1010
          %1168 = vmatprep.subr.bf16.mxu0 0
          %1169 = vmatpush1.bf16.msra.mxu0 %v1013
          %1170 = vmatprep.subr.bf16.mxu0 0
          %1171 = vmatpush1.bf16.msra.mxu0 %v1016
          %1172 = vmatprep.subr.bf16.mxu0 0
          %1173 = vmatpush1.bf16.msra.mxu0 %v1019
          %1174 = vmatprep.subr.bf16.mxu0 0
          %1175 = vmatpush1.bf16.msra.mxu0 %v1022
          %1176 = vmatprep.subr.bf16.mxu0 0
          %1177 = vmatpush1.bf16.msra.mxu0 0
          %1178 = vmatprep.subr.bf16.mxu0 0
          %1179 = vmatpush1.bf16.msra.mxu0 0
          %1180 = vmatprep.subr.bf16.mxu0 0
          %1181 = vmatpush1.bf16.msra.mxu0 0
          %1182 = vmatprep.subr.bf16.mxu0 0
          %1183 = vmatpush1.bf16.msra.mxu0 0
          %1184 = vmatprep.subr.bf16.mxu0 0
          %1185 = vmatpush1.bf16.msra.mxu0 0
          %1186 = vmatprep.subr.bf16.mxu0 0
          %1187 = vmatpush1.bf16.msra.mxu0 0
          %1188 = vmatprep.subr.bf16.mxu0 0
          %1189 = vmatpush1.bf16.msra.mxu0 0
          %1190 = vmatprep.subr.bf16.mxu0 0
          %1191 = vmatpush1.bf16.msra.mxu0 0
          %1192 = vmatprep.mubr.bf16.mxu0 0
          %1193 = vmatmul.mubr.bf16.gmra.mrb[0].mxu0 %v863
          %v1194 = vpop.f32.mrb[0].mxu0
          %v1195 = vadd.f32 %v915, %v1194
          %v1196 = vpop.f32.mrb[0].mxu0
          %v1197 = vpop.f32.mrb[0].mxu0
          %v1198 = vadd.f32 %v915, %v1197
          %v1199 = vpop.f32.mrb[0].mxu0
          %1200 = vmatprep.mubr.bf16.mxu0 0
          %1201 = vmatmul.mubr.bf16.gmra.mrb[0].mxu0 %v864
          %v1202 = vpop.f32.mrb[0].mxu0
          %v1203 = vadd.f32 %v915, %v1202
          %v1204 = vpop.f32.mrb[0].mxu0
          %v1205 = vpop.f32.mrb[0].mxu0
          %v1206 = vadd.f32 %v915, %v1205
          %v1207 = vpop.f32.mrb[0].mxu0
          %1208 = vmatprep.mubr.bf16.mxu0 0
          %1209 = vmatmul.mubr.bf16.gmra.mrb[0].mxu0 %v865
          %v1210 = vpop.f32.mrb[0].mxu0
          %v1211 = vadd.f32 %v915, %v1210
          %v1212 = vpop.f32.mrb[0].mxu0
          %v1213 = vpop.f32.mrb[0].mxu0
          %v1214 = vadd.f32 %v915, %v1213
          %v1215 = vpop.f32.mrb[0].mxu0
          %1216 = vmatprep.mubr.bf16.mxu0 0
          %1217 = vmatmul.mubr.bf16.gmra.mrb[0].mxu0 %v866
          %v1218 = vpop.f32.mrb[0].mxu0
          %v1219 = vadd.f32 %v915, %v1218
          %v1220 = vpop.f32.mrb[0].mxu0
          %v1221 = vpop.f32.mrb[0].mxu0
          %v1222 = vadd.f32 %v915, %v1221
          %v1223 = vpop.f32.mrb[0].mxu0
          %1224 = vmatprep.mubr.bf16.mxu0 0
          %1225 = vmatmul.mubr.bf16.gmra.mrb[0].mxu0 %v867
          %v1226 = vpop.f32.mrb[0].mxu0
          %v1227 = vadd.f32 %v915, %v1226
          %v1228 = vpop.f32.mrb[0].mxu0
          %v1229 = vpop.f32.mrb[0].mxu0
          %v1230 = vadd.f32 %v915, %v1229
          %v1231 = vpop.f32.mrb[0].mxu0
          %1232 = vmatprep.mubr.bf16.mxu0 0
          %1233 = vmatmul.mubr.bf16.gmra.mrb[0].mxu0 %v868
          %v1234 = vpop.f32.mrb[0].mxu0
          %v1235 = vadd.f32 %v915, %v1234
          %v1236 = vpop.f32.mrb[0].mxu0
          %v1237 = vpop.f32.mrb[0].mxu0
          %v1238 = vadd.f32 %v915, %v1237
          %v1239 = vpop.f32.mrb[0].mxu0
          %1240 = vmatprep.mubr.bf16.mxu0 0
          %1241 = vmatmul.mubr.bf16.gmra.mrb[0].mxu0 %v869
          %v1242 = vpop.f32.mrb[0].mxu0
          %v1243 = vadd.f32 %v915, %v1242
          %v1244 = vpop.f32.mrb[0].mxu0
          %v1245 = vpop.f32.mrb[0].mxu0
          %v1246 = vadd.f32 %v915, %v1245
          %v1247 = vpop.f32.mrb[0].mxu0
          %1248 = vmatprep.mubr.bf16.mxu0 0
          %1249 = vmatmul.mubr.bf16.gmra.mrb[0].mxu0 %v870
          %v1250 = vpop.f32.mrb[0].mxu0
          %v1251 = vadd.f32 %v915, %v1250
          %v1252 = vpop.f32.mrb[0].mxu0
          %v1253 = vpop.f32.mrb[0].mxu0
          %v1254 = vadd.f32 %v915, %v1253
          %v1255 = vpop.f32.mrb[0].mxu0
          %1256 = vdwg.mxu0
          %v1257 = vpack.c.bf16 %v1086, %v1082
          %v1258 = vpack.c.bf16 %v1088, %v1084
          %v1259 = vpack.c.bf16 %v1198, %v1195
          %v1260 = vpack.c.bf16 %v1096, %v1092
          %v1261 = vpack.c.bf16 %v1098, %v1094
          %v1262 = vpack.c.bf16 %v1206, %v1203
          %v1263 = vpack.c.bf16 %v1106, %v1102
          %v1264 = vpack.c.bf16 %v1108, %v1104
          %v1265 = vpack.c.bf16 %v1214, %v1211
          %v1266 = vpack.c.bf16 %v1116, %v1112
          %v1267 = vpack.c.bf16 %v1118, %v1114
          %v1268 = vpack.c.bf16 %v1222, %v1219
          %v1269 = vpack.c.bf16 %v1126, %v1122
          %v1270 = vpack.c.bf16 %v1128, %v1124
          %v1271 = vpack.c.bf16 %v1230, %v1227
          %v1272 = vpack.c.bf16 %v1136, %v1132
          %v1273 = vpack.c.bf16 %v1138, %v1134
          %v1274 = vpack.c.bf16 %v1238, %v1235
          %v1275 = vpack.c.bf16 %v1146, %v1142
          %v1276 = vpack.c.bf16 %v1148, %v1144
          %v1277 = vpack.c.bf16 %v1246, %v1243
          %v1278 = vpack.c.bf16 %v1156, %v1152
          %v1279 = vpack.c.bf16 %v1158, %v1154
          %v1280 = vpack.c.bf16 %v1254, %v1251
          %1281 = vst [vmem:[#allocation3] sm:$0xff] %v1257
          %1282 = vst [vmem:[#allocation3 + $0x8] sm:$0xff] %v1258
          %1283 = vst [vmem:[#allocation3 + $0x10] sm:$0xff] %v1259
          %1284 = vst [vmem:[#allocation3 + $0x18] sm:$0xff] %v1260
          %1285 = vst [vmem:[#allocation3 + $0x20] sm:$0xff] %v1261
          %1286 = vst [vmem:[#allocation3 + $0x28] sm:$0xff] %v1262
          %1287 = vst [vmem:[#allocation3 + $0x30] sm:$0xff] %v1263
          %1288 = vst [vmem:[#allocation3 + $0x38] sm:$0xff] %v1264
          %1289 = vst [vmem:[#allocation3 + $0x40] sm:$0xff] %v1265
          %1290 = vst [vmem:[#allocation3 + $0x48] sm:$0xff] %v1266
          %1291 = vst [vmem:[#allocation3 + $0x50] sm:$0xff] %v1267
          %1292 = vst [vmem:[#allocation3 + $0x58] sm:$0xff] %v1268
          %1293 = vst [vmem:[#allocation3 + $0x60] sm:$0xff] %v1269
          %1294 = vst [vmem:[#allocation3 + $0x68] sm:$0xff] %v1270
          %1295 = vst [vmem:[#allocation3 + $0x70] sm:$0xff] %v1271
          %1296 = vst [vmem:[#allocation3 + $0x78] sm:$0xff] %v1272
          %1297 = vst [vmem:[#allocation3 + $0x80] sm:$0xff] %v1273
          %1298 = vst [vmem:[#allocation3 + $0x88] sm:$0xff] %v1274
          %1299 = vst [vmem:[#allocation3 + $0x90] sm:$0xff] %v1275
          %1300 = vst [vmem:[#allocation3 + $0x98] sm:$0xff] %v1276
          %1301 = vst [vmem:[#allocation3 + $0xa0] sm:$0xff] %v1277
          %1302 = vst [vmem:[#allocation3 + $0xa8] sm:$0xff] %v1278
          %1303 = vst [vmem:[#allocation3 + $0xb0] sm:$0xff] %v1279
          %1304 = vst [vmem:[#allocation3 + $0xb8] sm:$0xff] %v1280
        $region60: #{tpu_custom_call.1} parent=39 // pred_fallthru
          _
        %1305 = vst [vmem:[#allocation4] sm:$0xff] 0.0
        %1306 = vst [vmem:[#allocation4 + $0x8] sm:$0xff] 0.0
        %v1307 = vld [vmem:[#allocation3] sm:$0xff]
        %v1308 = vld [vmem:[#allocation3 + $0x8] sm:$0xff]
        %v1309 = vld [vmem:[#allocation3 + $0x10] sm:$0xff]
        %v1310 = vld [vmem:[#allocation4] sm:$0xff]
        %v1311 = vld [vmem:[#allocation4 + $0x8] sm:$0xff]
        %v1312 = vpack.c.bf16 %v1311, %v1310
        %v1345 = vunpack.c.l.b16 %v325
        %v1346 = vunpack.c.h.b16 %v325
        %v1347 = vunpack.c.l.b16 %v326
        %v1348 = vunpack.c.l.b16 %v327
        %v1349 = vunpack.c.h.b16 %v327
        %v1350 = vunpack.c.l.b16 %v328
        %v1351 = vunpack.c.l.b16 %v329
        %v1352 = vunpack.c.h.b16 %v329
        %v1353 = vunpack.c.l.b16 %v330
        %v1354 = vunpack.c.l.b16 %v331
        %v1355 = vunpack.c.h.b16 %v331
        %v1356 = vunpack.c.l.b16 %v332
        %v1357 = vunpack.c.l.b16 %v333
        %v1358 = vunpack.c.h.b16 %v333
        %v1359 = vunpack.c.l.b16 %v334
        %v1360 = vunpack.c.l.b16 %v335
        %v1361 = vunpack.c.h.b16 %v335
        %v1362 = vunpack.c.l.b16 %v336
        %v1363 = vunpack.c.l.b16 %v337
        %v1364 = vunpack.c.h.b16 %v337
        %v1365 = vunpack.c.l.b16 %v338
        %v1366 = vunpack.c.l.b16 %v339
        %v1367 = vunpack.c.h.b16 %v339
        %v1368 = vunpack.c.l.b16 %v340
        %v1369 = vunpack.c.l.b16 %v341
        %v1370 = vunpack.c.h.b16 %v341
        %v1371 = vunpack.c.l.b16 %v342
        %v1372 = vunpack.c.l.b16 %v343
        %v1373 = vunpack.c.h.b16 %v343
        %v1374 = vunpack.c.l.b16 %v344
        %v1375 = vunpack.c.l.b16 %v345
        %v1376 = vunpack.c.h.b16 %v345
        %v1377 = vunpack.c.l.b16 %v346
        %v1378 = vunpack.c.l.b16 %v347
        %v1379 = vunpack.c.h.b16 %v347
        %v1380 = vunpack.c.l.b16 %v348
        %v1381 = vunpack.c.l.b16 %v349
        %v1382 = vunpack.c.h.b16 %v349
        %v1383 = vunpack.c.l.b16 %v350
        %v1384 = vunpack.c.l.b16 %v351
        %v1385 = vunpack.c.h.b16 %v351
        %v1386 = vunpack.c.l.b16 %v352
        %v1387 = vunpack.c.l.b16 %v353
        %v1388 = vunpack.c.h.b16 %v353
        %v1389 = vunpack.c.l.b16 %v354
        %v1390 = vunpack.c.l.b16 %v355
        %v1391 = vunpack.c.h.b16 %v355
        %v1392 = vunpack.c.l.b16 %v356
        %v1393 = vpack.c.b16 %v1348, %v1345
        %v1394 = vpack.c.b16 %v1349, %v1346
        %v1395 = vpack.c.b16 %v1350, %v1347
        %v1396 = vpack.c.b16 %v1354, %v1351
        %v1397 = vpack.c.b16 %v1355, %v1352
        %v1398 = vpack.c.b16 %v1356, %v1353
        %v1399 = vpack.c.b16 %v1360, %v1357
        %v1400 = vpack.c.b16 %v1361, %v1358
        %v1401 = vpack.c.b16 %v1362, %v1359
        %v1402 = vpack.c.b16 %v1366, %v1363
        %v1403 = vpack.c.b16 %v1367, %v1364
        %v1404 = vpack.c.b16 %v1368, %v1365
        %v1405 = vpack.c.b16 %v1372, %v1369
        %v1406 = vpack.c.b16 %v1373, %v1370
        %v1407 = vpack.c.b16 %v1374, %v1371
        %v1408 = vpack.c.b16 %v1378, %v1375
        %v1409 = vpack.c.b16 %v1379, %v1376
        %v1410 = vpack.c.b16 %v1380, %v1377
        %v1411 = vpack.c.b16 %v1384, %v1381
        %v1412 = vpack.c.b16 %v1385, %v1382
        %v1413 = vpack.c.b16 %v1386, %v1383
        %v1414 = vpack.c.b16 %v1390, %v1387
        %v1415 = vpack.c.b16 %v1391, %v1388
        %v1416 = vpack.c.b16 %v1392, %v1389
        %1441 = vmatprep.subr.bf16.mxu0 %v1394
        %1442 = vmatpush1.bf16.msra.mxu0 %v1393
        %1443 = vmatprep.subr.bf16.mxu0 %v1397
        %1444 = vmatpush1.bf16.msra.mxu0 %v1396
        %1445 = vmatprep.subr.bf16.mxu0 %v1400
        %1446 = vmatpush1.bf16.msra.mxu0 %v1399
        %1447 = vmatprep.subr.bf16.mxu0 %v1403
        %1448 = vmatpush1.bf16.msra.mxu0 %v1402
        %1449 = vmatprep.subr.bf16.mxu0 %v1406
        %1450 = vmatpush1.bf16.msra.mxu0 %v1405
        %1451 = vmatprep.subr.bf16.mxu0 %v1409
        %1452 = vmatpush1.bf16.msra.mxu0 %v1408
        %1453 = vmatprep.subr.bf16.mxu0 %v1412
        %1454 = vmatpush1.bf16.msra.mxu0 %v1411
        %1455 = vmatprep.subr.bf16.mxu0 %v1415
        %1456 = vmatpush1.bf16.msra.mxu0 %v1414
        %1457 = vmatprep.subr.bf16.mxu0 0
        %1458 = vmatpush1.bf16.msra.mxu0 0
        %1459 = vmatprep.subr.bf16.mxu0 0
        %1460 = vmatpush1.bf16.msra.mxu0 0
        %1461 = vmatprep.subr.bf16.mxu0 0
        %1462 = vmatpush1.bf16.msra.mxu0 0
        %1463 = vmatprep.subr.bf16.mxu0 0
        %1464 = vmatpush1.bf16.msra.mxu0 0
        %1465 = vmatprep.subr.bf16.mxu0 0
        %1466 = vmatpush1.bf16.msra.mxu0 0
        %1467 = vmatprep.subr.bf16.mxu0 0
        %1468 = vmatpush1.bf16.msra.mxu0 0
        %1469 = vmatprep.subr.bf16.mxu0 0
        %1470 = vmatpush1.bf16.msra.mxu0 0
        %1471 = vmatprep.subr.bf16.mxu0 0
        %1472 = vmatpush1.bf16.msra.mxu0 0
        %1473 = vmatprep.mubr.bf16.mxu0 0
        %1474 = vmatmul.mubr.bf16.gmra.mrb[0].mxu0 %v1312
        %v1475 = vpop.f32.mrb[0].mxu0
        %v1476 = vadd.f32 0.0, %v1475
        %v1477 = vpop.f32.mrb[0].mxu0
        %v1478 = vadd.f32 0.0, %v1477
        %v1479 = vpop.f32.mrb[0].mxu0
        %v1480 = vadd.f32 0.0, %v1479
        %v1481 = vpop.f32.mrb[0].mxu0
        %v1482 = vadd.f32 0.0, %v1481
        %1483 = vdwg.mxu0
        %1484 = vmatprep.subr.bf16.mxu0 0
        %1485 = vmatpush1.bf16.msra.mxu0 %v1395
        %1486 = vmatprep.subr.bf16.mxu0 0
        %1487 = vmatpush1.bf16.msra.mxu0 %v1398
        %1488 = vmatprep.subr.bf16.mxu0 0
        %1489 = vmatpush1.bf16.msra.mxu0 %v1401
        %1490 = vmatprep.subr.bf16.mxu0 0
        %1491 = vmatpush1.bf16.msra.mxu0 %v1404
        %1492 = vmatprep.subr.bf16.mxu0 0
        %1493 = vmatpush1.bf16.msra.mxu0 %v1407
        %1494 = vmatprep.subr.bf16.mxu0 0
        %1495 = vmatpush1.bf16.msra.mxu0 %v1410
        %1496 = vmatprep.subr.bf16.mxu0 0
        %1497 = vmatpush1.bf16.msra.mxu0 %v1413
        %1498 = vmatprep.subr.bf16.mxu0 0
        %1499 = vmatpush1.bf16.msra.mxu0 %v1416
        %1500 = vmatprep.subr.bf16.mxu0 0
        %1501 = vmatpush1.bf16.msra.mxu0 0
        %1502 = vmatprep.subr.bf16.mxu0 0
        %1503 = vmatpush1.bf16.msra.mxu0 0
        %1504 = vmatprep.subr.bf16.mxu0 0
        %1505 = vmatpush1.bf16.msra.mxu0 0
        %1506 = vmatprep.subr.bf16.mxu0 0
        %1507 = vmatpush1.bf16.msra.mxu0 0
        %1508 = vmatprep.subr.bf16.mxu0 0
        %1509 = vmatpush1.bf16.msra.mxu0 0
        %1510 = vmatprep.subr.bf16.mxu0 0
        %1511 = vmatpush1.bf16.msra.mxu0 0
        %1512 = vmatprep.subr.bf16.mxu0 0
        %1513 = vmatpush1.bf16.msra.mxu0 0
        %1514 = vmatprep.subr.bf16.mxu0 0
        %1515 = vmatpush1.bf16.msra.mxu0 0
        %1516 = vmatprep.mubr.bf16.mxu0 0
        %1517 = vmatmul.mubr.bf16.gmra.mrb[0].mxu0 %v1312
        %v1518 = vpop.f32.mrb[0].mxu0
        %v1519 = vadd.f32 0.0, %v1518
        %v1520 = vpop.f32.mrb[0].mxu0
        %v1521 = vpop.f32.mrb[0].mxu0
        %v1522 = vadd.f32 0.0, %v1521
        %v1523 = vpop.f32.mrb[0].mxu0
        %1524 = vdwg.mxu0
        %v1525 = vunpack.c.l.bf16 %v1307
        %v1526 = vunpack.c.h.bf16 %v1307
        %v1527 = vadd.f32 %v1525, %v1476
        %v1528 = vadd.f32 %v1526, %v1480
        %v1529 = vxor.u32 %v1527, 2147483648
        %v1530 = vxor.u32 %v1528, 2147483648
        %v1531 = vmul.f32 %v1529, 1.442695
        %v1532 = vpow.pop %v1531
        %v1533 = vmul.f32 %v1530, 1.442695
        %v1534 = vpow.pop %v1533
        %v1535 = vadd.f32 %v1532, 1.0
        %v1536 = vadd.f32 %v1534, 1.0
        %v1537 = vrcp.pop %v1535
        %v1538 = vmul.f32 1.0, %v1537
        %v1539 = vrcp.pop %v1536
        %v1540 = vmul.f32 1.0, %v1539
        %v1541 = vunpack.c.l.bf16 %v1308
        %v1542 = vunpack.c.h.bf16 %v1308
        %v1543 = vadd.f32 %v1541, %v1478
        %v1544 = vadd.f32 %v1542, %v1482
        %v1545 = vxor.u32 %v1543, 2147483648
        %v1546 = vxor.u32 %v1544, 2147483648
        %v1547 = vmul.f32 %v1545, 1.442695
        %v1548 = vpow.pop %v1547
        %v1549 = vmul.f32 %v1546, 1.442695
        %v1550 = vpow.pop %v1549
        %v1551 = vadd.f32 %v1548, 1.0
        %v1552 = vadd.f32 %v1550, 1.0
        %v1553 = vrcp.pop %v1551
        %v1554 = vmul.f32 1.0, %v1553
        %v1555 = vrcp.pop %v1552
        %v1556 = vmul.f32 1.0, %v1555
        %v1558 = vlaneseq
        %v1559 = vshrl.u32 %v1558, 7
        %v1560 = vsub.s32 0, %v1559
        %v1561 = vrot.slane %v324, %v1560
        %v1563 = vadd.f32 %v1519, %v1561
        %v1564 = vadd.f32 %v1522, %v1561
        %v1565 = vmul.f32 %v1538, %v1563
        %v1566 = vmul.f32 %v1540, %v1564
        %v1567 = vunpack.c.l.bf16 %v1309
        %v1568 = vunpack.c.h.bf16 %v1309
        %v1569 = vadd.f32 %v1567, %v1565
        %v1570 = vadd.f32 %v1568, %v1566
        %v1571 = vtanh.pop %v1569
        %v1572 = vtanh.pop %v1570
        %v1573 = vsub.f32 %v1310, %v1571
        %v1574 = vsub.f32 %v1311, %v1572
        %v1575 = vmul.f32 %v1554, %v1573
        %v1576 = vmul.f32 %v1556, %v1574
        %v1577 = vadd.f32 %v1571, %v1575
        %v1578 = vadd.f32 %v1572, %v1576
        %1579 = vst [vmem:[#allocation4] sm:$0xff] %v1577
        %1580 = vst [vmem:[#allocation4 + $0x8] sm:$0xff] %v1578
        %v1581 = vpack.c.bf16 %v1578, %v1577
        %1582 = vst [vmem:[#allocation2] sm:$0xff] %v1581
        %s1583 = scalar_lea.vmem [#allocation3], 24
        %v1584 = vld [vmem:[%s1583] sm:$0xff]
        %v1585 = vld [vmem:[%s1583 + $0x8] sm:$0xff]
        %v1586 = vld [vmem:[%s1583 + $0x10] sm:$0xff]
        %v1587 = vld [vmem:[#allocation4] sm:$0xff]
        %v1588 = vld [vmem:[#allocation4 + $0x8] sm:$0xff]
        %v1589 = vpack.c.bf16 %v1588, %v1587
        %1590 = vmatprep.subr.bf16.mxu0 %v1394
        %1591 = vmatpush1.bf16.msra.mxu0 %v1393
        %1592 = vmatprep.subr.bf16.mxu0 %v1397
        %1593 = vmatpush1.bf16.msra.mxu0 %v1396
        %1594 = vmatprep.subr.bf16.mxu0 %v1400
        %1595 = vmatpush1.bf16.msra.mxu0 %v1399
        %1596 = vmatprep.subr.bf16.mxu0 %v1403
        %1597 = vmatpush1.bf16.msra.mxu0 %v1402
        %1598 = vmatprep.subr.bf16.mxu0 %v1406
        %1599 = vmatpush1.bf16.msra.mxu0 %v1405
        %1600 = vmatprep.subr.bf16.mxu0 %v1409
        %1601 = vmatpush1.bf16.msra.mxu0 %v1408
        %1602 = vmatprep.subr.bf16.mxu0 %v1412
        %1603 = vmatpush1.bf16.msra.mxu0 %v1411
        %1604 = vmatprep.subr.bf16.mxu0 %v1415
        %1605 = vmatpush1.bf16.msra.mxu0 %v1414
        %1606 = vmatprep.subr.bf16.mxu0 0
        %1607 = vmatpush1.bf16.msra.mxu0 0
        %1608 = vmatprep.subr.bf16.mxu0 0
        %1609 = vmatpush1.bf16.msra.mxu0 0
        %1610 = vmatprep.subr.bf16.mxu0 0
        %1611 = vmatpush1.bf16.msra.mxu0 0
        %1612 = vmatprep.subr.bf16.mxu0 0
        %1613 = vmatpush1.bf16.msra.mxu0 0
        %1614 = vmatprep.subr.bf16.mxu0 0
        %1615 = vmatpush1.bf16.msra.mxu0 0
        %1616 = vmatprep.subr.bf16.mxu0 0
        %1617 = vmatpush1.bf16.msra.mxu0 0
        %1618 = vmatprep.subr.bf16.mxu0 0
        %1619 = vmatpush1.bf16.msra.mxu0 0
        %1620 = vmatprep.subr.bf16.mxu0 0
        %1621 = vmatpush1.bf16.msra.mxu0 0
        %1622 = vmatprep.mubr.bf16.mxu0 0
        %1623 = vmatmul.mubr.bf16.gmra.mrb[0].mxu0 %v1589
        %v1624 = vpop.f32.mrb[0].mxu0
        %v1625 = vadd.f32 0.0, %v1624
        %v1626 = vpop.f32.mrb[0].mxu0
        %v1627 = vadd.f32 0.0, %v1626
        %v1628 = vpop.f32.mrb[0].mxu0
        %v1629 = vadd.f32 0.0, %v1628
        %v1630 = vpop.f32.mrb[0].mxu0
        %v1631 = vadd.f32 0.0, %v1630
        %1632 = vdwg.mxu0
        %1633 = vmatprep.subr.bf16.mxu0 0
        %1634 = vmatpush1.bf16.msra.mxu0 %v1395
        %1635 = vmatprep.subr.bf16.mxu0 0
        %1636 = vmatpush1.bf16.msra.mxu0 %v1398
        %1637 = vmatprep.subr.bf16.mxu0 0
        %1638 = vmatpush1.bf16.msra.mxu0 %v1401
        %1639 = vmatprep.subr.bf16.mxu0 0
        %1640 = vmatpush1.bf16.msra.mxu0 %v1404
        %1641 = vmatprep.subr.bf16.mxu0 0
        %1642 = vmatpush1.bf16.msra.mxu0 %v1407
        %1643 = vmatprep.subr.bf16.mxu0 0
        %1644 = vmatpush1.bf16.msra.mxu0 %v1410
        %1645 = vmatprep.subr.bf16.mxu0 0
        %1646 = vmatpush1.bf16.msra.mxu0 %v1413
        %1647 = vmatprep.subr.bf16.mxu0 0
        %1648 = vmatpush1.bf16.msra.mxu0 %v1416
        %1649 = vmatprep.subr.bf16.mxu0 0
        %1650 = vmatpush1.bf16.msra.mxu0 0
        %1651 = vmatprep.subr.bf16.mxu0 0
        %1652 = vmatpush1.bf16.msra.mxu0 0
        %1653 = vmatprep.subr.bf16.mxu0 0
        %1654 = vmatpush1.bf16.msra.mxu0 0
        %1655 = vmatprep.subr.bf16.mxu0 0
        %1656 = vmatpush1.bf16.msra.mxu0 0
        %1657 = vmatprep.subr.bf16.mxu0 0
        %1658 = vmatpush1.bf16.msra.mxu0 0
        %1659 = vmatprep.subr.bf16.mxu0 0
        %1660 = vmatpush1.bf16.msra.mxu0 0
        %1661 = vmatprep.subr.bf16.mxu0 0
        %1662 = vmatpush1.bf16.msra.mxu0 0
        %1663 = vmatprep.subr.bf16.mxu0 0
        %1664 = vmatpush1.bf16.msra.mxu0 0
        %1665 = vmatprep.mubr.bf16.mxu0 0
        %1666 = vmatmul.mubr.bf16.gmra.mrb[0].mxu0 %v1589
        %v1667 = vpop.f32.mrb[0].mxu0
        %v1668 = vadd.f32 0.0, %v1667
        %v1669 = vpop.f32.mrb[0].mxu0
        %v1670 = vpop.f32.mrb[0].mxu0
        %v1671 = vadd.f32 0.0, %v1670
        %v1672 = vpop.f32.mrb[0].mxu0
        %1673 = vdwg.mxu0
        %v1674 = vunpack.c.l.bf16 %v1584
        %v1675 = vunpack.c.h.bf16 %v1584
        %v1676 = vadd.f32 %v1674, %v1625
        %v1677 = vadd.f32 %v1675, %v1629
        %v1678 = vxor.u32 %v1676, 2147483648
        %v1679 = vxor.u32 %v1677, 2147483648
        %v1680 = vmul.f32 %v1678, 1.442695
        %v1681 = vpow.pop %v1680
        %v1682 = vmul.f32 %v1679, 1.442695
        %v1683 = vpow.pop %v1682
        %v1684 = vadd.f32 %v1681, 1.0
        %v1685 = vadd.f32 %v1683, 1.0
        %v1686 = vrcp.pop %v1684
        %v1687 = vmul.f32 1.0, %v1686
        %v1688 = vrcp.pop %v1685
        %v1689 = vmul.f32 1.0, %v1688
        %v1690 = vunpack.c.l.bf16 %v1585
        %v1691 = vunpack.c.h.bf16 %v1585
        %v1692 = vadd.f32 %v1690, %v1627
        %v1693 = vadd.f32 %v1691, %v1631
        %v1694 = vxor.u32 %v1692, 2147483648
        %v1695 = vxor.u32 %v1693, 2147483648
        %v1696 = vmul.f32 %v1694, 1.442695
        %v1697 = vpow.pop %v1696
        %v1698 = vmul.f32 %v1695, 1.442695
        %v1699 = vpow.pop %v1698
        %v1700 = vadd.f32 %v1697, 1.0
        %v1701 = vadd.f32 %v1699, 1.0
        %v1702 = vrcp.pop %v1700
        %v1703 = vmul.f32 1.0, %v1702
        %v1704 = vrcp.pop %v1701
        %v1705 = vmul.f32 1.0, %v1704
        %v1706 = vadd.f32 %v1668, %v1561
        %v1707 = vadd.f32 %v1671, %v1561
        %v1708 = vmul.f32 %v1687, %v1706
        %v1709 = vmul.f32 %v1689, %v1707
        %v1710 = vunpack.c.l.bf16 %v1586
        %v1711 = vunpack.c.h.bf16 %v1586
        %v1712 = vadd.f32 %v1710, %v1708
        %v1713 = vadd.f32 %v1711, %v1709
        %v1714 = vtanh.pop %v1712
        %v1715 = vtanh.pop %v1713
        %v1716 = vsub.f32 %v1587, %v1714
        %v1717 = vsub.f32 %v1588, %v1715
        %v1718 = vmul.f32 %v1703, %v1716
        %v1719 = vmul.f32 %v1705, %v1717
        %v1720 = vadd.f32 %v1714, %v1718
        %v1721 = vadd.f32 %v1715, %v1719
        %1722 = vst [vmem:[#allocation4] sm:$0xff] %v1720
        %1723 = vst [vmem:[#allocation4 + $0x8] sm:$0xff] %v1721
        %v1724 = vpack.c.bf16 %v1721, %v1720
        %s1725 = scalar_lea.vmem [#allocation2], 8
        %1726 = vst [vmem:[%s1725] sm:$0xff] %v1724
        %s1727 = scalar_lea.vmem [#allocation3], 48
        %v1728 = vld [vmem:[%s1727] sm:$0xff]
        %v1729 = vld [vmem:[%s1727 + $0x8] sm:$0xff]
        %v1730 = vld [vmem:[%s1727 + $0x10] sm:$0xff]
        %v1731 = vld [vmem:[#allocation4] sm:$0xff]
        %v1732 = vld [vmem:[#allocation4 + $0x8] sm:$0xff]
        %v1733 = vpack.c.bf16 %v1732, %v1731
        %1734 = vmatprep.subr.bf16.mxu0 %v1394
        %1735 = vmatpush1.bf16.msra.mxu0 %v1393
        %1736 = vmatprep.subr.bf16.mxu0 %v1397
        %1737 = vmatpush1.bf16.msra.mxu0 %v1396
        %1738 = vmatprep.subr.bf16.mxu0 %v1400
        %1739 = vmatpush1.bf16.msra.mxu0 %v1399
        %1740 = vmatprep.subr.bf16.mxu0 %v1403
        %1741 = vmatpush1.bf16.msra.mxu0 %v1402
        %1742 = vmatprep.subr.bf16.mxu0 %v1406
        %1743 = vmatpush1.bf16.msra.mxu0 %v1405
        %1744 = vmatprep.subr.bf16.mxu0 %v1409
        %1745 = vmatpush1.bf16.msra.mxu0 %v1408
        %1746 = vmatprep.subr.bf16.mxu0 %v1412
        %1747 = vmatpush1.bf16.msra.mxu0 %v1411
        %1748 = vmatprep.subr.bf16.mxu0 %v1415
        %1749 = vmatpush1.bf16.msra.mxu0 %v1414
        %1750 = vmatprep.subr.bf16.mxu0 0
        %1751 = vmatpush1.bf16.msra.mxu0 0
        %1752 = vmatprep.subr.bf16.mxu0 0
        %1753 = vmatpush1.bf16.msra.mxu0 0
        %1754 = vmatprep.subr.bf16.mxu0 0
        %1755 = vmatpush1.bf16.msra.mxu0 0
        %1756 = vmatprep.subr.bf16.mxu0 0
        %1757 = vmatpush1.bf16.msra.mxu0 0
        %1758 = vmatprep.subr.bf16.mxu0 0
        %1759 = vmatpush1.bf16.msra.mxu0 0
        %1760 = vmatprep.subr.bf16.mxu0 0
        %1761 = vmatpush1.bf16.msra.mxu0 0
        %1762 = vmatprep.subr.bf16.mxu0 0
        %1763 = vmatpush1.bf16.msra.mxu0 0
        %1764 = vmatprep.subr.bf16.mxu0 0
        %1765 = vmatpush1.bf16.msra.mxu0 0
        %1766 = vmatprep.mubr.bf16.mxu0 0
        %1767 = vmatmul.mubr.bf16.gmra.mrb[0].mxu0 %v1733
        %v1768 = vpop.f32.mrb[0].mxu0
        %v1769 = vadd.f32 0.0, %v1768
        %v1770 = vpop.f32.mrb[0].mxu0
        %v1771 = vadd.f32 0.0, %v1770
        %v1772 = vpop.f32.mrb[0].mxu0
        %v1773 = vadd.f32 0.0, %v1772
        %v1774 = vpop.f32.mrb[0].mxu0
        %v1775 = vadd.f32 0.0, %v1774
        %1776 = vdwg.mxu0
        %1777 = vmatprep.subr.bf16.mxu0 0
        %1778 = vmatpush1.bf16.msra.mxu0 %v1395
        %1779 = vmatprep.subr.bf16.mxu0 0
        %1780 = vmatpush1.bf16.msra.mxu0 %v1398
        %1781 = vmatprep.subr.bf16.mxu0 0
        %1782 = vmatpush1.bf16.msra.mxu0 %v1401
        %1783 = vmatprep.subr.bf16.mxu0 0
        %1784 = vmatpush1.bf16.msra.mxu0 %v1404
        %1785 = vmatprep.subr.bf16.mxu0 0
        %1786 = vmatpush1.bf16.msra.mxu0 %v1407
        %1787 = vmatprep.subr.bf16.mxu0 0
        %1788 = vmatpush1.bf16.msra.mxu0 %v1410
        %1789 = vmatprep.subr.bf16.mxu0 0
        %1790 = vmatpush1.bf16.msra.mxu0 %v1413
        %1791 = vmatprep.subr.bf16.mxu0 0
        %1792 = vmatpush1.bf16.msra.mxu0 %v1416
        %1793 = vmatprep.subr.bf16.mxu0 0
        %1794 = vmatpush1.bf16.msra.mxu0 0
        %1795 = vmatprep.subr.bf16.mxu0 0
        %1796 = vmatpush1.bf16.msra.mxu0 0
        %1797 = vmatprep.subr.bf16.mxu0 0
        %1798 = vmatpush1.bf16.msra.mxu0 0
        %1799 = vmatprep.subr.bf16.mxu0 0
        %1800 = vmatpush1.bf16.msra.mxu0 0
        %1801 = vmatprep.subr.bf16.mxu0 0
        %1802 = vmatpush1.bf16.msra.mxu0 0
        %1803 = vmatprep.subr.bf16.mxu0 0
        %1804 = vmatpush1.bf16.msra.mxu0 0
        %1805 = vmatprep.subr.bf16.mxu0 0
        %1806 = vmatpush1.bf16.msra.mxu0 0
        %1807 = vmatprep.subr.bf16.mxu0 0
        %1808 = vmatpush1.bf16.msra.mxu0 0
        %1809 = vmatprep.mubr.bf16.mxu0 0
        %1810 = vmatmul.mubr.bf16.gmra.mrb[0].mxu0 %v1733
        %v1811 = vpop.f32.mrb[0].mxu0
        %v1812 = vadd.f32 0.0, %v1811
        %v1813 = vpop.f32.mrb[0].mxu0
        %v1814 = vpop.f32.mrb[0].mxu0
        %v1815 = vadd.f32 0.0, %v1814
        %v1816 = vpop.f32.mrb[0].mxu0
        %1817 = vdwg.mxu0
        %v1818 = vunpack.c.l.bf16 %v1728
        %v1819 = vunpack.c.h.bf16 %v1728
        %v1820 = vadd.f32 %v1818, %v1769
        %v1821 = vadd.f32 %v1819, %v1773
        %v1822 = vxor.u32 %v1820, 2147483648
        %v1823 = vxor.u32 %v1821, 2147483648
        %v1824 = vmul.f32 %v1822, 1.442695
        %v1825 = vpow.pop %v1824
        %v1826 = vmul.f32 %v1823, 1.442695
        %v1827 = vpow.pop %v1826
        %v1828 = vadd.f32 %v1825, 1.0
        %v1829 = vadd.f32 %v1827, 1.0
        %v1830 = vrcp.pop %v1828
        %v1831 = vmul.f32 1.0, %v1830
        %v1832 = vrcp.pop %v1829
        %v1833 = vmul.f32 1.0, %v1832
        %v1834 = vunpack.c.l.bf16 %v1729
        %v1835 = vunpack.c.h.bf16 %v1729
        %v1836 = vadd.f32 %v1834, %v1771
        %v1837 = vadd.f32 %v1835, %v1775
        %v1838 = vxor.u32 %v1836, 2147483648
        %v1839 = vxor.u32 %v1837, 2147483648
        %v1840 = vmul.f32 %v1838, 1.442695
        %v1841 = vpow.pop %v1840
        %v1842 = vmul.f32 %v1839, 1.442695
        %v1843 = vpow.pop %v1842
        %v1844 = vadd.f32 %v1841, 1.0
        %v1845 = vadd.f32 %v1843, 1.0
        %v1846 = vrcp.pop %v1844
        %v1847 = vmul.f32 1.0, %v1846
        %v1848 = vrcp.pop %v1845
        %v1849 = vmul.f32 1.0, %v1848
        %v1850 = vadd.f32 %v1812, %v1561
        %v1851 = vadd.f32 %v1815, %v1561
        %v1852 = vmul.f32 %v1831, %v1850
        %v1853 = vmul.f32 %v1833, %v1851
        %v1854 = vunpack.c.l.bf16 %v1730
        %v1855 = vunpack.c.h.bf16 %v1730
        %v1856 = vadd.f32 %v1854, %v1852
        %v1857 = vadd.f32 %v1855, %v1853
        %v1858 = vtanh.pop %v1856
        %v1859 = vtanh.pop %v1857
        %v1860 = vsub.f32 %v1731, %v1858
        %v1861 = vsub.f32 %v1732, %v1859
        %v1862 = vmul.f32 %v1847, %v1860
        %v1863 = vmul.f32 %v1849, %v1861
        %v1864 = vadd.f32 %v1858, %v1862
        %v1865 = vadd.f32 %v1859, %v1863
        %1866 = vst [vmem:[#allocation4] sm:$0xff] %v1864
        %1867 = vst [vmem:[#allocation4 + $0x8] sm:$0xff] %v1865
        %v1868 = vpack.c.bf16 %v1865, %v1864
        %s1869 = scalar_lea.vmem [#allocation2], 16
        %1870 = vst [vmem:[%s1869] sm:$0xff] %v1868
        %s1871 = scalar_lea.vmem [#allocation3], 72
        %v1872 = vld [vmem:[%s1871] sm:$0xff]
        %v1873 = vld [vmem:[%s1871 + $0x8] sm:$0xff]
        %v1874 = vld [vmem:[%s1871 + $0x10] sm:$0xff]
        %v1875 = vld [vmem:[#allocation4] sm:$0xff]
        %v1876 = vld [vmem:[#allocation4 + $0x8] sm:$0xff]
        %v1877 = vpack.c.bf16 %v1876, %v1875
        %1878 = vmatprep.subr.bf16.mxu0 %v1394
        %1879 = vmatpush1.bf16.msra.mxu0 %v1393
        %1880 = vmatprep.subr.bf16.mxu0 %v1397
        %1881 = vmatpush1.bf16.msra.mxu0 %v1396
        %1882 = vmatprep.subr.bf16.mxu0 %v1400
        %1883 = vmatpush1.bf16.msra.mxu0 %v1399
        %1884 = vmatprep.subr.bf16.mxu0 %v1403
        %1885 = vmatpush1.bf16.msra.mxu0 %v1402
        %1886 = vmatprep.subr.bf16.mxu0 %v1406
        %1887 = vmatpush1.bf16.msra.mxu0 %v1405
        %1888 = vmatprep.subr.bf16.mxu0 %v1409
        %1889 = vmatpush1.bf16.msra.mxu0 %v1408
        %1890 = vmatprep.subr.bf16.mxu0 %v1412
        %1891 = vmatpush1.bf16.msra.mxu0 %v1411
        %1892 = vmatprep.subr.bf16.mxu0 %v1415
        %1893 = vmatpush1.bf16.msra.mxu0 %v1414
        %1894 = vmatprep.subr.bf16.mxu0 0
        %1895 = vmatpush1.bf16.msra.mxu0 0
        %1896 = vmatprep.subr.bf16.mxu0 0
        %1897 = vmatpush1.bf16.msra.mxu0 0
        %1898 = vmatprep.subr.bf16.mxu0 0
        %1899 = vmatpush1.bf16.msra.mxu0 0
        %1900 = vmatprep.subr.bf16.mxu0 0
        %1901 = vmatpush1.bf16.msra.mxu0 0
        %1902 = vmatprep.subr.bf16.mxu0 0
        %1903 = vmatpush1.bf16.msra.mxu0 0
        %1904 = vmatprep.subr.bf16.mxu0 0
        %1905 = vmatpush1.bf16.msra.mxu0 0
        %1906 = vmatprep.subr.bf16.mxu0 0
        %1907 = vmatpush1.bf16.msra.mxu0 0
        %1908 = vmatprep.subr.bf16.mxu0 0
        %1909 = vmatpush1.bf16.msra.mxu0 0
        %1910 = vmatprep.mubr.bf16.mxu0 0
        %1911 = vmatmul.mubr.bf16.gmra.mrb[0].mxu0 %v1877
        %v1912 = vpop.f32.mrb[0].mxu0
        %v1913 = vadd.f32 0.0, %v1912
        %v1914 = vpop.f32.mrb[0].mxu0
        %v1915 = vadd.f32 0.0, %v1914
        %v1916 = vpop.f32.mrb[0].mxu0
        %v1917 = vadd.f32 0.0, %v1916
        %v1918 = vpop.f32.mrb[0].mxu0
        %v1919 = vadd.f32 0.0, %v1918
        %1920 = vdwg.mxu0
        %1921 = vmatprep.subr.bf16.mxu0 0
        %1922 = vmatpush1.bf16.msra.mxu0 %v1395
        %1923 = vmatprep.subr.bf16.mxu0 0
        %1924 = vmatpush1.bf16.msra.mxu0 %v1398
        %1925 = vmatprep.subr.bf16.mxu0 0
        %1926 = vmatpush1.bf16.msra.mxu0 %v1401
        %1927 = vmatprep.subr.bf16.mxu0 0
        %1928 = vmatpush1.bf16.msra.mxu0 %v1404
        %1929 = vmatprep.subr.bf16.mxu0 0
        %1930 = vmatpush1.bf16.msra.mxu0 %v1407
        %1931 = vmatprep.subr.bf16.mxu0 0
        %1932 = vmatpush1.bf16.msra.mxu0 %v1410
        %1933 = vmatprep.subr.bf16.mxu0 0
        %1934 = vmatpush1.bf16.msra.mxu0 %v1413
        %1935 = vmatprep.subr.bf16.mxu0 0
        %1936 = vmatpush1.bf16.msra.mxu0 %v1416
        %1937 = vmatprep.subr.bf16.mxu0 0
        %1938 = vmatpush1.bf16.msra.mxu0 0
        %1939 = vmatprep.subr.bf16.mxu0 0
        %1940 = vmatpush1.bf16.msra.mxu0 0
        %1941 = vmatprep.subr.bf16.mxu0 0
        %1942 = vmatpush1.bf16.msra.mxu0 0
        %1943 = vmatprep.subr.bf16.mxu0 0
        %1944 = vmatpush1.bf16.msra.mxu0 0
        %1945 = vmatprep.subr.bf16.mxu0 0
        %1946 = vmatpush1.bf16.msra.mxu0 0
        %1947 = vmatprep.subr.bf16.mxu0 0
        %1948 = vmatpush1.bf16.msra.mxu0 0
        %1949 = vmatprep.subr.bf16.mxu0 0
        %1950 = vmatpush1.bf16.msra.mxu0 0
        %1951 = vmatprep.subr.bf16.mxu0 0
        %1952 = vmatpush1.bf16.msra.mxu0 0
        %1953 = vmatprep.mubr.bf16.mxu0 0
        %1954 = vmatmul.mubr.bf16.gmra.mrb[0].mxu0 %v1877
        %v1955 = vpop.f32.mrb[0].mxu0
        %v1956 = vadd.f32 0.0, %v1955
        %v1957 = vpop.f32.mrb[0].mxu0
        %v1958 = vpop.f32.mrb[0].mxu0
        %v1959 = vadd.f32 0.0, %v1958
        %v1960 = vpop.f32.mrb[0].mxu0
        %1961 = vdwg.mxu0
        %v1962 = vunpack.c.l.bf16 %v1872
        %v1963 = vunpack.c.h.bf16 %v1872
        %v1964 = vadd.f32 %v1962, %v1913
        %v1965 = vadd.f32 %v1963, %v1917
        %v1966 = vxor.u32 %v1964, 2147483648
        %v1967 = vxor.u32 %v1965, 2147483648
        %v1968 = vmul.f32 %v1966, 1.442695
        %v1969 = vpow.pop %v1968
        %v1970 = vmul.f32 %v1967, 1.442695
        %v1971 = vpow.pop %v1970
        %v1972 = vadd.f32 %v1969, 1.0
        %v1973 = vadd.f32 %v1971, 1.0
        %v1974 = vrcp.pop %v1972
        %v1975 = vmul.f32 1.0, %v1974
        %v1976 = vrcp.pop %v1973
        %v1977 = vmul.f32 1.0, %v1976
        %v1978 = vunpack.c.l.bf16 %v1873
        %v1979 = vunpack.c.h.bf16 %v1873
        %v1980 = vadd.f32 %v1978, %v1915
        %v1981 = vadd.f32 %v1979, %v1919
        %v1982 = vxor.u32 %v1980, 2147483648
        %v1983 = vxor.u32 %v1981, 2147483648
        %v1984 = vmul.f32 %v1982, 1.442695
        %v1985 = vpow.pop %v1984
        %v1986 = vmul.f32 %v1983, 1.442695
        %v1987 = vpow.pop %v1986
        %v1988 = vadd.f32 %v1985, 1.0
        %v1989 = vadd.f32 %v1987, 1.0
        %v1990 = vrcp.pop %v1988
        %v1991 = vmul.f32 1.0, %v1990
        %v1992 = vrcp.pop %v1989
        %v1993 = vmul.f32 1.0, %v1992
        %v1994 = vadd.f32 %v1956, %v1561
        %v1995 = vadd.f32 %v1959, %v1561
        %v1996 = vmul.f32 %v1975, %v1994
        %v1997 = vmul.f32 %v1977, %v1995
        %v1998 = vunpack.c.l.bf16 %v1874
        %v1999 = vunpack.c.h.bf16 %v1874
        %v2000 = vadd.f32 %v1998, %v1996
        %v2001 = vadd.f32 %v1999, %v1997
        %v2002 = vtanh.pop %v2000
        %v2003 = vtanh.pop %v2001
        %v2004 = vsub.f32 %v1875, %v2002
        %v2005 = vsub.f32 %v1876, %v2003
        %v2006 = vmul.f32 %v1991, %v2004
        %v2007 = vmul.f32 %v1993, %v2005
        %v2008 = vadd.f32 %v2002, %v2006
        %v2009 = vadd.f32 %v2003, %v2007
        %2010 = vst [vmem:[#allocation4] sm:$0xff] %v2008
        %2011 = vst [vmem:[#allocation4 + $0x8] sm:$0xff] %v2009
        %v2012 = vpack.c.bf16 %v2009, %v2008
        %s2013 = scalar_lea.vmem [#allocation2], 24
        %2014 = vst [vmem:[%s2013] sm:$0xff] %v2012
        %s2015 = scalar_lea.vmem [#allocation3], 96
        %v2016 = vld [vmem:[%s2015] sm:$0xff]
        %v2017 = vld [vmem:[%s2015 + $0x8] sm:$0xff]
        %v2018 = vld [vmem:[%s2015 + $0x10] sm:$0xff]
        %v2019 = vld [vmem:[#allocation4] sm:$0xff]
        %v2020 = vld [vmem:[#allocation4 + $0x8] sm:$0xff]
        %v2021 = vpack.c.bf16 %v2020, %v2019
        %2022 = vmatprep.subr.bf16.mxu0 %v1394
        %2023 = vmatpush1.bf16.msra.mxu0 %v1393
        %2024 = vmatprep.subr.bf16.mxu0 %v1397
        %2025 = vmatpush1.bf16.msra.mxu0 %v1396
        %2026 = vmatprep.subr.bf16.mxu0 %v1400
        %2027 = vmatpush1.bf16.msra.mxu0 %v1399
        %2028 = vmatprep.subr.bf16.mxu0 %v1403
        %2029 = vmatpush1.bf16.msra.mxu0 %v1402
        %2030 = vmatprep.subr.bf16.mxu0 %v1406
        %2031 = vmatpush1.bf16.msra.mxu0 %v1405
        %2032 = vmatprep.subr.bf16.mxu0 %v1409
        %2033 = vmatpush1.bf16.msra.mxu0 %v1408
        %2034 = vmatprep.subr.bf16.mxu0 %v1412
        %2035 = vmatpush1.bf16.msra.mxu0 %v1411
        %2036 = vmatprep.subr.bf16.mxu0 %v1415
        %2037 = vmatpush1.bf16.msra.mxu0 %v1414
        %2038 = vmatprep.subr.bf16.mxu0 0
        %2039 = vmatpush1.bf16.msra.mxu0 0
        %2040 = vmatprep.subr.bf16.mxu0 0
        %2041 = vmatpush1.bf16.msra.mxu0 0
        %2042 = vmatprep.subr.bf16.mxu0 0
        %2043 = vmatpush1.bf16.msra.mxu0 0
        %2044 = vmatprep.subr.bf16.mxu0 0
        %2045 = vmatpush1.bf16.msra.mxu0 0
        %2046 = vmatprep.subr.bf16.mxu0 0
        %2047 = vmatpush1.bf16.msra.mxu0 0
        %2048 = vmatprep.subr.bf16.mxu0 0
        %2049 = vmatpush1.bf16.msra.mxu0 0
        %2050 = vmatprep.subr.bf16.mxu0 0
        %2051 = vmatpush1.bf16.msra.mxu0 0
        %2052 = vmatprep.subr.bf16.mxu0 0
        %2053 = vmatpush1.bf16.msra.mxu0 0
        %2054 = vmatprep.mubr.bf16.mxu0 0
        %2055 = vmatmul.mubr.bf16.gmra.mrb[0].mxu0 %v2021
        %v2056 = vpop.f32.mrb[0].mxu0
        %v2057 = vadd.f32 0.0, %v2056
        %v2058 = vpop.f32.mrb[0].mxu0
        %v2059 = vadd.f32 0.0, %v2058
        %v2060 = vpop.f32.mrb[0].mxu0
        %v2061 = vadd.f32 0.0, %v2060
        %v2062 = vpop.f32.mrb[0].mxu0
        %v2063 = vadd.f32 0.0, %v2062
        %2064 = vdwg.mxu0
        %2065 = vmatprep.subr.bf16.mxu0 0
        %2066 = vmatpush1.bf16.msra.mxu0 %v1395
        %2067 = vmatprep.subr.bf16.mxu0 0
        %2068 = vmatpush1.bf16.msra.mxu0 %v1398
        %2069 = vmatprep.subr.bf16.mxu0 0
        %2070 = vmatpush1.bf16.msra.mxu0 %v1401
        %2071 = vmatprep.subr.bf16.mxu0 0
        %2072 = vmatpush1.bf16.msra.mxu0 %v1404
        %2073 = vmatprep.subr.bf16.mxu0 0
        %2074 = vmatpush1.bf16.msra.mxu0 %v1407
        %2075 = vmatprep.subr.bf16.mxu0 0
        %2076 = vmatpush1.bf16.msra.mxu0 %v1410
        %2077 = vmatprep.subr.bf16.mxu0 0
        %2078 = vmatpush1.bf16.msra.mxu0 %v1413
        %2079 = vmatprep.subr.bf16.mxu0 0
        %2080 = vmatpush1.bf16.msra.mxu0 %v1416
        %2081 = vmatprep.subr.bf16.mxu0 0
        %2082 = vmatpush1.bf16.msra.mxu0 0
        %2083 = vmatprep.subr.bf16.mxu0 0
        %2084 = vmatpush1.bf16.msra.mxu0 0
        %2085 = vmatprep.subr.bf16.mxu0 0
        %2086 = vmatpush1.bf16.msra.mxu0 0
        %2087 = vmatprep.subr.bf16.mxu0 0
        %2088 = vmatpush1.bf16.msra.mxu0 0
        %2089 = vmatprep.subr.bf16.mxu0 0
        %2090 = vmatpush1.bf16.msra.mxu0 0
        %2091 = vmatprep.subr.bf16.mxu0 0
        %2092 = vmatpush1.bf16.msra.mxu0 0
        %2093 = vmatprep.subr.bf16.mxu0 0
        %2094 = vmatpush1.bf16.msra.mxu0 0
        %2095 = vmatprep.subr.bf16.mxu0 0
        %2096 = vmatpush1.bf16.msra.mxu0 0
        %2097 = vmatprep.mubr.bf16.mxu0 0
        %2098 = vmatmul.mubr.bf16.gmra.mrb[0].mxu0 %v2021
        %v2099 = vpop.f32.mrb[0].mxu0
        %v2100 = vadd.f32 0.0, %v2099
        %v2101 = vpop.f32.mrb[0].mxu0
        %v2102 = vpop.f32.mrb[0].mxu0
        %v2103 = vadd.f32 0.0, %v2102
        %v2104 = vpop.f32.mrb[0].mxu0
        %2105 = vdwg.mxu0
        %v2106 = vunpack.c.l.bf16 %v2016
        %v2107 = vunpack.c.h.bf16 %v2016
        %v2108 = vadd.f32 %v2106, %v2057
        %v2109 = vadd.f32 %v2107, %v2061
        %v2110 = vxor.u32 %v2108, 2147483648
        %v2111 = vxor.u32 %v2109, 2147483648
        %v2112 = vmul.f32 %v2110, 1.442695
        %v2113 = vpow.pop %v2112
        %v2114 = vmul.f32 %v2111, 1.442695
        %v2115 = vpow.pop %v2114
        %v2116 = vadd.f32 %v2113, 1.0
        %v2117 = vadd.f32 %v2115, 1.0
        %v2118 = vrcp.pop %v2116
        %v2119 = vmul.f32 1.0, %v2118
        %v2120 = vrcp.pop %v2117
        %v2121 = vmul.f32 1.0, %v2120
        %v2122 = vunpack.c.l.bf16 %v2017
        %v2123 = vunpack.c.h.bf16 %v2017
        %v2124 = vadd.f32 %v2122, %v2059
        %v2125 = vadd.f32 %v2123, %v2063
        %v2126 = vxor.u32 %v2124, 2147483648
        %v2127 = vxor.u32 %v2125, 2147483648
        %v2128 = vmul.f32 %v2126, 1.442695
        %v2129 = vpow.pop %v2128
        %v2130 = vmul.f32 %v2127, 1.442695
        %v2131 = vpow.pop %v2130
        %v2132 = vadd.f32 %v2129, 1.0
        %v2133 = vadd.f32 %v2131, 1.0
        %v2134 = vrcp.pop %v2132
        %v2135 = vmul.f32 1.0, %v2134
        %v2136 = vrcp.pop %v2133
        %v2137 = vmul.f32 1.0, %v2136
        %v2138 = vadd.f32 %v2100, %v1561
        %v2139 = vadd.f32 %v2103, %v1561
        %v2140 = vmul.f32 %v2119, %v2138
        %v2141 = vmul.f32 %v2121, %v2139
        %v2142 = vunpack.c.l.bf16 %v2018
        %v2143 = vunpack.c.h.bf16 %v2018
        %v2144 = vadd.f32 %v2142, %v2140
        %v2145 = vadd.f32 %v2143, %v2141
        %v2146 = vtanh.pop %v2144
        %v2147 = vtanh.pop %v2145
        %v2148 = vsub.f32 %v2019, %v2146
        %v2149 = vsub.f32 %v2020, %v2147
        %v2150 = vmul.f32 %v2135, %v2148
        %v2151 = vmul.f32 %v2137, %v2149
        %v2152 = vadd.f32 %v2146, %v2150
        %v2153 = vadd.f32 %v2147, %v2151
        %2154 = vst [vmem:[#allocation4] sm:$0xff] %v2152
        %2155 = vst [vmem:[#allocation4 + $0x8] sm:$0xff] %v2153
        %v2156 = vpack.c.bf16 %v2153, %v2152
        %s2157 = scalar_lea.vmem [#allocation2], 32
        %2158 = vst [vmem:[%s2157] sm:$0xff] %v2156
        %s2159 = scalar_lea.vmem [#allocation3], 120
        %v2160 = vld [vmem:[%s2159] sm:$0xff]
        %v2161 = vld [vmem:[%s2159 + $0x8] sm:$0xff]
        %v2162 = vld [vmem:[%s2159 + $0x10] sm:$0xff]
        %v2163 = vld [vmem:[#allocation4] sm:$0xff]
        %v2164 = vld [vmem:[#allocation4 + $0x8] sm:$0xff]
        %v2165 = vpack.c.bf16 %v2164, %v2163
        %2166 = vmatprep.subr.bf16.mxu0 %v1394
        %2167 = vmatpush1.bf16.msra.mxu0 %v1393
        %2168 = vmatprep.subr.bf16.mxu0 %v1397
        %2169 = vmatpush1.bf16.msra.mxu0 %v1396
        %2170 = vmatprep.subr.bf16.mxu0 %v1400
        %2171 = vmatpush1.bf16.msra.mxu0 %v1399
        %2172 = vmatprep.subr.bf16.mxu0 %v1403
        %2173 = vmatpush1.bf16.msra.mxu0 %v1402
        %2174 = vmatprep.subr.bf16.mxu0 %v1406
        %2175 = vmatpush1.bf16.msra.mxu0 %v1405
        %2176 = vmatprep.subr.bf16.mxu0 %v1409
        %2177 = vmatpush1.bf16.msra.mxu0 %v1408
        %2178 = vmatprep.subr.bf16.mxu0 %v1412
        %2179 = vmatpush1.bf16.msra.mxu0 %v1411
        %2180 = vmatprep.subr.bf16.mxu0 %v1415
        %2181 = vmatpush1.bf16.msra.mxu0 %v1414
        %2182 = vmatprep.subr.bf16.mxu0 0
        %2183 = vmatpush1.bf16.msra.mxu0 0
        %2184 = vmatprep.subr.bf16.mxu0 0
        %2185 = vmatpush1.bf16.msra.mxu0 0
        %2186 = vmatprep.subr.bf16.mxu0 0
        %2187 = vmatpush1.bf16.msra.mxu0 0
        %2188 = vmatprep.subr.bf16.mxu0 0
        %2189 = vmatpush1.bf16.msra.mxu0 0
        %2190 = vmatprep.subr.bf16.mxu0 0
        %2191 = vmatpush1.bf16.msra.mxu0 0
        %2192 = vmatprep.subr.bf16.mxu0 0
        %2193 = vmatpush1.bf16.msra.mxu0 0
        %2194 = vmatprep.subr.bf16.mxu0 0
        %2195 = vmatpush1.bf16.msra.mxu0 0
        %2196 = vmatprep.subr.bf16.mxu0 0
        %2197 = vmatpush1.bf16.msra.mxu0 0
        %2198 = vmatprep.mubr.bf16.mxu0 0
        %2199 = vmatmul.mubr.bf16.gmra.mrb[0].mxu0 %v2165
        %v2200 = vpop.f32.mrb[0].mxu0
        %v2201 = vadd.f32 0.0, %v2200
        %v2202 = vpop.f32.mrb[0].mxu0
        %v2203 = vadd.f32 0.0, %v2202
        %v2204 = vpop.f32.mrb[0].mxu0
        %v2205 = vadd.f32 0.0, %v2204
        %v2206 = vpop.f32.mrb[0].mxu0
        %v2207 = vadd.f32 0.0, %v2206
        %2208 = vdwg.mxu0
        %2209 = vmatprep.subr.bf16.mxu0 0
        %2210 = vmatpush1.bf16.msra.mxu0 %v1395
        %2211 = vmatprep.subr.bf16.mxu0 0
        %2212 = vmatpush1.bf16.msra.mxu0 %v1398
        %2213 = vmatprep.subr.bf16.mxu0 0
        %2214 = vmatpush1.bf16.msra.mxu0 %v1401
        %2215 = vmatprep.subr.bf16.mxu0 0
        %2216 = vmatpush1.bf16.msra.mxu0 %v1404
        %2217 = vmatprep.subr.bf16.mxu0 0
        %2218 = vmatpush1.bf16.msra.mxu0 %v1407
        %2219 = vmatprep.subr.bf16.mxu0 0
        %2220 = vmatpush1.bf16.msra.mxu0 %v1410
        %2221 = vmatprep.subr.bf16.mxu0 0
        %2222 = vmatpush1.bf16.msra.mxu0 %v1413
        %2223 = vmatprep.subr.bf16.mxu0 0
        %2224 = vmatpush1.bf16.msra.mxu0 %v1416
        %2225 = vmatprep.subr.bf16.mxu0 0
        %2226 = vmatpush1.bf16.msra.mxu0 0
        %2227 = vmatprep.subr.bf16.mxu0 0
        %2228 = vmatpush1.bf16.msra.mxu0 0
        %2229 = vmatprep.subr.bf16.mxu0 0
        %2230 = vmatpush1.bf16.msra.mxu0 0
        %2231 = vmatprep.subr.bf16.mxu0 0
        %2232 = vmatpush1.bf16.msra.mxu0 0
        %2233 = vmatprep.subr.bf16.mxu0 0
        %2234 = vmatpush1.bf16.msra.mxu0 0
        %2235 = vmatprep.subr.bf16.mxu0 0
        %2236 = vmatpush1.bf16.msra.mxu0 0
        %2237 = vmatprep.subr.bf16.mxu0 0
        %2238 = vmatpush1.bf16.msra.mxu0 0
        %2239 = vmatprep.subr.bf16.mxu0 0
        %2240 = vmatpush1.bf16.msra.mxu0 0
        %2241 = vmatprep.mubr.bf16.mxu0 0
        %2242 = vmatmul.mubr.bf16.gmra.mrb[0].mxu0 %v2165
        %v2243 = vpop.f32.mrb[0].mxu0
        %v2244 = vadd.f32 0.0, %v2243
        %v2245 = vpop.f32.mrb[0].mxu0
        %v2246 = vpop.f32.mrb[0].mxu0
        %v2247 = vadd.f32 0.0, %v2246
        %v2248 = vpop.f32.mrb[0].mxu0
        %2249 = vdwg.mxu0
        %v2250 = vunpack.c.l.bf16 %v2160
        %v2251 = vunpack.c.h.bf16 %v2160
        %v2252 = vadd.f32 %v2250, %v2201
        %v2253 = vadd.f32 %v2251, %v2205
        %v2254 = vxor.u32 %v2252, 2147483648
        %v2255 = vxor.u32 %v2253, 2147483648
        %v2256 = vmul.f32 %v2254, 1.442695
        %v2257 = vpow.pop %v2256
        %v2258 = vmul.f32 %v2255, 1.442695
        %v2259 = vpow.pop %v2258
        %v2260 = vadd.f32 %v2257, 1.0
        %v2261 = vadd.f32 %v2259, 1.0
        %v2262 = vrcp.pop %v2260
        %v2263 = vmul.f32 1.0, %v2262
        %v2264 = vrcp.pop %v2261
        %v2265 = vmul.f32 1.0, %v2264
        %v2266 = vunpack.c.l.bf16 %v2161
        %v2267 = vunpack.c.h.bf16 %v2161
        %v2268 = vadd.f32 %v2266, %v2203
        %v2269 = vadd.f32 %v2267, %v2207
        %v2270 = vxor.u32 %v2268, 2147483648
        %v2271 = vxor.u32 %v2269, 2147483648
        %v2272 = vmul.f32 %v2270, 1.442695
        %v2273 = vpow.pop %v2272
        %v2274 = vmul.f32 %v2271, 1.442695
        %v2275 = vpow.pop %v2274
        %v2276 = vadd.f32 %v2273, 1.0
        %v2277 = vadd.f32 %v2275, 1.0
        %v2278 = vrcp.pop %v2276
        %v2279 = vmul.f32 1.0, %v2278
        %v2280 = vrcp.pop %v2277
        %v2281 = vmul.f32 1.0, %v2280
        %v2282 = vadd.f32 %v2244, %v1561
        %v2283 = vadd.f32 %v2247, %v1561
        %v2284 = vmul.f32 %v2263, %v2282
        %v2285 = vmul.f32 %v2265, %v2283
        %v2286 = vunpack.c.l.bf16 %v2162
        %v2287 = vunpack.c.h.bf16 %v2162
        %v2288 = vadd.f32 %v2286, %v2284
        %v2289 = vadd.f32 %v2287, %v2285
        %v2290 = vtanh.pop %v2288
        %v2291 = vtanh.pop %v2289
        %v2292 = vsub.f32 %v2163, %v2290
        %v2293 = vsub.f32 %v2164, %v2291
        %v2294 = vmul.f32 %v2279, %v2292
        %v2295 = vmul.f32 %v2281, %v2293
        %v2296 = vadd.f32 %v2290, %v2294
        %v2297 = vadd.f32 %v2291, %v2295
        %2298 = vst [vmem:[#allocation4] sm:$0xff] %v2296
        %2299 = vst [vmem:[#allocation4 + $0x8] sm:$0xff] %v2297
        %v2300 = vpack.c.bf16 %v2297, %v2296
        %s2301 = scalar_lea.vmem [#allocation2], 40
        %2302 = vst [vmem:[%s2301] sm:$0xff] %v2300
        %s2303 = scalar_lea.vmem [#allocation3], 144
        %v2304 = vld [vmem:[%s2303] sm:$0xff]
        %v2305 = vld [vmem:[%s2303 + $0x8] sm:$0xff]
        %v2306 = vld [vmem:[%s2303 + $0x10] sm:$0xff]
        %v2307 = vld [vmem:[#allocation4] sm:$0xff]
        %v2308 = vld [vmem:[#allocation4 + $0x8] sm:$0xff]
        %v2309 = vpack.c.bf16 %v2308, %v2307
        %2310 = vmatprep.subr.bf16.mxu0 %v1394
        %2311 = vmatpush1.bf16.msra.mxu0 %v1393
        %2312 = vmatprep.subr.bf16.mxu0 %v1397
        %2313 = vmatpush1.bf16.msra.mxu0 %v1396
        %2314 = vmatprep.subr.bf16.mxu0 %v1400
        %2315 = vmatpush1.bf16.msra.mxu0 %v1399
        %2316 = vmatprep.subr.bf16.mxu0 %v1403
        %2317 = vmatpush1.bf16.msra.mxu0 %v1402
        %2318 = vmatprep.subr.bf16.mxu0 %v1406
        %2319 = vmatpush1.bf16.msra.mxu0 %v1405
        %2320 = vmatprep.subr.bf16.mxu0 %v1409
        %2321 = vmatpush1.bf16.msra.mxu0 %v1408
        %2322 = vmatprep.subr.bf16.mxu0 %v1412
        %2323 = vmatpush1.bf16.msra.mxu0 %v1411
        %2324 = vmatprep.subr.bf16.mxu0 %v1415
        %2325 = vmatpush1.bf16.msra.mxu0 %v1414
        %2326 = vmatprep.subr.bf16.mxu0 0
        %2327 = vmatpush1.bf16.msra.mxu0 0
        %2328 = vmatprep.subr.bf16.mxu0 0
        %2329 = vmatpush1.bf16.msra.mxu0 0
        %2330 = vmatprep.subr.bf16.mxu0 0
        %2331 = vmatpush1.bf16.msra.mxu0 0
        %2332 = vmatprep.subr.bf16.mxu0 0
        %2333 = vmatpush1.bf16.msra.mxu0 0
        %2334 = vmatprep.subr.bf16.mxu0 0
        %2335 = vmatpush1.bf16.msra.mxu0 0
        %2336 = vmatprep.subr.bf16.mxu0 0
        %2337 = vmatpush1.bf16.msra.mxu0 0
        %2338 = vmatprep.subr.bf16.mxu0 0
        %2339 = vmatpush1.bf16.msra.mxu0 0
        %2340 = vmatprep.subr.bf16.mxu0 0
        %2341 = vmatpush1.bf16.msra.mxu0 0
        %2342 = vmatprep.mubr.bf16.mxu0 0
        %2343 = vmatmul.mubr.bf16.gmra.mrb[0].mxu0 %v2309
        %v2344 = vpop.f32.mrb[0].mxu0
        %v2345 = vadd.f32 0.0, %v2344
        %v2346 = vpop.f32.mrb[0].mxu0
        %v2347 = vadd.f32 0.0, %v2346
        %v2348 = vpop.f32.mrb[0].mxu0
        %v2349 = vadd.f32 0.0, %v2348
        %v2350 = vpop.f32.mrb[0].mxu0
        %v2351 = vadd.f32 0.0, %v2350
        %2352 = vdwg.mxu0
        %2353 = vmatprep.subr.bf16.mxu0 0
        %2354 = vmatpush1.bf16.msra.mxu0 %v1395
        %2355 = vmatprep.subr.bf16.mxu0 0
        %2356 = vmatpush1.bf16.msra.mxu0 %v1398
        %2357 = vmatprep.subr.bf16.mxu0 0
        %2358 = vmatpush1.bf16.msra.mxu0 %v1401
        %2359 = vmatprep.subr.bf16.mxu0 0
        %2360 = vmatpush1.bf16.msra.mxu0 %v1404
        %2361 = vmatprep.subr.bf16.mxu0 0
        %2362 = vmatpush1.bf16.msra.mxu0 %v1407
        %2363 = vmatprep.subr.bf16.mxu0 0
        %2364 = vmatpush1.bf16.msra.mxu0 %v1410
        %2365 = vmatprep.subr.bf16.mxu0 0
        %2366 = vmatpush1.bf16.msra.mxu0 %v1413
        %2367 = vmatprep.subr.bf16.mxu0 0
        %2368 = vmatpush1.bf16.msra.mxu0 %v1416
        %2369 = vmatprep.subr.bf16.mxu0 0
        %2370 = vmatpush1.bf16.msra.mxu0 0
        %2371 = vmatprep.subr.bf16.mxu0 0
        %2372 = vmatpush1.bf16.msra.mxu0 0
        %2373 = vmatprep.subr.bf16.mxu0 0
        %2374 = vmatpush1.bf16.msra.mxu0 0
        %2375 = vmatprep.subr.bf16.mxu0 0
        %2376 = vmatpush1.bf16.msra.mxu0 0
        %2377 = vmatprep.subr.bf16.mxu0 0
        %2378 = vmatpush1.bf16.msra.mxu0 0
        %2379 = vmatprep.subr.bf16.mxu0 0
        %2380 = vmatpush1.bf16.msra.mxu0 0
        %2381 = vmatprep.subr.bf16.mxu0 0
        %2382 = vmatpush1.bf16.msra.mxu0 0
        %2383 = vmatprep.subr.bf16.mxu0 0
        %2384 = vmatpush1.bf16.msra.mxu0 0
        %2385 = vmatprep.mubr.bf16.mxu0 0
        %2386 = vmatmul.mubr.bf16.gmra.mrb[0].mxu0 %v2309
        %v2387 = vpop.f32.mrb[0].mxu0
        %v2388 = vadd.f32 0.0, %v2387
        %v2389 = vpop.f32.mrb[0].mxu0
        %v2390 = vpop.f32.mrb[0].mxu0
        %v2391 = vadd.f32 0.0, %v2390
        %v2392 = vpop.f32.mrb[0].mxu0
        %2393 = vdwg.mxu0
        %v2394 = vunpack.c.l.bf16 %v2304
        %v2395 = vunpack.c.h.bf16 %v2304
        %v2396 = vadd.f32 %v2394, %v2345
        %v2397 = vadd.f32 %v2395, %v2349
        %v2398 = vxor.u32 %v2396, 2147483648
        %v2399 = vxor.u32 %v2397, 2147483648
        %v2400 = vmul.f32 %v2398, 1.442695
        %v2401 = vpow.pop %v2400
        %v2402 = vmul.f32 %v2399, 1.442695
        %v2403 = vpow.pop %v2402
        %v2404 = vadd.f32 %v2401, 1.0
        %v2405 = vadd.f32 %v2403, 1.0
        %v2406 = vrcp.pop %v2404
        %v2407 = vmul.f32 1.0, %v2406
        %v2408 = vrcp.pop %v2405
        %v2409 = vmul.f32 1.0, %v2408
        %v2410 = vunpack.c.l.bf16 %v2305
        %v2411 = vunpack.c.h.bf16 %v2305
        %v2412 = vadd.f32 %v2410, %v2347
        %v2413 = vadd.f32 %v2411, %v2351
        %v2414 = vxor.u32 %v2412, 2147483648
        %v2415 = vxor.u32 %v2413, 2147483648
        %v2416 = vmul.f32 %v2414, 1.442695
        %v2417 = vpow.pop %v2416
        %v2418 = vmul.f32 %v2415, 1.442695
        %v2419 = vpow.pop %v2418
        %v2420 = vadd.f32 %v2417, 1.0
        %v2421 = vadd.f32 %v2419, 1.0
        %v2422 = vrcp.pop %v2420
        %v2423 = vmul.f32 1.0, %v2422
        %v2424 = vrcp.pop %v2421
        %v2425 = vmul.f32 1.0, %v2424
        %v2426 = vadd.f32 %v2388, %v1561
        %v2427 = vadd.f32 %v2391, %v1561
        %v2428 = vmul.f32 %v2407, %v2426
        %v2429 = vmul.f32 %v2409, %v2427
        %v2430 = vunpack.c.l.bf16 %v2306
        %v2431 = vunpack.c.h.bf16 %v2306
        %v2432 = vadd.f32 %v2430, %v2428
        %v2433 = vadd.f32 %v2431, %v2429
        %v2434 = vtanh.pop %v2432
        %v2435 = vtanh.pop %v2433
        %v2436 = vsub.f32 %v2307, %v2434
        %v2437 = vsub.f32 %v2308, %v2435
        %v2438 = vmul.f32 %v2423, %v2436
        %v2439 = vmul.f32 %v2425, %v2437
        %v2440 = vadd.f32 %v2434, %v2438
        %v2441 = vadd.f32 %v2435, %v2439
        %2442 = vst [vmem:[#allocation4] sm:$0xff] %v2440
        %2443 = vst [vmem:[#allocation4 + $0x8] sm:$0xff] %v2441
        %v2444 = vpack.c.bf16 %v2441, %v2440
        %s2445 = scalar_lea.vmem [#allocation2], 48
        %2446 = vst [vmem:[%s2445] sm:$0xff] %v2444
        %s2447 = scalar_lea.vmem [#allocation3], 168
        %v2448 = vld [vmem:[%s2447] sm:$0xff]
        %v2449 = vld [vmem:[%s2447 + $0x8] sm:$0xff]
        %v2450 = vld [vmem:[%s2447 + $0x10] sm:$0xff]
        %v2451 = vld [vmem:[#allocation4] sm:$0xff]
        %v2452 = vld [vmem:[#allocation4 + $0x8] sm:$0xff]
        %v2453 = vpack.c.bf16 %v2452, %v2451
        %2454 = vmatprep.subr.bf16.mxu0 %v1394
        %2455 = vmatpush1.bf16.msra.mxu0 %v1393
        %2456 = vmatprep.subr.bf16.mxu0 %v1397
        %2457 = vmatpush1.bf16.msra.mxu0 %v1396
        %2458 = vmatprep.subr.bf16.mxu0 %v1400
        %2459 = vmatpush1.bf16.msra.mxu0 %v1399
        %2460 = vmatprep.subr.bf16.mxu0 %v1403
        %2461 = vmatpush1.bf16.msra.mxu0 %v1402
        %2462 = vmatprep.subr.bf16.mxu0 %v1406
        %2463 = vmatpush1.bf16.msra.mxu0 %v1405
        %2464 = vmatprep.subr.bf16.mxu0 %v1409
        %2465 = vmatpush1.bf16.msra.mxu0 %v1408
        %2466 = vmatprep.subr.bf16.mxu0 %v1412
        %2467 = vmatpush1.bf16.msra.mxu0 %v1411
        %2468 = vmatprep.subr.bf16.mxu0 %v1415
        %2469 = vmatpush1.bf16.msra.mxu0 %v1414
        %2470 = vmatprep.subr.bf16.mxu0 0
        %2471 = vmatpush1.bf16.msra.mxu0 0
        %2472 = vmatprep.subr.bf16.mxu0 0
        %2473 = vmatpush1.bf16.msra.mxu0 0
        %2474 = vmatprep.subr.bf16.mxu0 0
        %2475 = vmatpush1.bf16.msra.mxu0 0
        %2476 = vmatprep.subr.bf16.mxu0 0
        %2477 = vmatpush1.bf16.msra.mxu0 0
        %2478 = vmatprep.subr.bf16.mxu0 0
        %2479 = vmatpush1.bf16.msra.mxu0 0
        %2480 = vmatprep.subr.bf16.mxu0 0
        %2481 = vmatpush1.bf16.msra.mxu0 0
        %2482 = vmatprep.subr.bf16.mxu0 0
        %2483 = vmatpush1.bf16.msra.mxu0 0
        %2484 = vmatprep.subr.bf16.mxu0 0
        %2485 = vmatpush1.bf16.msra.mxu0 0
        %2486 = vmatprep.mubr.bf16.mxu0 0
        %2487 = vmatmul.mubr.bf16.gmra.mrb[0].mxu0 %v2453
        %v2488 = vpop.f32.mrb[0].mxu0
        %v2489 = vadd.f32 0.0, %v2488
        %v2490 = vpop.f32.mrb[0].mxu0
        %v2491 = vadd.f32 0.0, %v2490
        %v2492 = vpop.f32.mrb[0].mxu0
        %v2493 = vadd.f32 0.0, %v2492
        %v2494 = vpop.f32.mrb[0].mxu0
        %v2495 = vadd.f32 0.0, %v2494
        %2496 = vdwg.mxu0
        %2497 = vmatprep.subr.bf16.mxu0 0
        %2498 = vmatpush1.bf16.msra.mxu0 %v1395
        %2499 = vmatprep.subr.bf16.mxu0 0
        %2500 = vmatpush1.bf16.msra.mxu0 %v1398
        %2501 = vmatprep.subr.bf16.mxu0 0
        %2502 = vmatpush1.bf16.msra.mxu0 %v1401
        %2503 = vmatprep.subr.bf16.mxu0 0
        %2504 = vmatpush1.bf16.msra.mxu0 %v1404
        %2505 = vmatprep.subr.bf16.mxu0 0
        %2506 = vmatpush1.bf16.msra.mxu0 %v1407
        %2507 = vmatprep.subr.bf16.mxu0 0
        %2508 = vmatpush1.bf16.msra.mxu0 %v1410
        %2509 = vmatprep.subr.bf16.mxu0 0
        %2510 = vmatpush1.bf16.msra.mxu0 %v1413
        %2511 = vmatprep.subr.bf16.mxu0 0
        %2512 = vmatpush1.bf16.msra.mxu0 %v1416
        %2513 = vmatprep.subr.bf16.mxu0 0
        %2514 = vmatpush1.bf16.msra.mxu0 0
        %2515 = vmatprep.subr.bf16.mxu0 0
        %2516 = vmatpush1.bf16.msra.mxu0 0
        %2517 = vmatprep.subr.bf16.mxu0 0
        %2518 = vmatpush1.bf16.msra.mxu0 0
        %2519 = vmatprep.subr.bf16.mxu0 0
        %2520 = vmatpush1.bf16.msra.mxu0 0
        %2521 = vmatprep.subr.bf16.mxu0 0
        %2522 = vmatpush1.bf16.msra.mxu0 0
        %2523 = vmatprep.subr.bf16.mxu0 0
        %2524 = vmatpush1.bf16.msra.mxu0 0
        %2525 = vmatprep.subr.bf16.mxu0 0
        %2526 = vmatpush1.bf16.msra.mxu0 0
        %2527 = vmatprep.subr.bf16.mxu0 0
        %2528 = vmatpush1.bf16.msra.mxu0 0
        %2529 = vmatprep.mubr.bf16.mxu0 0
        %2530 = vmatmul.mubr.bf16.gmra.mrb[0].mxu0 %v2453
        %v2531 = vpop.f32.mrb[0].mxu0
        %v2532 = vadd.f32 0.0, %v2531
        %v2533 = vpop.f32.mrb[0].mxu0
        %v2534 = vpop.f32.mrb[0].mxu0
        %v2535 = vadd.f32 0.0, %v2534
        %v2536 = vpop.f32.mrb[0].mxu0
        %2537 = vdwg.mxu0
        %v2538 = vunpack.c.l.bf16 %v2448
        %v2539 = vunpack.c.h.bf16 %v2448
        %v2540 = vadd.f32 %v2538, %v2489
        %v2541 = vadd.f32 %v2539, %v2493
        %v2542 = vxor.u32 %v2540, 2147483648
        %v2543 = vxor.u32 %v2541, 2147483648
        %v2544 = vmul.f32 %v2542, 1.442695
        %v2545 = vpow.pop %v2544
        %v2546 = vmul.f32 %v2543, 1.442695
        %v2547 = vpow.pop %v2546
        %v2548 = vadd.f32 %v2545, 1.0
        %v2549 = vadd.f32 %v2547, 1.0
        %v2550 = vrcp.pop %v2548
        %v2551 = vmul.f32 1.0, %v2550
        %v2552 = vrcp.pop %v2549
        %v2553 = vmul.f32 1.0, %v2552
        %v2554 = vunpack.c.l.bf16 %v2449
        %v2555 = vunpack.c.h.bf16 %v2449
        %v2556 = vadd.f32 %v2554, %v2491
        %v2557 = vadd.f32 %v2555, %v2495
        %v2558 = vxor.u32 %v2556, 2147483648
        %v2559 = vxor.u32 %v2557, 2147483648
        %v2560 = vmul.f32 %v2558, 1.442695
        %v2561 = vpow.pop %v2560
        %v2562 = vmul.f32 %v2559, 1.442695
        %v2563 = vpow.pop %v2562
        %v2564 = vadd.f32 %v2561, 1.0
        %v2565 = vadd.f32 %v2563, 1.0
        %v2566 = vrcp.pop %v2564
        %v2567 = vmul.f32 1.0, %v2566
        %v2568 = vrcp.pop %v2565
        %v2569 = vmul.f32 1.0, %v2568
        %v2570 = vadd.f32 %v2532, %v1561
        %v2571 = vadd.f32 %v2535, %v1561
        %v2572 = vmul.f32 %v2551, %v2570
        %v2573 = vmul.f32 %v2553, %v2571
        %v2574 = vunpack.c.l.bf16 %v2450
        %v2575 = vunpack.c.h.bf16 %v2450
        %v2576 = vadd.f32 %v2574, %v2572
        %v2577 = vadd.f32 %v2575, %v2573
        %v2578 = vtanh.pop %v2576
        %v2579 = vtanh.pop %v2577
        %v2580 = vsub.f32 %v2451, %v2578
        %v2581 = vsub.f32 %v2452, %v2579
        %v2582 = vmul.f32 %v2567, %v2580
        %v2583 = vmul.f32 %v2569, %v2581
        %v2584 = vadd.f32 %v2578, %v2582
        %v2585 = vadd.f32 %v2579, %v2583
        %2586 = vst [vmem:[#allocation4] sm:$0xff] %v2584
        %2587 = vst [vmem:[#allocation4 + $0x8] sm:$0xff] %v2585
        %v2588 = vpack.c.bf16 %v2585, %v2584
        %s2589 = scalar_lea.vmem [#allocation2], 56
        %2590 = vst [vmem:[%s2589] sm:$0xff] %v2588
        %v2591 = vld [vmem:[#allocation4] sm:$0xff]
        %v2592 = vld [vmem:[#allocation4 + $0x8] sm:$0xff]
        %2593 = vst [vmem:[%s316] sm:$0xff] %v2591
        %2594 = vst [vmem:[%s316 + $0x8] sm:$0xff] %v2592
        %s2595 = sand.u32 %s165, 1
        %s2596 = scalar_lea.sflag [#allocation7], %s2595
        %s2597 = sand.u32 %s165, 1
        %s2598 = smul.addr %s2597, 16
        %s2599 = scalar_lea.vmem [#allocation11], %s2598
        // Predicated region
        $region61: #{tpu_custom_call.1} parent=39 // pred_check
          %p2600 = pneg %p175
        $region62: #{tpu_custom_call.1} parent=39 // pred_check_branch
          %2602 = sbr.rel (%p2600) target = $region64
        $region63: #{tpu_custom_call.1} parent=39 // pred_region
          %s2603 = smul.u32 2, %s27
          %s2605 = ssub.s32 256, 256
          %2606 = vsyncadd %s2596, %s2605
          %s2607 = smul.addr %s28, 2
          %s2608 = sadd.s32 %s2603, %s2607
          %s2609 = smul.addr %s2608, 128
          %s2610 = scalar_lea.hbm %s5, %s2609
          %s2611 = sshll.u32 %s2599, 4
          %s2612 = int_to_ptr.vmem [resolvable:$true] %s2611
          %2617 = dma.vmem_to_hbm [thread:$0]  %s2612, 256, %s2610, %s2596, 128, 128, 8
        $region64: #{tpu_custom_call.1} parent=39 // pred_fallthru
          _
      $region40: #{tpu_custom_call.1} parent=5 // pred_fallthru
        _
      %p2618 = scmp.le.s32.totalorder 2, %s18
      // Predicated region
      $region65: #{tpu_custom_call.1} parent=5 // pred_check
        %p2619 = pneg %p2618
      $region66: #{tpu_custom_call.1} parent=5 // pred_check_branch
        %2621 = sbr.rel (%p2619) target = $region68
      $region67: #{tpu_custom_call.1} parent=5 // pred_region
        %s2622 = ssub.s32 %s18, 2
        // Predicated region
        $region69: #{tpu_custom_call.1} parent=67 // pred_check
          %p2623 = pneg %p181
        $region70: #{tpu_custom_call.1} parent=67 // pred_check_branch
          %2625 = sbr.rel (%p2623) target = $region72
        $region71: #{tpu_custom_call.1} parent=67 // pred_region
          %s2626 = sand.u32 %s166, 1
          %s2627 = scalar_lea.sflag [#allocation7], %s2626
          %s2628 = sand.u32 %s166, 1
          %s2629 = smul.addr %s2628, 16
          %s2630 = scalar_lea.vmem [#allocation11], %s2629
          %2631 = dma.done %s2627, 256
        $region72: #{tpu_custom_call.1} parent=67 // pred_fallthru
          _
      $region68: #{tpu_custom_call.1} parent=5 // pred_fallthru
        _
    $region6: #{tpu_custom_call.1} parent=1 // loop_footer
      %s22 = sadd.s32 1, %s18
    $region7: #{tpu_custom_call.1} parent=1 // loop_footer_branch
      %17 = sbr.rel target = $region3
    $region8: #{tpu_custom_call.1} parent=1 // loop_exit
      _
    %2632 = vsyncpa [#allocation6], 1
    %s2633 = scalar_lea.sflag [#allocation6], 1
    %2634 = vsyncpa %s2633, 1
    %2635 = vsyncpa [#allocation9], 1
    %s2636 = scalar_lea.sflag [#allocation9], 1
    %2637 = vsyncpa %s2636, 1
    %2638 = vsyncpa [#allocation7], 1
    %s2639 = scalar_lea.sflag [#allocation7], 1
    %2640 = vsyncpa %s2639, 1

</llo_original>
